<compile_context>
chip_gen: v7x
topology: tpu7x:2x2x1
jax: 0.10.0
libtpu: 0.0.40
codegen_flags: <defaults>
</compile_context>

<pallas_src>
import numpy as np
import jax
import jax.numpy as jnp
from jax import lax
from jax.experimental import pallas as pl
from jax.experimental.pallas import tpu as pltpu


def _round_up(x, m):
    return ((x + m - 1) // m) * m


# ----------------------------------------------------------------------------
# Pallas kernel factory
# ----------------------------------------------------------------------------
def _make_blstm_kernel(T, Tp, Tc, B, D, H, pool_type, matmul_dtype):
    """T: real #timesteps; Tp = nC*Tc padded #timesteps.
    B, D, H are already padded: B % 8 == 0, D % 128 == 0, H % 128 == 0."""
    G = 4 * H                    # per-direction gate width (gate order [i,f,o,g])
    nC = Tp // Tc                # number of time chunks (grid extent)

    def kernel(xf_ref, xb_ref, lenb_ref, wihf_ref, wihb_ref, bf_ref, bb_ref,
               whhf_ref, whhb_ref, emb_ref,
               xpf_ref, xpb_ref, hf_ref, cf_ref, pf_ref, hb_ref, cb_ref, pb_ref):
        i = pl.program_id(0)

        # ---- init persistent state (first chunk only) -----------------------
        @pl.when(i == 0)
        def _():
            z = jnp.zeros((B, H), jnp.float32)
            hf_ref[...] = z
            cf_ref[...] = z
            hb_ref[...] = z
            cb_ref[...] = z
            if pool_type == 'max':
                # Every in-range timestep contributes at least an exact 0 (the
                # packed/padded output), so -inf never survives for T >= 1.
                pinit = jnp.full((B, H), -jnp.inf, jnp.float32)
            else:
                pinit = z
            pf_ref[...] = pinit
            pb_ref[...] = pinit

        # ---- per-chunk input projection: one MXU GEMM per direction ---------
        xf2d = xf_ref[...].reshape(Tc * B, D)                    # fwd chunk, bf16
        xb2d = xb_ref[...].reshape(Tc * B, D)                    # bwd chunk (from back)
        xpf = jnp.dot(xf2d, wihf_ref[...],
                      preferred_element_type=jnp.float32) + bf_ref[...]
        xpb = jnp.dot(xb2d, wihb_ref[...],
                      preferred_element_type=jnp.float32) + bb_ref[...]
        xpf_ref[...] = xpf.reshape(Tc, B, G)
        xpb_ref[...] = xpb.reshape(Tc, B, G)

        len_bcast = lenb_ref[...]                                # (B, H) f32
        whh_f = whhf_ref[...]                                    # (H, 4H) bf16
        whh_b = whhb_ref[...]

        base_f = i * Tc                 # global time of local step 0 (forward)
        base_b = (nC - 1 - i) * Tc      # global time of local index 0 (backward chunk)

        def cell(xp_t, h, c, mask, whh):
            # xp_t: (B,4H) f32 preacts ; h/c: (B,H) f32 ; mask: (B,H) bool
            gates = xp_t + jnp.dot(h.astype(matmul_dtype), whh,
                                   preferred_element_type=jnp.float32)
            sig = jax.nn.sigmoid(gates[:, 0:3 * H])       # [i, f, o] contiguous
            i_g = sig[:, 0:H]
            f_g = sig[:, H:2 * H]
            o_g = sig[:, 2 * H:3 * H]
            g_g = jnp.tanh(gates[:, 3 * H:4 * H])
            c_new = f_g * c + i_g * g_g
            h_new = o_g * jnp.tanh(c_new)
            out = jnp.where(mask, h_new, 0.0)   # packed/pad semantics -> exact 0
            h = jnp.where(mask, h_new, h)       # freeze state past sentence end
            c = jnp.where(mask, c_new, c)
            return h, c, out

        def combine(pooled, out, in_range):
            if pool_type != 'max':
                return pooled + out             # padded steps contribute exact 0
            m = jnp.maximum(pooled, out)
            if Tp == T:                         # no time padding -> no guard needed
                return m
            return jnp.where(in_range, m, pooled)

        # ---- fused fwd/bwd recurrence: two independent chains per body ------
        def body(lt, carry):
            h_f, c_f, p_f, h_b, c_b, p_b = carry
            tf_i = base_f + lt                       # forward global time
            tb_i = base_b + (Tc - 1 - lt)            # backward global time
            mask_f = len_bcast > tf_i.astype(jnp.float32)
            mask_b = len_bcast > tb_i.astype(jnp.float32)
            h_f, c_f, out_f = cell(xpf_ref[lt], h_f, c_f, mask_f, whh_f)
            h_b, c_b, out_b = cell(xpb_ref[Tc - 1 - lt], h_b, c_b, mask_b, whh_b)
            p_f = combine(p_f, out_f, tf_i < T)
            p_b = combine(p_b, out_b, tb_i < T)
            return (h_f, c_f, p_f, h_b, c_b, p_b)

        init = (hf_ref[...], cf_ref[...], pf_ref[...],
                hb_ref[...], cb_ref[...], pb_ref[...])
        unroll = 2 if H >= 512 else (True if Tc <= 32 else 4)
        h_f, c_f, p_f, h_b, c_b, p_b = lax.fori_loop(0, Tc, body, init,
                                                     unroll=unroll)

        hf_ref[...] = h_f
        cf_ref[...] = c_f
        pf_ref[...] = p_f
        hb_ref[...] = h_b
        cb_ref[...] = c_b
        pb_ref[...] = p_b

        # ---- finalize: pooling normalisation + lane-aligned concat store ----
        @pl.when(i == nC - 1)
        def _():
            pool_f = p_f
            pool_b = p_b
            if pool_type == 'mean':
                inv_len = 1.0 / jnp.maximum(len_bcast, 1.0)   # guard len == 0
                pool_f = pool_f * inv_len
                pool_b = pool_b * inv_len
            emb_ref[:, 0:H] = pool_f
            emb_ref[:, H:2 * H] = pool_b

    in_specs = [
        pl.BlockSpec((Tc, B, D), lambda i: (i, 0, 0)),            # x fwd chunk (front)
        pl.BlockSpec((Tc, B, D), lambda i: (nC - 1 - i, 0, 0)),   # x bwd chunk (back)
        pl.BlockSpec((B, H), lambda i: (0, 0)),                   # length broadcast
        pl.BlockSpec((D, G), lambda i: (0, 0)),                   # W_ih fwd
        pl.BlockSpec((D, G), lambda i: (0, 0)),                   # W_ih bwd
        pl.BlockSpec((1, G), lambda i: (0, 0)),                   # bias fwd
        pl.BlockSpec((1, G), lambda i: (0, 0)),                   # bias bwd
        pl.BlockSpec((H, G), lambda i: (0, 0)),                   # W_hh fwd
        pl.BlockSpec((H, G), lambda i: (0, 0)),                   # W_hh bwd
    ]
    out_spec = pl.BlockSpec((B, 2 * H), lambda i: (0, 0))
    scratch = ([pltpu.VMEM((Tc, B, G), jnp.float32),              # xp fwd chunk
                pltpu.VMEM((Tc, B, G), jnp.float32)]              # xp bwd chunk
               + [pltpu.VMEM((B, H), jnp.float32)] * 6)           # h/c/pool fwd+bwd

    # VMEM budget: no 2x fudge; cap at 75% of physical VMEM (headroom for
    # Mosaic internal scratch / spills).
    isz = jnp.dtype(matmul_dtype).itemsize
    est = (2 * 2 * Tc * B * D * isz        # x chunks, fwd+bwd, double-buffered
           + 2 * 2 * D * G * isz           # W_ih (both dirs, buffer pair)
           + 2 * 2 * H * G * isz           # W_hh (both dirs, buffer pair)
           + 2 * 2 * 8 * G * 4             # biases (sublane-padded)
           + 2 * B * H * 4                 # length broadcast
           + 2 * B * 2 * H * 4             # output block
           + 2 * Tc * B * G * 4            # xp chunk scratch
           + 6 * B * H * 4)                # h/c/pool scratch
    try:
        info = pltpu.get_tpu_info()
        phys = int(getattr(info, "vmem_capacity_bytes", 0)) or (64 << 20)
    except Exception:
        phys = 64 << 20
    cap = (phys * 3) // 4
    vmem_limit = int(min(cap, max(32 << 20, int(est * 1.25))))

    return pl.pallas_call(
        kernel,
        out_shape=jax.ShapeDtypeStruct((B, 2 * H), jnp.float32),
        grid_spec=pltpu.PrefetchScalarGridSpec(
            num_scalar_prefetch=0,
            grid=(nC,),
            in_specs=in_specs,
            out_specs=out_spec,
            scratch_shapes=scratch),
        compiler_params=pltpu.CompilerParams(
            dimension_semantics=("arbitrary",),
            vmem_limit_bytes=vmem_limit),
    )


# ----------------------------------------------------------------------------
# Wrapper (padding, length prep, gate-reordered weight repacking, dtype casts)
# ----------------------------------------------------------------------------
def blstm_encoder_forward(sent, sent_len, params, pool_type='max',
                          matmul_dtype=jnp.bfloat16, time_chunk=16):
    """sent: (T, B, D) float (time-major); sent_len: (B,) int. Returns (B, 2H)."""
    T, B, D = sent.shape
    H = params['w_hh_f'].shape[1]     # w_hh_f is (4H, H)

    Hp = _round_up(H, 128)
    Dp = _round_up(D, 128)
    Bp = _round_up(B, 8)
    Tc = int(min(time_chunk, _round_up(T, 8)))
    Tp = _round_up(T, Tc)

    x = jnp.asarray(sent, jnp.float32)
    x = jnp.pad(x, ((0, Tp - T), (0, Bp - B), (0, Dp - D))).astype(matmul_dtype)

    lengths = jnp.asarray(sent_len, dtype=jnp.int32)
    lengths_p = jnp.pad(lengths, (0, Bp - B), constant_values=1)
    len_bcast = jnp.broadcast_to(
        lengths_p.astype(jnp.float32)[:, None], (Bp, Hp))

    # PyTorch gate layout along rows of weight_ih/hh: [i; f; g; o], each (H, .).
    # Repack to lane-padded, transposed blocks in order [i, f, o, g] so that the
    # sigmoid gates are contiguous (sigmoid over 3H, tanh over H).  Extra lanes
    # are zero (keeps padded h/c lanes exactly 0 through the recurrence).
    GATE_ORDER = (0, 1, 3, 2)   # dest [i, f, o, g] <- PyTorch rows [i, f, g, o]

    def pack_ih(w):
        w = jnp.asarray(w, jnp.float32)
        out = jnp.zeros((Dp, 4 * Hp), jnp.float32)
        for k, src in enumerate(GATE_ORDER):
            out = out.at[:D, k * Hp:k * Hp + H].set(w[src * H:(src + 1) * H, :].T)
        return out.astype(matmul_dtype)                          # (Dp, 4*Hp)

    def pack_hh(w):
        w = jnp.asarray(w, jnp.float32)
        out = jnp.zeros((Hp, 4 * Hp), jnp.float32)
        for k, src in enumerate(GATE_ORDER):
            out = out.at[:H, k * Hp:k * Hp + H].set(w[src * H:(src + 1) * H, :].T)
        return out.astype(matmul_dtype)                          # (Hp, 4*Hp)

    def pack_b(bi, bh):
        b = jnp.asarray(bi, jnp.float32) + jnp.asarray(bh, jnp.float32)
        out = jnp.zeros((4 * Hp,), jnp.float32)
        for k, src in enumerate(GATE_ORDER):
            out = out.at[k * Hp:k * Hp + H].set(b[src * H:(src + 1) * H])
        return out[None, :]                                      # (1, 4*Hp) f32

    wih_f = pack_ih(params['w_ih_f'])
    wih_b = pack_ih(params['w_ih_b'])
    whh_f = pack_hh(params['w_hh_f'])
    whh_b = pack_hh(params['w_hh_b'])
    b_f = pack_b(params['b_ih_f'], params['b_hh_f'])
    b_b = pack_b(params['b_ih_b'], params['b_hh_b'])

    call = _make_blstm_kernel(T, Tp, Tc, Bp, Dp, Hp, pool_type, matmul_dtype)
    # x is passed twice: forward chunks are streamed from the front, backward
    # chunks from the back (two BlockSpecs on the same array).
    emb_p = call(x, x, len_bcast, wih_f, wih_b, b_f, b_b, whh_f, whh_b)

    return jnp.concatenate([emb_p[:B, :H], emb_p[:B, Hp:Hp + H]], axis=1)


# ----------------------------------------------------------------------------
# Pure numpy reference (mirrors PyTorch pack -> BiLSTM -> pad -> pool semantics)
# ----------------------------------------------------------------------------
def _sigmoid(x):
    return 1.0 / (1.0 + np.exp(-x))


def ref_blstm_encoder(sent, sent_len, params, pool_type='max'):
    sent = np.asarray(sent, dtype=np.float64)
    T, B, D = sent.shape
    H = params['w_hh_f'].shape[1]
    lengths = np.asarray(sent_len, dtype=np.int64)

    def run_dir(w_ih, w_hh, b_ih, b_hh, reverse):
        w_ih = np.asarray(w_ih, np.float64)
        w_hh = np.asarray(w_hh, np.float64)
        b = np.asarray(b_ih, np.float64) + np.asarray(b_hh, np.float64)
        out = np.zeros((T, B, H))
        h = np.zeros((B, H))
        c = np.zeros((B, H))
        trange = range(T - 1, -1, -1) if reverse else range(T)
        for t in trange:
            m = (t < lengths).astype(np.float64)[:, None]
            gates = sent[t] @ w_ih.T + h @ w_hh.T + b
            i = _sigmoid(gates[:, 0:H]); f = _sigmoid(gates[:, H:2 * H])
            g = np.tanh(gates[:, 2 * H:3 * H]); o = _sigmoid(gates[:, 3 * H:4 * H])
            c_new = f * c + i * g
            h_new = o * np.tanh(c_new)
            out[t] = m * h_new
            h = m * h_new + (1 - m) * h
            c = m * c_new + (1 - m) * c
        return out

    out_f = run_dir(params['w_ih_f'], params['w_hh_f'],
                    params['b_ih_f'], params['b_hh_f'], False)
    out_b = run_dir(params['w_ih_b'], params['w_hh_b'],
                    params['b_ih_b'], params['b_hh_b'], True)
    out = np.concatenate([out_f, out_b], axis=-1)     # (T, B, 2H), zeros at pads
    if pool_type == 'max':
        return out.max(axis=0)
    return out.sum(axis=0) / lengths[:, None].astype(np.float64)


# ----------------------------------------------------------------------------
# Deterministic parameter init (PyTorch nn.LSTM shapes, U(-1/sqrt(H), 1/sqrt(H)))
# ----------------------------------------------------------------------------
def init_params(key, D, H):
    k = 1.0 / np.sqrt(H)
    names_shapes = [
        ('w_ih_f', (4 * H, D)), ('w_hh_f', (4 * H, H)),
        ('b_ih_f', (4 * H,)),   ('b_hh_f', (4 * H,)),
        ('w_ih_b', (4 * H, D)), ('w_hh_b', (4 * H, H)),
        ('b_ih_b', (4 * H,)),   ('b_hh_b', (4 * H,)),
    ]
    keys = jax.random.split(key, len(names_shapes))
    return {n: jax.random.uniform(kk, s, jnp.float32, -k, k)
            for kk, (n, s) in zip(keys, names_shapes)}


# ----------------------------------------------------------------------------
if __name__ == "__main__":
    key = jax.random.PRNGKey(0)

    # (T, B, D, H, lengths, time_chunk): second config exercises batch/feature
    # padding and multi-chunk T streaming (T % Tc != 0).
    configs = [
        (8, 8, 32, 32, np.array([8, 5, 8, 3, 6, 8, 2, 7], dtype=np.int64), 8),
        (13, 5, 48, 40, np.array([13, 9, 4, 13, 1], dtype=np.int64), 4),
    ]

    for (T, B, D, H, sent_len, tc) in configs:
        key, kp, kx = jax.random.split(key, 3)
        params = init_params(kp, D, H)
        sent = jax.random.normal(kx, (T, B, D), dtype=jnp.float32)   # time-major
        params_np = {k: np.asarray(v) for k, v in params.items()}

        for pool_type in ('max', 'mean'):
            emb = blstm_encoder_forward(sent, sent_len, params,
                                        pool_type=pool_type, time_chunk=tc)
            emb = jax.block_until_ready(emb)
            ref = ref_blstm_encoder(np.asarray(sent), sent_len, params_np,
                                    pool_type=pool_type)
            # bf16 matmul inputs (f32 accumulation / elementwise) -> relaxed tol
            np.testing.assert_allclose(np.asarray(emb), ref, rtol=2e-2, atol=2e-2)
            assert emb.shape == (B, 2 * H)

    print("KERNEL_OK")
</pallas_src>

<mosaic_0001>
module attributes {stable_mosaic.version = 11 : i64} {
  func.func @kernel(%arg0: i32, %arg1: memref<8x8x128xbf16, #tpu.memory_space<vmem>>, %arg2: memref<8x8x128xbf16, #tpu.memory_space<vmem>>, %arg3: memref<8x128xf32, #tpu.memory_space<vmem>>, %arg4: memref<128x512xbf16, #tpu.memory_space<vmem>>, %arg5: memref<128x512xbf16, #tpu.memory_space<vmem>>, %arg6: memref<1x512xf32, #tpu.memory_space<vmem>>, %arg7: memref<1x512xf32, #tpu.memory_space<vmem>>, %arg8: memref<128x512xbf16, #tpu.memory_space<vmem>>, %arg9: memref<128x512xbf16, #tpu.memory_space<vmem>>, %arg10: memref<8x256xf32, #tpu.memory_space<vmem>>, %arg11: memref<8x8x512xf32, #tpu.memory_space<vmem>>, %arg12: memref<8x8x512xf32, #tpu.memory_space<vmem>>, %arg13: memref<8x128xf32, #tpu.memory_space<vmem>>, %arg14: memref<8x128xf32, #tpu.memory_space<vmem>>, %arg15: memref<8x128xf32, #tpu.memory_space<vmem>>, %arg16: memref<8x128xf32, #tpu.memory_space<vmem>>, %arg17: memref<8x128xf32, #tpu.memory_space<vmem>>, %arg18: memref<8x128xf32, #tpu.memory_space<vmem>>) attributes {dimension_semantics = [#tpu.dimension_semantics<arbitrary>], iteration_bounds = array<i64: 1>, scalar_prefetch = 0 : i64, scratch_operands = 8 : i64, tpu.core_type = #tpu.core_type<tc>, window_params = [{transform_indices = @transform_0, window_bounds = array<i64: 8, 8, 128>}, {transform_indices = @transform_1, window_bounds = array<i64: 8, 8, 128>}, {pipeline_mode = #tpu.pipeline_mode<synchronous>, transform_indices = @transform_2, window_bounds = array<i64: 8, 128>}, {pipeline_mode = #tpu.pipeline_mode<synchronous>, transform_indices = @transform_3, window_bounds = array<i64: 128, 512>}, {pipeline_mode = #tpu.pipeline_mode<synchronous>, transform_indices = @transform_4, window_bounds = array<i64: 128, 512>}, {pipeline_mode = #tpu.pipeline_mode<synchronous>, transform_indices = @transform_5, window_bounds = array<i64: 1, 512>}, {pipeline_mode = #tpu.pipeline_mode<synchronous>, transform_indices = @transform_6, window_bounds = array<i64: 1, 512>}, {pipeline_mode = #tpu.pipeline_mode<synchronous>, transform_indices = @transform_7, window_bounds = array<i64: 128, 512>}, {pipeline_mode = #tpu.pipeline_mode<synchronous>, transform_indices = @transform_8, window_bounds = array<i64: 128, 512>}, {pipeline_mode = #tpu.pipeline_mode<synchronous>, transform_indices = @transform_9, window_bounds = array<i64: 8, 256>}]} {
    %c0_i32 = arith.constant 0 : i32
    %0 = arith.cmpi eq, %arg0, %c0_i32 : i32
    %1 = arith.extui %0 : i1 to i32
    %c0_i32_0 = arith.constant 0 : i32
    %2 = arith.cmpi ne, %1, %c0_i32_0 : i32
    scf.if %2 {
      %cst_153 = arith.constant 0.000000e+00 : f32
      %554 = vector.broadcast %cst_153 : f32 to vector<8x128xf32>
      %c0_154 = arith.constant 0 : index
      %c0_155 = arith.constant 0 : index
      %555 = vector.load %arg13[%c0_154, %c0_155] : memref<8x128xf32, #tpu.memory_space<vmem>>, vector<8x128xf32>
      tpu.vector_store %arg13[%c0_154, %c0_155], %554 {strides = array<i32>} : memref<8x128xf32, #tpu.memory_space<vmem>>, vector<8x128xf32>,
      %c0_156 = arith.constant 0 : index
      %c0_157 = arith.constant 0 : index
      %556 = vector.load %arg14[%c0_156, %c0_157] : memref<8x128xf32, #tpu.memory_space<vmem>>, vector<8x128xf32>
      tpu.vector_store %arg14[%c0_156, %c0_157], %554 {strides = array<i32>} : memref<8x128xf32, #tpu.memory_space<vmem>>, vector<8x128xf32>,
      %c0_158 = arith.constant 0 : index
      %c0_159 = arith.constant 0 : index
      %557 = vector.load %arg16[%c0_158, %c0_159] : memref<8x128xf32, #tpu.memory_space<vmem>>, vector<8x128xf32>
      tpu.vector_store %arg16[%c0_158, %c0_159], %554 {strides = array<i32>} : memref<8x128xf32, #tpu.memory_space<vmem>>, vector<8x128xf32>,
      %c0_160 = arith.constant 0 : index
      %c0_161 = arith.constant 0 : index
      %558 = vector.load %arg17[%c0_160, %c0_161] : memref<8x128xf32, #tpu.memory_space<vmem>>, vector<8x128xf32>
      tpu.vector_store %arg17[%c0_160, %c0_161], %554 {strides = array<i32>} : memref<8x128xf32, #tpu.memory_space<vmem>>, vector<8x128xf32>,
      %cst_162 = arith.constant 0xFF800000 : f32
      %559 = vector.broadcast %cst_162 : f32 to vector<8x128xf32>
      %c0_163 = arith.constant 0 : index
      %c0_164 = arith.constant 0 : index
      %560 = vector.load %arg15[%c0_163, %c0_164] : memref<8x128xf32, #tpu.memory_space<vmem>>, vector<8x128xf32>
      tpu.vector_store %arg15[%c0_163, %c0_164], %559 {strides = array<i32>} : memref<8x128xf32, #tpu.memory_space<vmem>>, vector<8x128xf32>,
      %c0_165 = arith.constant 0 : index
      %c0_166 = arith.constant 0 : index
      %561 = vector.load %arg18[%c0_165, %c0_166] : memref<8x128xf32, #tpu.memory_space<vmem>>, vector<8x128xf32>
      tpu.vector_store %arg18[%c0_165, %c0_166], %559 {strides = array<i32>} : memref<8x128xf32, #tpu.memory_space<vmem>>, vector<8x128xf32>,
    } else {
    }
    %c0 = arith.constant 0 : index
    %c0_1 = arith.constant 0 : index
    %c0_2 = arith.constant 0 : index
    %3 = vector.load %arg1[%c0, %c0_1, %c0_2] : memref<8x8x128xbf16, #tpu.memory_space<vmem>>, vector<8x8x128xbf16>
    %4 = vector.shape_cast %3 : vector<8x8x128xbf16> to vector<64x128xbf16>
    %c0_3 = arith.constant 0 : index
    %c0_4 = arith.constant 0 : index
    %c0_5 = arith.constant 0 : index
    %5 = vector.load %arg2[%c0_3, %c0_4, %c0_5] : memref<8x8x128xbf16, #tpu.memory_space<vmem>>, vector<8x8x128xbf16>
    %6 = vector.shape_cast %5 : vector<8x8x128xbf16> to vector<64x128xbf16>
    %c0_6 = arith.constant 0 : index
    %c0_7 = arith.constant 0 : index
    %7 = vector.load %arg4[%c0_6, %c0_7] : memref<128x512xbf16, #tpu.memory_space<vmem>>, vector<128x512xbf16>
    %cst = arith.constant dense<0.000000e+00> : vector<64x512xf32>
    %8 = tpu.matmul %4, %7, %cst {dimension_numbers = #tpu.dot_dimension_numbers<[1], [0], [0], [1], [0, 0, 1, 1], [], []>} : vector<64x128xbf16>, vector<128x512xbf16>, vector<64x512xf32> -> vector<64x512xf32>
    %c0_8 = arith.constant 0 : index
    %c0_9 = arith.constant 0 : index
    %9 = vector.load %arg6[%c0_8, %c0_9] : memref<1x512xf32, #tpu.memory_space<vmem>>, vector<1x512xf32>
    %10 = vector.broadcast %9 : vector<1x512xf32> to vector<64x512xf32>
    %11 = arith.addf %8, %10 : vector<64x512xf32>
    %c0_10 = arith.constant 0 : index
    %c0_11 = arith.constant 0 : index
    %12 = vector.load %arg5[%c0_10, %c0_11] : memref<128x512xbf16, #tpu.memory_space<vmem>>, vector<128x512xbf16>
    %cst_12 = arith.constant dense<0.000000e+00> : vector<64x512xf32>
    %13 = tpu.matmul %6, %12, %cst_12 {dimension_numbers = #tpu.dot_dimension_numbers<[1], [0], [0], [1], [0, 0, 1, 1], [], []>} : vector<64x128xbf16>, vector<128x512xbf16>, vector<64x512xf32> -> vector<64x512xf32>
    %c0_13 = arith.constant 0 : index
    %c0_14 = arith.constant 0 : index
    %14 = vector.load %arg7[%c0_13, %c0_14] : memref<1x512xf32, #tpu.memory_space<vmem>>, vector<1x512xf32>
    %15 = vector.broadcast %14 : vector<1x512xf32> to vector<64x512xf32>
    %16 = arith.addf %13, %15 : vector<64x512xf32>
    %17 = vector.shape_cast %11 : vector<64x512xf32> to vector<8x8x512xf32>
    %c0_15 = arith.constant 0 : index
    %c0_16 = arith.constant 0 : index
    %c0_17 = arith.constant 0 : index
    %18 = vector.load %arg11[%c0_15, %c0_16, %c0_17] : memref<8x8x512xf32, #tpu.memory_space<vmem>>, vector<8x8x512xf32>
    tpu.vector_store %arg11[%c0_15, %c0_16, %c0_17], %17 {strides = array<i32>} : memref<8x8x512xf32, #tpu.memory_space<vmem>>, vector<8x8x512xf32>,
    %19 = vector.shape_cast %16 : vector<64x512xf32> to vector<8x8x512xf32>
    %c0_18 = arith.constant 0 : index
    %c0_19 = arith.constant 0 : index
    %c0_20 = arith.constant 0 : index
    %20 = vector.load %arg12[%c0_18, %c0_19, %c0_20] : memref<8x8x512xf32, #tpu.memory_space<vmem>>, vector<8x8x512xf32>
    tpu.vector_store %arg12[%c0_18, %c0_19, %c0_20], %19 {strides = array<i32>} : memref<8x8x512xf32, #tpu.memory_space<vmem>>, vector<8x8x512xf32>,
    %c0_21 = arith.constant 0 : index
    %c0_22 = arith.constant 0 : index
    %21 = vector.load %arg3[%c0_21, %c0_22] : memref<8x128xf32, #tpu.memory_space<vmem>>, vector<8x128xf32>
    %c0_23 = arith.constant 0 : index
    %c0_24 = arith.constant 0 : index
    %22 = vector.load %arg8[%c0_23, %c0_24] : memref<128x512xbf16, #tpu.memory_space<vmem>>, vector<128x512xbf16>
    %c0_25 = arith.constant 0 : index
    %c0_26 = arith.constant 0 : index
    %23 = vector.load %arg9[%c0_25, %c0_26] : memref<128x512xbf16, #tpu.memory_space<vmem>>, vector<128x512xbf16>
    %c8_i32 = arith.constant 8 : i32
    %24 = arith.muli %arg0, %c8_i32 : i32
    %c0_i32_27 = arith.constant 0 : i32
    %25 = arith.subi %c0_i32_27, %arg0 : i32
    %c8_i32_28 = arith.constant 8 : i32
    %26 = arith.muli %25, %c8_i32_28 : i32
    %c0_29 = arith.constant 0 : index
    %c0_30 = arith.constant 0 : index
    %27 = vector.load %arg13[%c0_29, %c0_30] : memref<8x128xf32, #tpu.memory_space<vmem>>, vector<8x128xf32>
    %c0_31 = arith.constant 0 : index
    %c0_32 = arith.constant 0 : index
    %28 = vector.load %arg14[%c0_31, %c0_32] : memref<8x128xf32, #tpu.memory_space<vmem>>, vector<8x128xf32>
    %c0_33 = arith.constant 0 : index
    %c0_34 = arith.constant 0 : index
    %29 = vector.load %arg15[%c0_33, %c0_34] : memref<8x128xf32, #tpu.memory_space<vmem>>, vector<8x128xf32>
    %c0_35 = arith.constant 0 : index
    %c0_36 = arith.constant 0 : index
    %30 = vector.load %arg16[%c0_35, %c0_36] : memref<8x128xf32, #tpu.memory_space<vmem>>, vector<8x128xf32>
    %c0_37 = arith.constant 0 : index
    %c0_38 = arith.constant 0 : index
    %31 = vector.load %arg17[%c0_37, %c0_38] : memref<8x128xf32, #tpu.memory_space<vmem>>, vector<8x128xf32>
    %c0_39 = arith.constant 0 : index
    %c0_40 = arith.constant 0 : index
    %32 = vector.load %arg18[%c0_39, %c0_40] : memref<8x128xf32, #tpu.memory_space<vmem>>, vector<8x128xf32>
    %c0_i32_41 = arith.constant 0 : i32
    %33 = arith.addi %24, %c0_i32_41 : i32
    %c7_i32 = arith.constant 7 : i32
    %34 = arith.subi %c7_i32, %c0_i32_41 : i32
    %35 = arith.addi %26, %34 : i32
    %36 = arith.sitofp %33 : i32 to f32
    %37 = vector.broadcast %36 : f32 to vector<8x128xf32>
    %38 = arith.cmpf ogt, %21, %37 : vector<8x128xf32>
    %39 = arith.sitofp %35 : i32 to f32
    %40 = vector.broadcast %39 : f32 to vector<8x128xf32>
    %41 = arith.cmpf ogt, %21, %40 : vector<8x128xf32>
    %42 = arith.index_cast %c0_i32_41 : i32 to index
    %c0_42 = arith.constant 0 : index
    %c0_43 = arith.constant 0 : index
    %43 = vector.load %arg11[%42, %c0_42, %c0_43] : memref<8x8x512xf32, #tpu.memory_space<vmem>>, vector<1x8x512xf32>
    %44 = vector.shape_cast %43 : vector<1x8x512xf32> to vector<8x512xf32>
    %45 = arith.truncf %27 : vector<8x128xf32> to vector<8x128xbf16>
    %cst_44 = arith.constant dense<0.000000e+00> : vector<8x512xf32>
    %46 = tpu.matmul %45, %22, %cst_44 {dimension_numbers = #tpu.dot_dimension_numbers<[1], [0], [0], [1], [0, 0, 1, 1], [], []>} : vector<8x128xbf16>, vector<128x512xbf16>, vector<8x512xf32> -> vector<8x512xf32>
    %47 = arith.addf %44, %46 : vector<8x512xf32>
    %48 = vector.extract_strided_slice %47 {offsets = [0, 0], sizes = [8, 384], strides = [1, 1]} : vector<8x512xf32> to vector<8x384xf32>
    %49 = arith.negf %48 : vector<8x384xf32>
    %50 = math.exp %49 : vector<8x384xf32>
    %cst_45 = arith.constant 1.000000e+00 : f32
    %51 = vector.broadcast %cst_45 : f32 to vector<8x384xf32>
    %52 = arith.addf %51, %50 : vector<8x384xf32>
    %53 = arith.divf %51, %52 : vector<8x384xf32>
    %54 = vector.extract_strided_slice %53 {offsets = [0, 0], sizes = [8, 128], strides = [1, 1]} : vector<8x384xf32> to vector<8x128xf32>
    %55 = vector.extract_strided_slice %53 {offsets = [0, 128], sizes = [8, 128], strides = [1, 1]} : vector<8x384xf32> to vector<8x128xf32>
    %56 = vector.extract_strided_slice %53 {offsets = [0, 256], sizes = [8, 128], strides = [1, 1]} : vector<8x384xf32> to vector<8x128xf32>
    %57 = vector.extract_strided_slice %47 {offsets = [0, 384], sizes = [8, 128], strides = [1, 1]} : vector<8x512xf32> to vector<8x128xf32>
    %58 = math.tanh %57 : vector<8x128xf32>
    %59 = arith.mulf %55, %28 : vector<8x128xf32>
    %60 = arith.mulf %54, %58 : vector<8x128xf32>
    %61 = arith.addf %59, %60 : vector<8x128xf32>
    %62 = math.tanh %61 : vector<8x128xf32>
    %63 = arith.mulf %56, %62 : vector<8x128xf32>
    %cst_46 = arith.constant 0.000000e+00 : f32
    %64 = vector.broadcast %cst_46 : f32 to vector<8x128xf32>
    %65 = arith.select %38, %63, %64 : vector<8x128xi1>, vector<8x128xf32>
    %66 = arith.select %38, %63, %27 : vector<8x128xi1>, vector<8x128xf32>
    %67 = arith.select %38, %61, %28 : vector<8x128xi1>, vector<8x128xf32>
    %c7_i32_47 = arith.constant 7 : i32
    %68 = arith.subi %c7_i32_47, %c0_i32_41 : i32
    %69 = arith.index_cast %68 : i32 to index
    %c0_48 = arith.constant 0 : index
    %c0_49 = arith.constant 0 : index
    %70 = vector.load %arg12[%69, %c0_48, %c0_49] : memref<8x8x512xf32, #tpu.memory_space<vmem>>, vector<1x8x512xf32>
    %71 = vector.shape_cast %70 : vector<1x8x512xf32> to vector<8x512xf32>
    %72 = arith.truncf %30 : vector<8x128xf32> to vector<8x128xbf16>
    %cst_50 = arith.constant dense<0.000000e+00> : vector<8x512xf32>
    %73 = tpu.matmul %72, %23, %cst_50 {dimension_numbers = #tpu.dot_dimension_numbers<[1], [0], [0], [1], [0, 0, 1, 1], [], []>} : vector<8x128xbf16>, vector<128x512xbf16>, vector<8x512xf32> -> vector<8x512xf32>
    %74 = arith.addf %71, %73 : vector<8x512xf32>
    %75 = vector.extract_strided_slice %74 {offsets = [0, 0], sizes = [8, 384], strides = [1, 1]} : vector<8x512xf32> to vector<8x384xf32>
    %76 = arith.negf %75 : vector<8x384xf32>
    %77 = math.exp %76 : vector<8x384xf32>
    %cst_51 = arith.constant 1.000000e+00 : f32
    %78 = vector.broadcast %cst_51 : f32 to vector<8x384xf32>
    %79 = arith.addf %78, %77 : vector<8x384xf32>
    %80 = arith.divf %78, %79 : vector<8x384xf32>
    %81 = vector.extract_strided_slice %80 {offsets = [0, 0], sizes = [8, 128], strides = [1, 1]} : vector<8x384xf32> to vector<8x128xf32>
    %82 = vector.extract_strided_slice %80 {offsets = [0, 128], sizes = [8, 128], strides = [1, 1]} : vector<8x384xf32> to vector<8x128xf32>
    %83 = vector.extract_strided_slice %80 {offsets = [0, 256], sizes = [8, 128], strides = [1, 1]} : vector<8x384xf32> to vector<8x128xf32>
    %84 = vector.extract_strided_slice %74 {offsets = [0, 384], sizes = [8, 128], strides = [1, 1]} : vector<8x512xf32> to vector<8x128xf32>
    %85 = math.tanh %84 : vector<8x128xf32>
    %86 = arith.mulf %82, %31 : vector<8x128xf32>
    %87 = arith.mulf %81, %85 : vector<8x128xf32>
    %88 = arith.addf %86, %87 : vector<8x128xf32>
    %89 = math.tanh %88 : vector<8x128xf32>
    %90 = arith.mulf %83, %89 : vector<8x128xf32>
    %cst_52 = arith.constant 0.000000e+00 : f32
    %91 = vector.broadcast %cst_52 : f32 to vector<8x128xf32>
    %92 = arith.select %41, %90, %91 : vector<8x128xi1>, vector<8x128xf32>
    %93 = arith.select %41, %90, %30 : vector<8x128xi1>, vector<8x128xf32>
    %94 = arith.select %41, %88, %31 : vector<8x128xi1>, vector<8x128xf32>
    %95 = arith.maximumf %29, %65 : vector<8x128xf32>
    %96 = arith.maximumf %32, %92 : vector<8x128xf32>
    %c1_i32 = arith.constant 1 : i32
    %97 = arith.addi %24, %c1_i32 : i32
    %c7_i32_53 = arith.constant 7 : i32
    %98 = arith.subi %c7_i32_53, %c1_i32 : i32
    %99 = arith.addi %26, %98 : i32
    %100 = arith.sitofp %97 : i32 to f32
    %101 = vector.broadcast %100 : f32 to vector<8x128xf32>
    %102 = arith.cmpf ogt, %21, %101 : vector<8x128xf32>
    %103 = arith.sitofp %99 : i32 to f32
    %104 = vector.broadcast %103 : f32 to vector<8x128xf32>
    %105 = arith.cmpf ogt, %21, %104 : vector<8x128xf32>
    %106 = arith.index_cast %c1_i32 : i32 to index
    %c0_54 = arith.constant 0 : index
    %c0_55 = arith.constant 0 : index
    %107 = vector.load %arg11[%106, %c0_54, %c0_55] : memref<8x8x512xf32, #tpu.memory_space<vmem>>, vector<1x8x512xf32>
    %108 = vector.shape_cast %107 : vector<1x8x512xf32> to vector<8x512xf32>
    %109 = arith.truncf %66 : vector<8x128xf32> to vector<8x128xbf16>
    %cst_56 = arith.constant dense<0.000000e+00> : vector<8x512xf32>
    %110 = tpu.matmul %109, %22, %cst_56 {dimension_numbers = #tpu.dot_dimension_numbers<[1], [0], [0], [1], [0, 0, 1, 1], [], []>} : vector<8x128xbf16>, vector<128x512xbf16>, vector<8x512xf32> -> vector<8x512xf32>
    %111 = arith.addf %108, %110 : vector<8x512xf32>
    %112 = vector.extract_strided_slice %111 {offsets = [0, 0], sizes = [8, 384], strides = [1, 1]} : vector<8x512xf32> to vector<8x384xf32>
    %113 = arith.negf %112 : vector<8x384xf32>
    %114 = math.exp %113 : vector<8x384xf32>
    %cst_57 = arith.constant 1.000000e+00 : f32
    %115 = vector.broadcast %cst_57 : f32 to vector<8x384xf32>
    %116 = arith.addf %115, %114 : vector<8x384xf32>
    %117 = arith.divf %115, %116 : vector<8x384xf32>
    %118 = vector.extract_strided_slice %117 {offsets = [0, 0], sizes = [8, 128], strides = [1, 1]} : vector<8x384xf32> to vector<8x128xf32>
    %119 = vector.extract_strided_slice %117 {offsets = [0, 128], sizes = [8, 128], strides = [1, 1]} : vector<8x384xf32> to vector<8x128xf32>
    %120 = vector.extract_strided_slice %117 {offsets = [0, 256], sizes = [8, 128], strides = [1, 1]} : vector<8x384xf32> to vector<8x128xf32>
    %121 = vector.extract_strided_slice %111 {offsets = [0, 384], sizes = [8, 128], strides = [1, 1]} : vector<8x512xf32> to vector<8x128xf32>
    %122 = math.tanh %121 : vector<8x128xf32>
    %123 = arith.mulf %119, %67 : vector<8x128xf32>
    %124 = arith.mulf %118, %122 : vector<8x128xf32>
    %125 = arith.addf %123, %124 : vector<8x128xf32>
    %126 = math.tanh %125 : vector<8x128xf32>
    %127 = arith.mulf %120, %126 : vector<8x128xf32>
    %cst_58 = arith.constant 0.000000e+00 : f32
    %128 = vector.broadcast %cst_58 : f32 to vector<8x128xf32>
    %129 = arith.select %102, %127, %128 : vector<8x128xi1>, vector<8x128xf32>
    %130 = arith.select %102, %127, %66 : vector<8x128xi1>, vector<8x128xf32>
    %131 = arith.select %102, %125, %67 : vector<8x128xi1>, vector<8x128xf32>
    %c7_i32_59 = arith.constant 7 : i32
    %132 = arith.subi %c7_i32_59, %c1_i32 : i32
    %133 = arith.index_cast %132 : i32 to index
    %c0_60 = arith.constant 0 : index
    %c0_61 = arith.constant 0 : index
    %134 = vector.load %arg12[%133, %c0_60, %c0_61] : memref<8x8x512xf32, #tpu.memory_space<vmem>>, vector<1x8x512xf32>
    %135 = vector.shape_cast %134 : vector<1x8x512xf32> to vector<8x512xf32>
    %136 = arith.truncf %93 : vector<8x128xf32> to vector<8x128xbf16>
    %cst_62 = arith.constant dense<0.000000e+00> : vector<8x512xf32>
    %137 = tpu.matmul %136, %23, %cst_62 {dimension_numbers = #tpu.dot_dimension_numbers<[1], [0], [0], [1], [0, 0, 1, 1], [], []>} : vector<8x128xbf16>, vector<128x512xbf16>, vector<8x512xf32> -> vector<8x512xf32>
    %138 = arith.addf %135, %137 : vector<8x512xf32>
    %139 = vector.extract_strided_slice %138 {offsets = [0, 0], sizes = [8, 384], strides = [1, 1]} : vector<8x512xf32> to vector<8x384xf32>
    %140 = arith.negf %139 : vector<8x384xf32>
    %141 = math.exp %140 : vector<8x384xf32>
    %cst_63 = arith.constant 1.000000e+00 : f32
    %142 = vector.broadcast %cst_63 : f32 to vector<8x384xf32>
    %143 = arith.addf %142, %141 : vector<8x384xf32>
    %144 = arith.divf %142, %143 : vector<8x384xf32>
    %145 = vector.extract_strided_slice %144 {offsets = [0, 0], sizes = [8, 128], strides = [1, 1]} : vector<8x384xf32> to vector<8x128xf32>
    %146 = vector.extract_strided_slice %144 {offsets = [0, 128], sizes = [8, 128], strides = [1, 1]} : vector<8x384xf32> to vector<8x128xf32>
    %147 = vector.extract_strided_slice %144 {offsets = [0, 256], sizes = [8, 128], strides = [1, 1]} : vector<8x384xf32> to vector<8x128xf32>
    %148 = vector.extract_strided_slice %138 {offsets = [0, 384], sizes = [8, 128], strides = [1, 1]} : vector<8x512xf32> to vector<8x128xf32>
    %149 = math.tanh %148 : vector<8x128xf32>
    %150 = arith.mulf %146, %94 : vector<8x128xf32>
    %151 = arith.mulf %145, %149 : vector<8x128xf32>
    %152 = arith.addf %150, %151 : vector<8x128xf32>
    %153 = math.tanh %152 : vector<8x128xf32>
    %154 = arith.mulf %147, %153 : vector<8x128xf32>
    %cst_64 = arith.constant 0.000000e+00 : f32
    %155 = vector.broadcast %cst_64 : f32 to vector<8x128xf32>
    %156 = arith.select %105, %154, %155 : vector<8x128xi1>, vector<8x128xf32>
    %157 = arith.select %105, %154, %93 : vector<8x128xi1>, vector<8x128xf32>
    %158 = arith.select %105, %152, %94 : vector<8x128xi1>, vector<8x128xf32>
    %159 = arith.maximumf %95, %129 : vector<8x128xf32>
    %160 = arith.maximumf %96, %156 : vector<8x128xf32>
    %c2_i32 = arith.constant 2 : i32
    %161 = arith.addi %24, %c2_i32 : i32
    %c7_i32_65 = arith.constant 7 : i32
    %162 = arith.subi %c7_i32_65, %c2_i32 : i32
    %163 = arith.addi %26, %162 : i32
    %164 = arith.sitofp %161 : i32 to f32
    %165 = vector.broadcast %164 : f32 to vector<8x128xf32>
    %166 = arith.cmpf ogt, %21, %165 : vector<8x128xf32>
    %167 = arith.sitofp %163 : i32 to f32
    %168 = vector.broadcast %167 : f32 to vector<8x128xf32>
    %169 = arith.cmpf ogt, %21, %168 : vector<8x128xf32>
    %170 = arith.index_cast %c2_i32 : i32 to index
    %c0_66 = arith.constant 0 : index
    %c0_67 = arith.constant 0 : index
    %171 = vector.load %arg11[%170, %c0_66, %c0_67] : memref<8x8x512xf32, #tpu.memory_space<vmem>>, vector<1x8x512xf32>
    %172 = vector.shape_cast %171 : vector<1x8x512xf32> to vector<8x512xf32>
    %173 = arith.truncf %130 : vector<8x128xf32> to vector<8x128xbf16>
    %cst_68 = arith.constant dense<0.000000e+00> : vector<8x512xf32>
    %174 = tpu.matmul %173, %22, %cst_68 {dimension_numbers = #tpu.dot_dimension_numbers<[1], [0], [0], [1], [0, 0, 1, 1], [], []>} : vector<8x128xbf16>, vector<128x512xbf16>, vector<8x512xf32> -> vector<8x512xf32>
    %175 = arith.addf %172, %174 : vector<8x512xf32>
    %176 = vector.extract_strided_slice %175 {offsets = [0, 0], sizes = [8, 384], strides = [1, 1]} : vector<8x512xf32> to vector<8x384xf32>
    %177 = arith.negf %176 : vector<8x384xf32>
    %178 = math.exp %177 : vector<8x384xf32>
    %cst_69 = arith.constant 1.000000e+00 : f32
    %179 = vector.broadcast %cst_69 : f32 to vector<8x384xf32>
    %180 = arith.addf %179, %178 : vector<8x384xf32>
    %181 = arith.divf %179, %180 : vector<8x384xf32>
    %182 = vector.extract_strided_slice %181 {offsets = [0, 0], sizes = [8, 128], strides = [1, 1]} : vector<8x384xf32> to vector<8x128xf32>
    %183 = vector.extract_strided_slice %181 {offsets = [0, 128], sizes = [8, 128], strides = [1, 1]} : vector<8x384xf32> to vector<8x128xf32>
    %184 = vector.extract_strided_slice %181 {offsets = [0, 256], sizes = [8, 128], strides = [1, 1]} : vector<8x384xf32> to vector<8x128xf32>
    %185 = vector.extract_strided_slice %175 {offsets = [0, 384], sizes = [8, 128], strides = [1, 1]} : vector<8x512xf32> to vector<8x128xf32>
    %186 = math.tanh %185 : vector<8x128xf32>
    %187 = arith.mulf %183, %131 : vector<8x128xf32>
    %188 = arith.mulf %182, %186 : vector<8x128xf32>
    %189 = arith.addf %187, %188 : vector<8x128xf32>
    %190 = math.tanh %189 : vector<8x128xf32>
    %191 = arith.mulf %184, %190 : vector<8x128xf32>
    %cst_70 = arith.constant 0.000000e+00 : f32
    %192 = vector.broadcast %cst_70 : f32 to vector<8x128xf32>
    %193 = arith.select %166, %191, %192 : vector<8x128xi1>, vector<8x128xf32>
    %194 = arith.select %166, %191, %130 : vector<8x128xi1>, vector<8x128xf32>
    %195 = arith.select %166, %189, %131 : vector<8x128xi1>, vector<8x128xf32>
    %c7_i32_71 = arith.constant 7 : i32
    %196 = arith.subi %c7_i32_71, %c2_i32 : i32
    %197 = arith.index_cast %196 : i32 to index
    %c0_72 = arith.constant 0 : index
    %c0_73 = arith.constant 0 : index
    %198 = vector.load %arg12[%197, %c0_72, %c0_73] : memref<8x8x512xf32, #tpu.memory_space<vmem>>, vector<1x8x512xf32>
    %199 = vector.shape_cast %198 : vector<1x8x512xf32> to vector<8x512xf32>
    %200 = arith.truncf %157 : vector<8x128xf32> to vector<8x128xbf16>
    %cst_74 = arith.constant dense<0.000000e+00> : vector<8x512xf32>
    %201 = tpu.matmul %200, %23, %cst_74 {dimension_numbers = #tpu.dot_dimension_numbers<[1], [0], [0], [1], [0, 0, 1, 1], [], []>} : vector<8x128xbf16>, vector<128x512xbf16>, vector<8x512xf32> -> vector<8x512xf32>
    %202 = arith.addf %199, %201 : vector<8x512xf32>
    %203 = vector.extract_strided_slice %202 {offsets = [0, 0], sizes = [8, 384], strides = [1, 1]} : vector<8x512xf32> to vector<8x384xf32>
    %204 = arith.negf %203 : vector<8x384xf32>
    %205 = math.exp %204 : vector<8x384xf32>
    %cst_75 = arith.constant 1.000000e+00 : f32
    %206 = vector.broadcast %cst_75 : f32 to vector<8x384xf32>
    %207 = arith.addf %206, %205 : vector<8x384xf32>
    %208 = arith.divf %206, %207 : vector<8x384xf32>
    %209 = vector.extract_strided_slice %208 {offsets = [0, 0], sizes = [8, 128], strides = [1, 1]} : vector<8x384xf32> to vector<8x128xf32>
    %210 = vector.extract_strided_slice %208 {offsets = [0, 128], sizes = [8, 128], strides = [1, 1]} : vector<8x384xf32> to vector<8x128xf32>
    %211 = vector.extract_strided_slice %208 {offsets = [0, 256], sizes = [8, 128], strides = [1, 1]} : vector<8x384xf32> to vector<8x128xf32>
    %212 = vector.extract_strided_slice %202 {offsets = [0, 384], sizes = [8, 128], strides = [1, 1]} : vector<8x512xf32> to vector<8x128xf32>
    %213 = math.tanh %212 : vector<8x128xf32>
    %214 = arith.mulf %210, %158 : vector<8x128xf32>
    %215 = arith.mulf %209, %213 : vector<8x128xf32>
    %216 = arith.addf %214, %215 : vector<8x128xf32>
    %217 = math.tanh %216 : vector<8x128xf32>
    %218 = arith.mulf %211, %217 : vector<8x128xf32>
    %cst_76 = arith.constant 0.000000e+00 : f32
    %219 = vector.broadcast %cst_76 : f32 to vector<8x128xf32>
    %220 = arith.select %169, %218, %219 : vector<8x128xi1>, vector<8x128xf32>
    %221 = arith.select %169, %218, %157 : vector<8x128xi1>, vector<8x128xf32>
    %222 = arith.select %169, %216, %158 : vector<8x128xi1>, vector<8x128xf32>
    %223 = arith.maximumf %159, %193 : vector<8x128xf32>
    %224 = arith.maximumf %160, %220 : vector<8x128xf32>
    %c3_i32 = arith.constant 3 : i32
    %225 = arith.addi %24, %c3_i32 : i32
    %c7_i32_77 = arith.constant 7 : i32
    %226 = arith.subi %c7_i32_77, %c3_i32 : i32
    %227 = arith.addi %26, %226 : i32
    %228 = arith.sitofp %225 : i32 to f32
    %229 = vector.broadcast %228 : f32 to vector<8x128xf32>
    %230 = arith.cmpf ogt, %21, %229 : vector<8x128xf32>
    %231 = arith.sitofp %227 : i32 to f32
    %232 = vector.broadcast %231 : f32 to vector<8x128xf32>
    %233 = arith.cmpf ogt, %21, %232 : vector<8x128xf32>
    %234 = arith.index_cast %c3_i32 : i32 to index
    %c0_78 = arith.constant 0 : index
    %c0_79 = arith.constant 0 : index
    %235 = vector.load %arg11[%234, %c0_78, %c0_79] : memref<8x8x512xf32, #tpu.memory_space<vmem>>, vector<1x8x512xf32>
    %236 = vector.shape_cast %235 : vector<1x8x512xf32> to vector<8x512xf32>
    %237 = arith.truncf %194 : vector<8x128xf32> to vector<8x128xbf16>
    %cst_80 = arith.constant dense<0.000000e+00> : vector<8x512xf32>
    %238 = tpu.matmul %237, %22, %cst_80 {dimension_numbers = #tpu.dot_dimension_numbers<[1], [0], [0], [1], [0, 0, 1, 1], [], []>} : vector<8x128xbf16>, vector<128x512xbf16>, vector<8x512xf32> -> vector<8x512xf32>
    %239 = arith.addf %236, %238 : vector<8x512xf32>
    %240 = vector.extract_strided_slice %239 {offsets = [0, 0], sizes = [8, 384], strides = [1, 1]} : vector<8x512xf32> to vector<8x384xf32>
    %241 = arith.negf %240 : vector<8x384xf32>
    %242 = math.exp %241 : vector<8x384xf32>
    %cst_81 = arith.constant 1.000000e+00 : f32
    %243 = vector.broadcast %cst_81 : f32 to vector<8x384xf32>
    %244 = arith.addf %243, %242 : vector<8x384xf32>
    %245 = arith.divf %243, %244 : vector<8x384xf32>
    %246 = vector.extract_strided_slice %245 {offsets = [0, 0], sizes = [8, 128], strides = [1, 1]} : vector<8x384xf32> to vector<8x128xf32>
    %247 = vector.extract_strided_slice %245 {offsets = [0, 128], sizes = [8, 128], strides = [1, 1]} : vector<8x384xf32> to vector<8x128xf32>
    %248 = vector.extract_strided_slice %245 {offsets = [0, 256], sizes = [8, 128], strides = [1, 1]} : vector<8x384xf32> to vector<8x128xf32>
    %249 = vector.extract_strided_slice %239 {offsets = [0, 384], sizes = [8, 128], strides = [1, 1]} : vector<8x512xf32> to vector<8x128xf32>
    %250 = math.tanh %249 : vector<8x128xf32>
    %251 = arith.mulf %247, %195 : vector<8x128xf32>
    %252 = arith.mulf %246, %250 : vector<8x128xf32>
    %253 = arith.addf %251, %252 : vector<8x128xf32>
    %254 = math.tanh %253 : vector<8x128xf32>
    %255 = arith.mulf %248, %254 : vector<8x128xf32>
    %cst_82 = arith.constant 0.000000e+00 : f32
    %256 = vector.broadcast %cst_82 : f32 to vector<8x128xf32>
    %257 = arith.select %230, %255, %256 : vector<8x128xi1>, vector<8x128xf32>
    %258 = arith.select %230, %255, %194 : vector<8x128xi1>, vector<8x128xf32>
    %259 = arith.select %230, %253, %195 : vector<8x128xi1>, vector<8x128xf32>
    %c7_i32_83 = arith.constant 7 : i32
    %260 = arith.subi %c7_i32_83, %c3_i32 : i32
    %261 = arith.index_cast %260 : i32 to index
    %c0_84 = arith.constant 0 : index
    %c0_85 = arith.constant 0 : index
    %262 = vector.load %arg12[%261, %c0_84, %c0_85] : memref<8x8x512xf32, #tpu.memory_space<vmem>>, vector<1x8x512xf32>
    %263 = vector.shape_cast %262 : vector<1x8x512xf32> to vector<8x512xf32>
    %264 = arith.truncf %221 : vector<8x128xf32> to vector<8x128xbf16>
    %cst_86 = arith.constant dense<0.000000e+00> : vector<8x512xf32>
    %265 = tpu.matmul %264, %23, %cst_86 {dimension_numbers = #tpu.dot_dimension_numbers<[1], [0], [0], [1], [0, 0, 1, 1], [], []>} : vector<8x128xbf16>, vector<128x512xbf16>, vector<8x512xf32> -> vector<8x512xf32>
    %266 = arith.addf %263, %265 : vector<8x512xf32>
    %267 = vector.extract_strided_slice %266 {offsets = [0, 0], sizes = [8, 384], strides = [1, 1]} : vector<8x512xf32> to vector<8x384xf32>
    %268 = arith.negf %267 : vector<8x384xf32>
    %269 = math.exp %268 : vector<8x384xf32>
    %cst_87 = arith.constant 1.000000e+00 : f32
    %270 = vector.broadcast %cst_87 : f32 to vector<8x384xf32>
    %271 = arith.addf %270, %269 : vector<8x384xf32>
    %272 = arith.divf %270, %271 : vector<8x384xf32>
    %273 = vector.extract_strided_slice %272 {offsets = [0, 0], sizes = [8, 128], strides = [1, 1]} : vector<8x384xf32> to vector<8x128xf32>
    %274 = vector.extract_strided_slice %272 {offsets = [0, 128], sizes = [8, 128], strides = [1, 1]} : vector<8x384xf32> to vector<8x128xf32>
    %275 = vector.extract_strided_slice %272 {offsets = [0, 256], sizes = [8, 128], strides = [1, 1]} : vector<8x384xf32> to vector<8x128xf32>
    %276 = vector.extract_strided_slice %266 {offsets = [0, 384], sizes = [8, 128], strides = [1, 1]} : vector<8x512xf32> to vector<8x128xf32>
    %277 = math.tanh %276 : vector<8x128xf32>
    %278 = arith.mulf %274, %222 : vector<8x128xf32>
    %279 = arith.mulf %273, %277 : vector<8x128xf32>
    %280 = arith.addf %278, %279 : vector<8x128xf32>
    %281 = math.tanh %280 : vector<8x128xf32>
    %282 = arith.mulf %275, %281 : vector<8x128xf32>
    %cst_88 = arith.constant 0.000000e+00 : f32
    %283 = vector.broadcast %cst_88 : f32 to vector<8x128xf32>
    %284 = arith.select %233, %282, %283 : vector<8x128xi1>, vector<8x128xf32>
    %285 = arith.select %233, %282, %221 : vector<8x128xi1>, vector<8x128xf32>
    %286 = arith.select %233, %280, %222 : vector<8x128xi1>, vector<8x128xf32>
    %287 = arith.maximumf %223, %257 : vector<8x128xf32>
    %288 = arith.maximumf %224, %284 : vector<8x128xf32>
    %c4_i32 = arith.constant 4 : i32
    %289 = arith.addi %24, %c4_i32 : i32
    %c7_i32_89 = arith.constant 7 : i32
    %290 = arith.subi %c7_i32_89, %c4_i32 : i32
    %291 = arith.addi %26, %290 : i32
    %292 = arith.sitofp %289 : i32 to f32
    %293 = vector.broadcast %292 : f32 to vector<8x128xf32>
    %294 = arith.cmpf ogt, %21, %293 : vector<8x128xf32>
    %295 = arith.sitofp %291 : i32 to f32
    %296 = vector.broadcast %295 : f32 to vector<8x128xf32>
    %297 = arith.cmpf ogt, %21, %296 : vector<8x128xf32>
    %298 = arith.index_cast %c4_i32 : i32 to index
    %c0_90 = arith.constant 0 : index
    %c0_91 = arith.constant 0 : index
    %299 = vector.load %arg11[%298, %c0_90, %c0_91] : memref<8x8x512xf32, #tpu.memory_space<vmem>>, vector<1x8x512xf32>
    %300 = vector.shape_cast %299 : vector<1x8x512xf32> to vector<8x512xf32>
    %301 = arith.truncf %258 : vector<8x128xf32> to vector<8x128xbf16>
    %cst_92 = arith.constant dense<0.000000e+00> : vector<8x512xf32>
    %302 = tpu.matmul %301, %22, %cst_92 {dimension_numbers = #tpu.dot_dimension_numbers<[1], [0], [0], [1], [0, 0, 1, 1], [], []>} : vector<8x128xbf16>, vector<128x512xbf16>, vector<8x512xf32> -> vector<8x512xf32>
    %303 = arith.addf %300, %302 : vector<8x512xf32>
    %304 = vector.extract_strided_slice %303 {offsets = [0, 0], sizes = [8, 384], strides = [1, 1]} : vector<8x512xf32> to vector<8x384xf32>
    %305 = arith.negf %304 : vector<8x384xf32>
    %306 = math.exp %305 : vector<8x384xf32>
    %cst_93 = arith.constant 1.000000e+00 : f32
    %307 = vector.broadcast %cst_93 : f32 to vector<8x384xf32>
    %308 = arith.addf %307, %306 : vector<8x384xf32>
    %309 = arith.divf %307, %308 : vector<8x384xf32>
    %310 = vector.extract_strided_slice %309 {offsets = [0, 0], sizes = [8, 128], strides = [1, 1]} : vector<8x384xf32> to vector<8x128xf32>
    %311 = vector.extract_strided_slice %309 {offsets = [0, 128], sizes = [8, 128], strides = [1, 1]} : vector<8x384xf32> to vector<8x128xf32>
    %312 = vector.extract_strided_slice %309 {offsets = [0, 256], sizes = [8, 128], strides = [1, 1]} : vector<8x384xf32> to vector<8x128xf32>
    %313 = vector.extract_strided_slice %303 {offsets = [0, 384], sizes = [8, 128], strides = [1, 1]} : vector<8x512xf32> to vector<8x128xf32>
    %314 = math.tanh %313 : vector<8x128xf32>
    %315 = arith.mulf %311, %259 : vector<8x128xf32>
    %316 = arith.mulf %310, %314 : vector<8x128xf32>
    %317 = arith.addf %315, %316 : vector<8x128xf32>
    %318 = math.tanh %317 : vector<8x128xf32>
    %319 = arith.mulf %312, %318 : vector<8x128xf32>
    %cst_94 = arith.constant 0.000000e+00 : f32
    %320 = vector.broadcast %cst_94 : f32 to vector<8x128xf32>
    %321 = arith.select %294, %319, %320 : vector<8x128xi1>, vector<8x128xf32>
    %322 = arith.select %294, %319, %258 : vector<8x128xi1>, vector<8x128xf32>
    %323 = arith.select %294, %317, %259 : vector<8x128xi1>, vector<8x128xf32>
    %c7_i32_95 = arith.constant 7 : i32
    %324 = arith.subi %c7_i32_95, %c4_i32 : i32
    %325 = arith.index_cast %324 : i32 to index
    %c0_96 = arith.constant 0 : index
    %c0_97 = arith.constant 0 : index
    %326 = vector.load %arg12[%325, %c0_96, %c0_97] : memref<8x8x512xf32, #tpu.memory_space<vmem>>, vector<1x8x512xf32>
    %327 = vector.shape_cast %326 : vector<1x8x512xf32> to vector<8x512xf32>
    %328 = arith.truncf %285 : vector<8x128xf32> to vector<8x128xbf16>
    %cst_98 = arith.constant dense<0.000000e+00> : vector<8x512xf32>
    %329 = tpu.matmul %328, %23, %cst_98 {dimension_numbers = #tpu.dot_dimension_numbers<[1], [0], [0], [1], [0, 0, 1, 1], [], []>} : vector<8x128xbf16>, vector<128x512xbf16>, vector<8x512xf32> -> vector<8x512xf32>
    %330 = arith.addf %327, %329 : vector<8x512xf32>
    %331 = vector.extract_strided_slice %330 {offsets = [0, 0], sizes = [8, 384], strides = [1, 1]} : vector<8x512xf32> to vector<8x384xf32>
    %332 = arith.negf %331 : vector<8x384xf32>
    %333 = math.exp %332 : vector<8x384xf32>
    %cst_99 = arith.constant 1.000000e+00 : f32
    %334 = vector.broadcast %cst_99 : f32 to vector<8x384xf32>
    %335 = arith.addf %334, %333 : vector<8x384xf32>
    %336 = arith.divf %334, %335 : vector<8x384xf32>
    %337 = vector.extract_strided_slice %336 {offsets = [0, 0], sizes = [8, 128], strides = [1, 1]} : vector<8x384xf32> to vector<8x128xf32>
    %338 = vector.extract_strided_slice %336 {offsets = [0, 128], sizes = [8, 128], strides = [1, 1]} : vector<8x384xf32> to vector<8x128xf32>
    %339 = vector.extract_strided_slice %336 {offsets = [0, 256], sizes = [8, 128], strides = [1, 1]} : vector<8x384xf32> to vector<8x128xf32>
    %340 = vector.extract_strided_slice %330 {offsets = [0, 384], sizes = [8, 128], strides = [1, 1]} : vector<8x512xf32> to vector<8x128xf32>
    %341 = math.tanh %340 : vector<8x128xf32>
    %342 = arith.mulf %338, %286 : vector<8x128xf32>
    %343 = arith.mulf %337, %341 : vector<8x128xf32>
    %344 = arith.addf %342, %343 : vector<8x128xf32>
    %345 = math.tanh %344 : vector<8x128xf32>
    %346 = arith.mulf %339, %345 : vector<8x128xf32>
    %cst_100 = arith.constant 0.000000e+00 : f32
    %347 = vector.broadcast %cst_100 : f32 to vector<8x128xf32>
    %348 = arith.select %297, %346, %347 : vector<8x128xi1>, vector<8x128xf32>
    %349 = arith.select %297, %346, %285 : vector<8x128xi1>, vector<8x128xf32>
    %350 = arith.select %297, %344, %286 : vector<8x128xi1>, vector<8x128xf32>
    %351 = arith.maximumf %287, %321 : vector<8x128xf32>
    %352 = arith.maximumf %288, %348 : vector<8x128xf32>
    %c5_i32 = arith.constant 5 : i32
    %353 = arith.addi %24, %c5_i32 : i32
    %c7_i32_101 = arith.constant 7 : i32
    %354 = arith.subi %c7_i32_101, %c5_i32 : i32
    %355 = arith.addi %26, %354 : i32
    %356 = arith.sitofp %353 : i32 to f32
    %357 = vector.broadcast %356 : f32 to vector<8x128xf32>
    %358 = arith.cmpf ogt, %21, %357 : vector<8x128xf32>
    %359 = arith.sitofp %355 : i32 to f32
    %360 = vector.broadcast %359 : f32 to vector<8x128xf32>
    %361 = arith.cmpf ogt, %21, %360 : vector<8x128xf32>
    %362 = arith.index_cast %c5_i32 : i32 to index
    %c0_102 = arith.constant 0 : index
    %c0_103 = arith.constant 0 : index
    %363 = vector.load %arg11[%362, %c0_102, %c0_103] : memref<8x8x512xf32, #tpu.memory_space<vmem>>, vector<1x8x512xf32>
    %364 = vector.shape_cast %363 : vector<1x8x512xf32> to vector<8x512xf32>
    %365 = arith.truncf %322 : vector<8x128xf32> to vector<8x128xbf16>
    %cst_104 = arith.constant dense<0.000000e+00> : vector<8x512xf32>
    %366 = tpu.matmul %365, %22, %cst_104 {dimension_numbers = #tpu.dot_dimension_numbers<[1], [0], [0], [1], [0, 0, 1, 1], [], []>} : vector<8x128xbf16>, vector<128x512xbf16>, vector<8x512xf32> -> vector<8x512xf32>
    %367 = arith.addf %364, %366 : vector<8x512xf32>
    %368 = vector.extract_strided_slice %367 {offsets = [0, 0], sizes = [8, 384], strides = [1, 1]} : vector<8x512xf32> to vector<8x384xf32>
    %369 = arith.negf %368 : vector<8x384xf32>
    %370 = math.exp %369 : vector<8x384xf32>
    %cst_105 = arith.constant 1.000000e+00 : f32
    %371 = vector.broadcast %cst_105 : f32 to vector<8x384xf32>
    %372 = arith.addf %371, %370 : vector<8x384xf32>
    %373 = arith.divf %371, %372 : vector<8x384xf32>
    %374 = vector.extract_strided_slice %373 {offsets = [0, 0], sizes = [8, 128], strides = [1, 1]} : vector<8x384xf32> to vector<8x128xf32>
    %375 = vector.extract_strided_slice %373 {offsets = [0, 128], sizes = [8, 128], strides = [1, 1]} : vector<8x384xf32> to vector<8x128xf32>
    %376 = vector.extract_strided_slice %373 {offsets = [0, 256], sizes = [8, 128], strides = [1, 1]} : vector<8x384xf32> to vector<8x128xf32>
    %377 = vector.extract_strided_slice %367 {offsets = [0, 384], sizes = [8, 128], strides = [1, 1]} : vector<8x512xf32> to vector<8x128xf32>
    %378 = math.tanh %377 : vector<8x128xf32>
    %379 = arith.mulf %375, %323 : vector<8x128xf32>
    %380 = arith.mulf %374, %378 : vector<8x128xf32>
    %381 = arith.addf %379, %380 : vector<8x128xf32>
    %382 = math.tanh %381 : vector<8x128xf32>
    %383 = arith.mulf %376, %382 : vector<8x128xf32>
    %cst_106 = arith.constant 0.000000e+00 : f32
    %384 = vector.broadcast %cst_106 : f32 to vector<8x128xf32>
    %385 = arith.select %358, %383, %384 : vector<8x128xi1>, vector<8x128xf32>
    %386 = arith.select %358, %383, %322 : vector<8x128xi1>, vector<8x128xf32>
    %387 = arith.select %358, %381, %323 : vector<8x128xi1>, vector<8x128xf32>
    %c7_i32_107 = arith.constant 7 : i32
    %388 = arith.subi %c7_i32_107, %c5_i32 : i32
    %389 = arith.index_cast %388 : i32 to index
    %c0_108 = arith.constant 0 : index
    %c0_109 = arith.constant 0 : index
    %390 = vector.load %arg12[%389, %c0_108, %c0_109] : memref<8x8x512xf32, #tpu.memory_space<vmem>>, vector<1x8x512xf32>
    %391 = vector.shape_cast %390 : vector<1x8x512xf32> to vector<8x512xf32>
    %392 = arith.truncf %349 : vector<8x128xf32> to vector<8x128xbf16>
    %cst_110 = arith.constant dense<0.000000e+00> : vector<8x512xf32>
    %393 = tpu.matmul %392, %23, %cst_110 {dimension_numbers = #tpu.dot_dimension_numbers<[1], [0], [0], [1], [0, 0, 1, 1], [], []>} : vector<8x128xbf16>, vector<128x512xbf16>, vector<8x512xf32> -> vector<8x512xf32>
    %394 = arith.addf %391, %393 : vector<8x512xf32>
    %395 = vector.extract_strided_slice %394 {offsets = [0, 0], sizes = [8, 384], strides = [1, 1]} : vector<8x512xf32> to vector<8x384xf32>
    %396 = arith.negf %395 : vector<8x384xf32>
    %397 = math.exp %396 : vector<8x384xf32>
    %cst_111 = arith.constant 1.000000e+00 : f32
    %398 = vector.broadcast %cst_111 : f32 to vector<8x384xf32>
    %399 = arith.addf %398, %397 : vector<8x384xf32>
    %400 = arith.divf %398, %399 : vector<8x384xf32>
    %401 = vector.extract_strided_slice %400 {offsets = [0, 0], sizes = [8, 128], strides = [1, 1]} : vector<8x384xf32> to vector<8x128xf32>
    %402 = vector.extract_strided_slice %400 {offsets = [0, 128], sizes = [8, 128], strides = [1, 1]} : vector<8x384xf32> to vector<8x128xf32>
    %403 = vector.extract_strided_slice %400 {offsets = [0, 256], sizes = [8, 128], strides = [1, 1]} : vector<8x384xf32> to vector<8x128xf32>
    %404 = vector.extract_strided_slice %394 {offsets = [0, 384], sizes = [8, 128], strides = [1, 1]} : vector<8x512xf32> to vector<8x128xf32>
    %405 = math.tanh %404 : vector<8x128xf32>
    %406 = arith.mulf %402, %350 : vector<8x128xf32>
    %407 = arith.mulf %401, %405 : vector<8x128xf32>
    %408 = arith.addf %406, %407 : vector<8x128xf32>
    %409 = math.tanh %408 : vector<8x128xf32>
    %410 = arith.mulf %403, %409 : vector<8x128xf32>
    %cst_112 = arith.constant 0.000000e+00 : f32
    %411 = vector.broadcast %cst_112 : f32 to vector<8x128xf32>
    %412 = arith.select %361, %410, %411 : vector<8x128xi1>, vector<8x128xf32>
    %413 = arith.select %361, %410, %349 : vector<8x128xi1>, vector<8x128xf32>
    %414 = arith.select %361, %408, %350 : vector<8x128xi1>, vector<8x128xf32>
    %415 = arith.maximumf %351, %385 : vector<8x128xf32>
    %416 = arith.maximumf %352, %412 : vector<8x128xf32>
    %c6_i32 = arith.constant 6 : i32
    %417 = arith.addi %24, %c6_i32 : i32
    %c7_i32_113 = arith.constant 7 : i32
    %418 = arith.subi %c7_i32_113, %c6_i32 : i32
    %419 = arith.addi %26, %418 : i32
    %420 = arith.sitofp %417 : i32 to f32
    %421 = vector.broadcast %420 : f32 to vector<8x128xf32>
    %422 = arith.cmpf ogt, %21, %421 : vector<8x128xf32>
    %423 = arith.sitofp %419 : i32 to f32
    %424 = vector.broadcast %423 : f32 to vector<8x128xf32>
    %425 = arith.cmpf ogt, %21, %424 : vector<8x128xf32>
    %426 = arith.index_cast %c6_i32 : i32 to index
    %c0_114 = arith.constant 0 : index
    %c0_115 = arith.constant 0 : index
    %427 = vector.load %arg11[%426, %c0_114, %c0_115] : memref<8x8x512xf32, #tpu.memory_space<vmem>>, vector<1x8x512xf32>
    %428 = vector.shape_cast %427 : vector<1x8x512xf32> to vector<8x512xf32>
    %429 = arith.truncf %386 : vector<8x128xf32> to vector<8x128xbf16>
    %cst_116 = arith.constant dense<0.000000e+00> : vector<8x512xf32>
    %430 = tpu.matmul %429, %22, %cst_116 {dimension_numbers = #tpu.dot_dimension_numbers<[1], [0], [0], [1], [0, 0, 1, 1], [], []>} : vector<8x128xbf16>, vector<128x512xbf16>, vector<8x512xf32> -> vector<8x512xf32>
    %431 = arith.addf %428, %430 : vector<8x512xf32>
    %432 = vector.extract_strided_slice %431 {offsets = [0, 0], sizes = [8, 384], strides = [1, 1]} : vector<8x512xf32> to vector<8x384xf32>
    %433 = arith.negf %432 : vector<8x384xf32>
    %434 = math.exp %433 : vector<8x384xf32>
    %cst_117 = arith.constant 1.000000e+00 : f32
    %435 = vector.broadcast %cst_117 : f32 to vector<8x384xf32>
    %436 = arith.addf %435, %434 : vector<8x384xf32>
    %437 = arith.divf %435, %436 : vector<8x384xf32>
    %438 = vector.extract_strided_slice %437 {offsets = [0, 0], sizes = [8, 128], strides = [1, 1]} : vector<8x384xf32> to vector<8x128xf32>
    %439 = vector.extract_strided_slice %437 {offsets = [0, 128], sizes = [8, 128], strides = [1, 1]} : vector<8x384xf32> to vector<8x128xf32>
    %440 = vector.extract_strided_slice %437 {offsets = [0, 256], sizes = [8, 128], strides = [1, 1]} : vector<8x384xf32> to vector<8x128xf32>
    %441 = vector.extract_strided_slice %431 {offsets = [0, 384], sizes = [8, 128], strides = [1, 1]} : vector<8x512xf32> to vector<8x128xf32>
    %442 = math.tanh %441 : vector<8x128xf32>
    %443 = arith.mulf %439, %387 : vector<8x128xf32>
    %444 = arith.mulf %438, %442 : vector<8x128xf32>
    %445 = arith.addf %443, %444 : vector<8x128xf32>
    %446 = math.tanh %445 : vector<8x128xf32>
    %447 = arith.mulf %440, %446 : vector<8x128xf32>
    %cst_118 = arith.constant 0.000000e+00 : f32
    %448 = vector.broadcast %cst_118 : f32 to vector<8x128xf32>
    %449 = arith.select %422, %447, %448 : vector<8x128xi1>, vector<8x128xf32>
    %450 = arith.select %422, %447, %386 : vector<8x128xi1>, vector<8x128xf32>
    %451 = arith.select %422, %445, %387 : vector<8x128xi1>, vector<8x128xf32>
    %c7_i32_119 = arith.constant 7 : i32
    %452 = arith.subi %c7_i32_119, %c6_i32 : i32
    %453 = arith.index_cast %452 : i32 to index
    %c0_120 = arith.constant 0 : index
    %c0_121 = arith.constant 0 : index
    %454 = vector.load %arg12[%453, %c0_120, %c0_121] : memref<8x8x512xf32, #tpu.memory_space<vmem>>, vector<1x8x512xf32>
    %455 = vector.shape_cast %454 : vector<1x8x512xf32> to vector<8x512xf32>
    %456 = arith.truncf %413 : vector<8x128xf32> to vector<8x128xbf16>
    %cst_122 = arith.constant dense<0.000000e+00> : vector<8x512xf32>
    %457 = tpu.matmul %456, %23, %cst_122 {dimension_numbers = #tpu.dot_dimension_numbers<[1], [0], [0], [1], [0, 0, 1, 1], [], []>} : vector<8x128xbf16>, vector<128x512xbf16>, vector<8x512xf32> -> vector<8x512xf32>
    %458 = arith.addf %455, %457 : vector<8x512xf32>
    %459 = vector.extract_strided_slice %458 {offsets = [0, 0], sizes = [8, 384], strides = [1, 1]} : vector<8x512xf32> to vector<8x384xf32>
    %460 = arith.negf %459 : vector<8x384xf32>
    %461 = math.exp %460 : vector<8x384xf32>
    %cst_123 = arith.constant 1.000000e+00 : f32
    %462 = vector.broadcast %cst_123 : f32 to vector<8x384xf32>
    %463 = arith.addf %462, %461 : vector<8x384xf32>
    %464 = arith.divf %462, %463 : vector<8x384xf32>
    %465 = vector.extract_strided_slice %464 {offsets = [0, 0], sizes = [8, 128], strides = [1, 1]} : vector<8x384xf32> to vector<8x128xf32>
    %466 = vector.extract_strided_slice %464 {offsets = [0, 128], sizes = [8, 128], strides = [1, 1]} : vector<8x384xf32> to vector<8x128xf32>
    %467 = vector.extract_strided_slice %464 {offsets = [0, 256], sizes = [8, 128], strides = [1, 1]} : vector<8x384xf32> to vector<8x128xf32>
    %468 = vector.extract_strided_slice %458 {offsets = [0, 384], sizes = [8, 128], strides = [1, 1]} : vector<8x512xf32> to vector<8x128xf32>
    %469 = math.tanh %468 : vector<8x128xf32>
    %470 = arith.mulf %466, %414 : vector<8x128xf32>
    %471 = arith.mulf %465, %469 : vector<8x128xf32>
    %472 = arith.addf %470, %471 : vector<8x128xf32>
    %473 = math.tanh %472 : vector<8x128xf32>
    %474 = arith.mulf %467, %473 : vector<8x128xf32>
    %cst_124 = arith.constant 0.000000e+00 : f32
    %475 = vector.broadcast %cst_124 : f32 to vector<8x128xf32>
    %476 = arith.select %425, %474, %475 : vector<8x128xi1>, vector<8x128xf32>
    %477 = arith.select %425, %474, %413 : vector<8x128xi1>, vector<8x128xf32>
    %478 = arith.select %425, %472, %414 : vector<8x128xi1>, vector<8x128xf32>
    %479 = arith.maximumf %415, %449 : vector<8x128xf32>
    %480 = arith.maximumf %416, %476 : vector<8x128xf32>
    %c7_i32_125 = arith.constant 7 : i32
    %481 = arith.addi %24, %c7_i32_125 : i32
    %c7_i32_126 = arith.constant 7 : i32
    %482 = arith.subi %c7_i32_126, %c7_i32_125 : i32
    %483 = arith.addi %26, %482 : i32
    %484 = arith.sitofp %481 : i32 to f32
    %485 = vector.broadcast %484 : f32 to vector<8x128xf32>
    %486 = arith.cmpf ogt, %21, %485 : vector<8x128xf32>
    %487 = arith.sitofp %483 : i32 to f32
    %488 = vector.broadcast %487 : f32 to vector<8x128xf32>
    %489 = arith.cmpf ogt, %21, %488 : vector<8x128xf32>
    %490 = arith.index_cast %c7_i32_125 : i32 to index
    %c0_127 = arith.constant 0 : index
    %c0_128 = arith.constant 0 : index
    %491 = vector.load %arg11[%490, %c0_127, %c0_128] : memref<8x8x512xf32, #tpu.memory_space<vmem>>, vector<1x8x512xf32>
    %492 = vector.shape_cast %491 : vector<1x8x512xf32> to vector<8x512xf32>
    %493 = arith.truncf %450 : vector<8x128xf32> to vector<8x128xbf16>
    %cst_129 = arith.constant dense<0.000000e+00> : vector<8x512xf32>
    %494 = tpu.matmul %493, %22, %cst_129 {dimension_numbers = #tpu.dot_dimension_numbers<[1], [0], [0], [1], [0, 0, 1, 1], [], []>} : vector<8x128xbf16>, vector<128x512xbf16>, vector<8x512xf32> -> vector<8x512xf32>
    %495 = arith.addf %492, %494 : vector<8x512xf32>
    %496 = vector.extract_strided_slice %495 {offsets = [0, 0], sizes = [8, 384], strides = [1, 1]} : vector<8x512xf32> to vector<8x384xf32>
    %497 = arith.negf %496 : vector<8x384xf32>
    %498 = math.exp %497 : vector<8x384xf32>
    %cst_130 = arith.constant 1.000000e+00 : f32
    %499 = vector.broadcast %cst_130 : f32 to vector<8x384xf32>
    %500 = arith.addf %499, %498 : vector<8x384xf32>
    %501 = arith.divf %499, %500 : vector<8x384xf32>
    %502 = vector.extract_strided_slice %501 {offsets = [0, 0], sizes = [8, 128], strides = [1, 1]} : vector<8x384xf32> to vector<8x128xf32>
    %503 = vector.extract_strided_slice %501 {offsets = [0, 128], sizes = [8, 128], strides = [1, 1]} : vector<8x384xf32> to vector<8x128xf32>
    %504 = vector.extract_strided_slice %501 {offsets = [0, 256], sizes = [8, 128], strides = [1, 1]} : vector<8x384xf32> to vector<8x128xf32>
    %505 = vector.extract_strided_slice %495 {offsets = [0, 384], sizes = [8, 128], strides = [1, 1]} : vector<8x512xf32> to vector<8x128xf32>
    %506 = math.tanh %505 : vector<8x128xf32>
    %507 = arith.mulf %503, %451 : vector<8x128xf32>
    %508 = arith.mulf %502, %506 : vector<8x128xf32>
    %509 = arith.addf %507, %508 : vector<8x128xf32>
    %510 = math.tanh %509 : vector<8x128xf32>
    %511 = arith.mulf %504, %510 : vector<8x128xf32>
    %cst_131 = arith.constant 0.000000e+00 : f32
    %512 = vector.broadcast %cst_131 : f32 to vector<8x128xf32>
    %513 = arith.select %486, %511, %512 : vector<8x128xi1>, vector<8x128xf32>
    %514 = arith.select %486, %511, %450 : vector<8x128xi1>, vector<8x128xf32>
    %515 = arith.select %486, %509, %451 : vector<8x128xi1>, vector<8x128xf32>
    %c7_i32_132 = arith.constant 7 : i32
    %516 = arith.subi %c7_i32_132, %c7_i32_125 : i32
    %517 = arith.index_cast %516 : i32 to index
    %c0_133 = arith.constant 0 : index
    %c0_134 = arith.constant 0 : index
    %518 = vector.load %arg12[%517, %c0_133, %c0_134] : memref<8x8x512xf32, #tpu.memory_space<vmem>>, vector<1x8x512xf32>
    %519 = vector.shape_cast %518 : vector<1x8x512xf32> to vector<8x512xf32>
    %520 = arith.truncf %477 : vector<8x128xf32> to vector<8x128xbf16>
    %cst_135 = arith.constant dense<0.000000e+00> : vector<8x512xf32>
    %521 = tpu.matmul %520, %23, %cst_135 {dimension_numbers = #tpu.dot_dimension_numbers<[1], [0], [0], [1], [0, 0, 1, 1], [], []>} : vector<8x128xbf16>, vector<128x512xbf16>, vector<8x512xf32> -> vector<8x512xf32>
    %522 = arith.addf %519, %521 : vector<8x512xf32>
    %523 = vector.extract_strided_slice %522 {offsets = [0, 0], sizes = [8, 384], strides = [1, 1]} : vector<8x512xf32> to vector<8x384xf32>
    %524 = arith.negf %523 : vector<8x384xf32>
    %525 = math.exp %524 : vector<8x384xf32>
    %cst_136 = arith.constant 1.000000e+00 : f32
    %526 = vector.broadcast %cst_136 : f32 to vector<8x384xf32>
    %527 = arith.addf %526, %525 : vector<8x384xf32>
    %528 = arith.divf %526, %527 : vector<8x384xf32>
    %529 = vector.extract_strided_slice %528 {offsets = [0, 0], sizes = [8, 128], strides = [1, 1]} : vector<8x384xf32> to vector<8x128xf32>
    %530 = vector.extract_strided_slice %528 {offsets = [0, 128], sizes = [8, 128], strides = [1, 1]} : vector<8x384xf32> to vector<8x128xf32>
    %531 = vector.extract_strided_slice %528 {offsets = [0, 256], sizes = [8, 128], strides = [1, 1]} : vector<8x384xf32> to vector<8x128xf32>
    %532 = vector.extract_strided_slice %522 {offsets = [0, 384], sizes = [8, 128], strides = [1, 1]} : vector<8x512xf32> to vector<8x128xf32>
    %533 = math.tanh %532 : vector<8x128xf32>
    %534 = arith.mulf %530, %478 : vector<8x128xf32>
    %535 = arith.mulf %529, %533 : vector<8x128xf32>
    %536 = arith.addf %534, %535 : vector<8x128xf32>
    %537 = math.tanh %536 : vector<8x128xf32>
    %538 = arith.mulf %531, %537 : vector<8x128xf32>
    %cst_137 = arith.constant 0.000000e+00 : f32
    %539 = vector.broadcast %cst_137 : f32 to vector<8x128xf32>
    %540 = arith.select %489, %538, %539 : vector<8x128xi1>, vector<8x128xf32>
    %541 = arith.select %489, %538, %477 : vector<8x128xi1>, vector<8x128xf32>
    %542 = arith.select %489, %536, %478 : vector<8x128xi1>, vector<8x128xf32>
    %543 = arith.maximumf %479, %513 : vector<8x128xf32>
    %544 = arith.maximumf %480, %540 : vector<8x128xf32>
    %c8_i32_138 = arith.constant 8 : i32
    %c0_139 = arith.constant 0 : index
    %c0_140 = arith.constant 0 : index
    %545 = vector.load %arg13[%c0_139, %c0_140] : memref<8x128xf32, #tpu.memory_space<vmem>>, vector<8x128xf32>
    tpu.vector_store %arg13[%c0_139, %c0_140], %514 {strides = array<i32>} : memref<8x128xf32, #tpu.memory_space<vmem>>, vector<8x128xf32>,
    %c0_141 = arith.constant 0 : index
    %c0_142 = arith.constant 0 : index
    %546 = vector.load %arg14[%c0_141, %c0_142] : memref<8x128xf32, #tpu.memory_space<vmem>>, vector<8x128xf32>
    tpu.vector_store %arg14[%c0_141, %c0_142], %515 {strides = array<i32>} : memref<8x128xf32, #tpu.memory_space<vmem>>, vector<8x128xf32>,
    %c0_143 = arith.constant 0 : index
    %c0_144 = arith.constant 0 : index
    %547 = vector.load %arg15[%c0_143, %c0_144] : memref<8x128xf32, #tpu.memory_space<vmem>>, vector<8x128xf32>
    tpu.vector_store %arg15[%c0_143, %c0_144], %543 {strides = array<i32>} : memref<8x128xf32, #tpu.memory_space<vmem>>, vector<8x128xf32>,
    %c0_145 = arith.constant 0 : index
    %c0_146 = arith.constant 0 : index
    %548 = vector.load %arg16[%c0_145, %c0_146] : memref<8x128xf32, #tpu.memory_space<vmem>>, vector<8x128xf32>
    tpu.vector_store %arg16[%c0_145, %c0_146], %541 {strides = array<i32>} : memref<8x128xf32, #tpu.memory_space<vmem>>, vector<8x128xf32>,
    %c0_147 = arith.constant 0 : index
    %c0_148 = arith.constant 0 : index
    %549 = vector.load %arg17[%c0_147, %c0_148] : memref<8x128xf32, #tpu.memory_space<vmem>>, vector<8x128xf32>
    tpu.vector_store %arg17[%c0_147, %c0_148], %542 {strides = array<i32>} : memref<8x128xf32, #tpu.memory_space<vmem>>, vector<8x128xf32>,
    %c0_149 = arith.constant 0 : index
    %c0_150 = arith.constant 0 : index
    %550 = vector.load %arg18[%c0_149, %c0_150] : memref<8x128xf32, #tpu.memory_space<vmem>>, vector<8x128xf32>
    tpu.vector_store %arg18[%c0_149, %c0_150], %544 {strides = array<i32>} : memref<8x128xf32, #tpu.memory_space<vmem>>, vector<8x128xf32>,
    %c0_i32_151 = arith.constant 0 : i32
    %551 = arith.cmpi eq, %arg0, %c0_i32_151 : i32
    %552 = arith.extui %551 : i1 to i32
    %c0_i32_152 = arith.constant 0 : i32
    %553 = arith.cmpi ne, %552, %c0_i32_152 : i32
    scf.if %553 {
      %c0_153 = arith.constant 0 : index
      %c0_154 = arith.constant 0 : index
      %554 = vector.load %arg10[%c0_153, %c0_154] : memref<8x256xf32, #tpu.memory_space<vmem>>, vector<8x128xf32>
      tpu.vector_store %arg10[%c0_153, %c0_154], %543 {strides = array<i32>} : memref<8x256xf32, #tpu.memory_space<vmem>>, vector<8x128xf32>,
      %c0_155 = arith.constant 0 : index
      %c128 = arith.constant 128 : index
      %555 = vector.load %arg10[%c0_155, %c128] : memref<8x256xf32, #tpu.memory_space<vmem>>, vector<8x128xf32>
      tpu.vector_store %arg10[%c0_155, %c128], %544 {strides = array<i32>} : memref<8x256xf32, #tpu.memory_space<vmem>>, vector<8x128xf32>,
    } else {
    }
    return
  }
  func.func @transform_0(%arg0: i32) -> (i32, i32, i32) {
    %c0_i32 = arith.constant 0 : i32
    %c0_i32_0 = arith.constant 0 : i32
    %c0_i32_1 = arith.constant 0 : i32
    return %arg0, %c0_i32, %c0_i32_0 : i32, i32, i32
  }
  func.func @transform_1(%arg0: i32) -> (i32, i32, i32) {
    %c0_i32 = arith.constant 0 : i32
    %0 = arith.subi %c0_i32, %arg0 : i32
    %c0_i32_0 = arith.constant 0 : i32
    %c0_i32_1 = arith.constant 0 : i32
    %c0_i32_2 = arith.constant 0 : i32
    return %0, %c0_i32_0, %c0_i32_1 : i32, i32, i32
  }
  func.func @transform_2(%arg0: i32) -> (i32, i32) {
    %c0_i32 = arith.constant 0 : i32
    %c0_i32_0 = arith.constant 0 : i32
    %c0_i32_1 = arith.constant 0 : i32
    return %c0_i32, %c0_i32_0 : i32, i32
  }
  func.func @transform_3(%arg0: i32) -> (i32, i32) {
    %c0_i32 = arith.constant 0 : i32
    %c0_i32_0 = arith.constant 0 : i32
    %c0_i32_1 = arith.constant 0 : i32
    return %c0_i32, %c0_i32_0 : i32, i32
  }
  func.func @transform_4(%arg0: i32) -> (i32, i32) {
    %c0_i32 = arith.constant 0 : i32
    %c0_i32_0 = arith.constant 0 : i32
    %c0_i32_1 = arith.constant 0 : i32
    return %c0_i32, %c0_i32_0 : i32, i32
  }
  func.func @transform_5(%arg0: i32) -> (i32, i32) {
    %c0_i32 = arith.constant 0 : i32
    %c0_i32_0 = arith.constant 0 : i32
    %c0_i32_1 = arith.constant 0 : i32
    return %c0_i32, %c0_i32_0 : i32, i32
  }
  func.func @transform_6(%arg0: i32) -> (i32, i32) {
    %c0_i32 = arith.constant 0 : i32
    %c0_i32_0 = arith.constant 0 : i32
    %c0_i32_1 = arith.constant 0 : i32
    return %c0_i32, %c0_i32_0 : i32, i32
  }
  func.func @transform_7(%arg0: i32) -> (i32, i32) {
    %c0_i32 = arith.constant 0 : i32
    %c0_i32_0 = arith.constant 0 : i32
    %c0_i32_1 = arith.constant 0 : i32
    return %c0_i32, %c0_i32_0 : i32, i32
  }
  func.func @transform_8(%arg0: i32) -> (i32, i32) {
    %c0_i32 = arith.constant 0 : i32
    %c0_i32_0 = arith.constant 0 : i32
    %c0_i32_1 = arith.constant 0 : i32
    return %c0_i32, %c0_i32_0 : i32, i32
  }
  func.func @transform_9(%arg0: i32) -> (i32, i32) {
    %c0_i32 = arith.constant 0 : i32
    %c0_i32_0 = arith.constant 0 : i32
    %c0_i32_1 = arith.constant 0 : i32
    return %c0_i32, %c0_i32_0 : i32, i32
  }
}

</mosaic_0001>

<llo_original>
// kernel: tpu_custom_call.1
$region0: #{tpu_custom_call.1}
  #allocation0 [shape = 'u32[]', space=smem, size = 0x4, offset = 0x4, fixed_abs, tag = 'smem constant byte address 0x4 - core index']
  #allocation1 [shape = 'u32[144,128]{1,0:T(1,128)}', space=vmem, size = 0x12000, scoped, tag = 'internal scratch']
  #allocation2 [shape = 'f32[8,8,512]{2,1,0:T(8,128)}', space=vmem, size = 0x20000, scoped, tag = 'scratch operand']
  #allocation3 [shape = 'f32[8,8,512]{2,1,0:T(8,128)}', space=vmem, size = 0x20000, scoped, tag = 'scratch operand']
  #allocation4 [shape = 'f32[8,128]{1,0:T(8,128)}', space=vmem, size = 0x1000, scoped, tag = 'scratch operand']
  #allocation5 [shape = 'f32[8,128]{1,0:T(8,128)}', space=vmem, size = 0x1000, scoped, tag = 'scratch operand']
  #allocation6 [shape = 'f32[8,128]{1,0:T(8,128)}', space=vmem, size = 0x1000, scoped, tag = 'scratch operand']
  #allocation7 [shape = 'f32[8,128]{1,0:T(8,128)}', space=vmem, size = 0x1000, scoped, tag = 'scratch operand']
  #allocation8 [shape = 'f32[8,128]{1,0:T(8,128)}', space=vmem, size = 0x1000, scoped, tag = 'scratch operand']
  #allocation9 [shape = 'f32[8,128]{1,0:T(8,128)}', space=vmem, size = 0x1000, scoped, tag = 'scratch operand']
  %s0 = inlined_call_operand.hbm [shape: bf16[8,8,128], index: 0, kind: input, shape index: {}]
  %s1 = inlined_call_operand.hbm [shape: bf16[8,8,128], index: 1, kind: input, shape index: {}]
  %s2 = inlined_call_operand.hbm [shape: f32[8,128], index: 2, kind: input, shape index: {}]
  %s3 = inlined_call_operand.hbm [shape: bf16[128,512], index: 3, kind: input, shape index: {}]
  %s4 = inlined_call_operand.hbm [shape: bf16[128,512], index: 4, kind: input, shape index: {}]
  %s5 = inlined_call_operand.vmem [shape: f32[1,512], index: 5, kind: input, shape index: {}]
  %s6 = inlined_call_operand.vmem [shape: f32[1,512], index: 6, kind: input, shape index: {}]
  %s7 = inlined_call_operand.hbm [shape: bf16[128,512], index: 7, kind: input, shape index: {}]
  %s8 = inlined_call_operand.hbm [shape: bf16[128,512], index: 8, kind: input, shape index: {}]
  %s9 = inlined_call_operand.hbm [shape: f32[8,256], index: 9, kind: output, shape index: {}]
  %s10 = sld [smem:[#allocation0]]
  $region82: #{tpu_custom_call.1} parent=0
    _
  %s12 = ssub.s32 1, %s10
  %s13 = scalar_select 0, %s12, %s10
  $region1: #{tpu_custom_call.1} parent=0
    #allocation10 [shape = 'u8[16384]{0}', space=vmem, size = 0x4000, scoped, tag = 'input window, operand 0, single buffered']
    #allocation11 [shape = 's32[1]{0}', space=sflag, size = 0x4, scoped, tag = 'scoped memory for tpu_custom_call.1']
    #allocation12 [shape = 's32[1]{0}', space=sflag, size = 0x4, scoped, tag = 'scoped memory for tpu_custom_call.1']
    #allocation13 [shape = 'u8[16384]{0}', space=vmem, size = 0x4000, scoped, tag = 'input window, operand 1, single buffered']
    #allocation14 [shape = 's32[1]{0}', space=sflag, size = 0x4, scoped, tag = 'scoped memory for tpu_custom_call.1']
    #allocation15 [shape = 'u8[4096]{0}', space=vmem, size = 0x1000, scoped, tag = 'input window, operand 2, single buffered']
    #allocation16 [shape = 'u8[131072]{0}', space=vmem, size = 0x20000, scoped, tag = 'input window, operand 3, single buffered']
    #allocation17 [shape = 's32[1]{0}', space=sflag, size = 0x4, scoped, tag = 'scoped memory for tpu_custom_call.1']
    #allocation18 [shape = 'u8[131072]{0}', space=vmem, size = 0x20000, scoped, tag = 'input window, operand 4, single buffered']
    #allocation19 [shape = 'u8[131072]{0}', space=vmem, size = 0x20000, scoped, tag = 'input window, operand 7, single buffered']
    #allocation20 [shape = 's32[1]{0}', space=sflag, size = 0x4, scoped, tag = 'scoped memory for tpu_custom_call.1']
    #allocation21 [shape = 'u8[131072]{0}', space=vmem, size = 0x20000, scoped, tag = 'input window, operand 8, single buffered']
    #allocation22 [shape = 'u8[8192]{0}', space=vmem, size = 0x2000, scoped, tag = 'output window, operand 0, single buffered']
    %14 = vsyncpa [#allocation11], 0
    %15 = vsyncpa [#allocation14], 0
    %16 = vsyncpa [#allocation17], 0
    %17 = vsyncpa [#allocation20], 0
    %18 = vsyncpa [#allocation12], 0
    // Predicated region
    $region2: #{tpu_custom_call.1} parent=1 // pred_check
      _
    $region3: #{tpu_custom_call.1} parent=1 // pred_check_branch
      %20 = sbr.rel (0) target = $region5
    $region4: #{tpu_custom_call.1} parent=1 // pred_region
      %s22 = ssub.s32 512, 512
      %23 = vsyncadd [#allocation11], %s22
      %s24 = sshll.u32 [#allocation10], 4
      %s25 = int_to_ptr.vmem [resolvable:$true] %s24
      %30 = dma.hbm_to_vmem [thread:$0]  %s0, 512, %s25, [#allocation11], 64, 64, 4
    $region5: #{tpu_custom_call.1} parent=1 // pred_fallthru
      _
    // Predicated region
    $region6: #{tpu_custom_call.1} parent=1 // pred_check
      _
    $region7: #{tpu_custom_call.1} parent=1 // pred_check_branch
      %32 = sbr.rel (0) target = $region9
    $region8: #{tpu_custom_call.1} parent=1 // pred_region
      %s33 = ssub.s32 0, 0
      %s34 = smul.u32 8, %s33
      %s36 = ssub.s32 512, 512
      %37 = vsyncadd [#allocation14], %s36
      %s38 = smul.addr %s34, 64
      %s39 = scalar_lea.hbm %s1, %s38
      %s40 = sshll.u32 [#allocation13], 4
      %s41 = int_to_ptr.vmem [resolvable:$true] %s40
      %46 = dma.hbm_to_vmem [thread:$0]  %s39, 512, %s41, [#allocation14], 64, 64, 4
    $region9: #{tpu_custom_call.1} parent=1 // pred_fallthru
      _
    // Predicated region
    $region10: #{tpu_custom_call.1} parent=1 // pred_check
      _
    $region11: #{tpu_custom_call.1} parent=1 // pred_check_branch
      %48 = sbr.rel (0) target = $region13
    $region12: #{tpu_custom_call.1} parent=1 // pred_region
      %s50 = ssub.s32 128, 128
      %51 = vsyncadd [#allocation14], %s50
      %s53 = sshll.u32 [#allocation15], 4
      %s54 = int_to_ptr.vmem [resolvable:$true] %s53
      %56 = dma.hbm_to_vmem [thread:$0]  %s2, 128, %s54, [#allocation14]
    $region13: #{tpu_custom_call.1} parent=1 // pred_fallthru
      _
    // Predicated region
    $region14: #{tpu_custom_call.1} parent=1 // pred_check
      _
    $region15: #{tpu_custom_call.1} parent=1 // pred_check_branch
      %58 = sbr.rel (0) target = $region17
    $region16: #{tpu_custom_call.1} parent=1 // pred_region
      %s60 = ssub.s32 4096, 4096
      %61 = vsyncadd [#allocation17], %s60
      %s62 = sshll.u32 [#allocation16], 4
      %s63 = int_to_ptr.vmem [resolvable:$true] %s62
      %68 = dma.hbm_to_vmem [thread:$0]  %s3, 4096, %s63, [#allocation17], 256, 256, 16
    $region17: #{tpu_custom_call.1} parent=1 // pred_fallthru
      _
    // Predicated region
    $region18: #{tpu_custom_call.1} parent=1 // pred_check
      _
    $region19: #{tpu_custom_call.1} parent=1 // pred_check_branch
      %70 = sbr.rel (0) target = $region21
    $region20: #{tpu_custom_call.1} parent=1 // pred_region
      %s72 = ssub.s32 4096, 4096
      %73 = vsyncadd [#allocation17], %s72
      %s74 = sshll.u32 [#allocation18], 4
      %s75 = int_to_ptr.vmem [resolvable:$true] %s74
      %80 = dma.hbm_to_vmem [thread:$0]  %s4, 4096, %s75, [#allocation17], 256, 256, 16
    $region21: #{tpu_custom_call.1} parent=1 // pred_fallthru
      _
    // Predicated region
    $region22: #{tpu_custom_call.1} parent=1 // pred_check
      _
    $region23: #{tpu_custom_call.1} parent=1 // pred_check_branch
      %82 = sbr.rel (0) target = $region25
    $region24: #{tpu_custom_call.1} parent=1 // pred_region
      _
    $region25: #{tpu_custom_call.1} parent=1 // pred_fallthru
      _
    // Predicated region
    $region26: #{tpu_custom_call.1} parent=1 // pred_check
      _
    $region27: #{tpu_custom_call.1} parent=1 // pred_check_branch
      %84 = sbr.rel (0) target = $region29
    $region28: #{tpu_custom_call.1} parent=1 // pred_region
      _
    $region29: #{tpu_custom_call.1} parent=1 // pred_fallthru
      _
    // Predicated region
    $region30: #{tpu_custom_call.1} parent=1 // pred_check
      _
    $region31: #{tpu_custom_call.1} parent=1 // pred_check_branch
      %86 = sbr.rel (0) target = $region33
    $region32: #{tpu_custom_call.1} parent=1 // pred_region
      %s88 = ssub.s32 4096, 4096
      %89 = vsyncadd [#allocation20], %s88
      %s90 = sshll.u32 [#allocation19], 4
      %s91 = int_to_ptr.vmem [resolvable:$true] %s90
      %96 = dma.hbm_to_vmem [thread:$0]  %s7, 4096, %s91, [#allocation20], 256, 256, 16
    $region33: #{tpu_custom_call.1} parent=1 // pred_fallthru
      _
    // Predicated region
    $region34: #{tpu_custom_call.1} parent=1 // pred_check
      _
    $region35: #{tpu_custom_call.1} parent=1 // pred_check_branch
      %98 = sbr.rel (0) target = $region37
    $region36: #{tpu_custom_call.1} parent=1 // pred_region
      %s100 = ssub.s32 4096, 4096
      %101 = vsyncadd [#allocation20], %s100
      %s102 = sshll.u32 [#allocation21], 4
      %s103 = int_to_ptr.vmem [resolvable:$true] %s102
      %108 = dma.hbm_to_vmem [thread:$0]  %s8, 4096, %s103, [#allocation20], 256, 256, 16
    $region37: #{tpu_custom_call.1} parent=1 // pred_fallthru
      _
    // Predicated region
    $region38: #{tpu_custom_call.1} parent=1 // pred_check
      _
    $region39: #{tpu_custom_call.1} parent=1 // pred_check_branch
      %110 = sbr.rel (0) target = $region41
    $region40: #{tpu_custom_call.1} parent=1 // pred_region
      %111 = dma.done [#allocation11], 512
    $region41: #{tpu_custom_call.1} parent=1 // pred_fallthru
      _
    // Predicated region
    $region42: #{tpu_custom_call.1} parent=1 // pred_check
      _
    $region43: #{tpu_custom_call.1} parent=1 // pred_check_branch
      %113 = sbr.rel (0) target = $region45
    $region44: #{tpu_custom_call.1} parent=1 // pred_region
      %114 = dma.done [#allocation14], 512
    $region45: #{tpu_custom_call.1} parent=1 // pred_fallthru
      _
    // Predicated region
    $region46: #{tpu_custom_call.1} parent=1 // pred_check
      _
    $region47: #{tpu_custom_call.1} parent=1 // pred_check_branch
      %116 = sbr.rel (0) target = $region49
    $region48: #{tpu_custom_call.1} parent=1 // pred_region
      %117 = dma.done [#allocation14], 128
    $region49: #{tpu_custom_call.1} parent=1 // pred_fallthru
      _
    // Predicated region
    $region50: #{tpu_custom_call.1} parent=1 // pred_check
      _
    $region51: #{tpu_custom_call.1} parent=1 // pred_check_branch
      %119 = sbr.rel (0) target = $region53
    $region52: #{tpu_custom_call.1} parent=1 // pred_region
      %120 = dma.done [#allocation17], 4096
    $region53: #{tpu_custom_call.1} parent=1 // pred_fallthru
      _
    // Predicated region
    $region54: #{tpu_custom_call.1} parent=1 // pred_check
      _
    $region55: #{tpu_custom_call.1} parent=1 // pred_check_branch
      %122 = sbr.rel (0) target = $region57
    $region56: #{tpu_custom_call.1} parent=1 // pred_region
      %123 = dma.done [#allocation17], 4096
    $region57: #{tpu_custom_call.1} parent=1 // pred_fallthru
      _
    // Predicated region
    $region58: #{tpu_custom_call.1} parent=1 // pred_check
      _
    $region59: #{tpu_custom_call.1} parent=1 // pred_check_branch
      %125 = sbr.rel (0) target = $region61
    $region60: #{tpu_custom_call.1} parent=1 // pred_region
      %126 = dma.done [#allocation20], 4096
    $region61: #{tpu_custom_call.1} parent=1 // pred_fallthru
      _
    // Predicated region
    $region62: #{tpu_custom_call.1} parent=1 // pred_check
      _
    $region63: #{tpu_custom_call.1} parent=1 // pred_check_branch
      %128 = sbr.rel (0) target = $region65
    $region64: #{tpu_custom_call.1} parent=1 // pred_region
      %129 = dma.done [#allocation20], 4096
    $region65: #{tpu_custom_call.1} parent=1 // pred_fallthru
      _
    %s130 = ssub.s32 0, 0
    %s131 = smul.u32 8, %s130
    %p133 = scmp.eq.s32.totalorder 0, 0
    // Predicated region
    $region66: #{tpu_custom_call.1} parent=1 // pred_check
      %p134 = pneg %p133
    $region67: #{tpu_custom_call.1} parent=1 // pred_check_branch
      %136 = sbr.rel (%p134) target = $region69
    $region68: #{tpu_custom_call.1} parent=1 // pred_region
      %137 = vst [vmem:[#allocation4] sm:$0xff] 0.0
      %138 = vst [vmem:[#allocation5] sm:$0xff] 0.0
      %139 = vst [vmem:[#allocation7] sm:$0xff] 0.0
      %140 = vst [vmem:[#allocation8] sm:$0xff] 0.0
      %141 = vst [vmem:[#allocation6] sm:$0xff] -inf
      %142 = vst [vmem:[#allocation9] sm:$0xff] -inf
    $region69: #{tpu_custom_call.1} parent=1 // pred_fallthru
      _
    %v143 = vld [vmem:[#allocation10] sm:$0xf]
    %v144 = vld [vmem:[#allocation10 + $0x4] sm:$0xf]
    %v145 = vld [vmem:[#allocation10 + $0x8] sm:$0xf]
    %v146 = vld [vmem:[#allocation10 + $0xc] sm:$0xf]
    %v147 = vld [vmem:[#allocation10 + $0x10] sm:$0xf]
    %v148 = vld [vmem:[#allocation10 + $0x14] sm:$0xf]
    %v149 = vld [vmem:[#allocation10 + $0x18] sm:$0xf]
    %v150 = vld [vmem:[#allocation10 + $0x1c] sm:$0xf]
    %v151 = vld [vmem:[#allocation13] sm:$0xf]
    %v152 = vld [vmem:[#allocation13 + $0x4] sm:$0xf]
    %v153 = vld [vmem:[#allocation13 + $0x8] sm:$0xf]
    %v154 = vld [vmem:[#allocation13 + $0xc] sm:$0xf]
    %v155 = vld [vmem:[#allocation13 + $0x10] sm:$0xf]
    %v156 = vld [vmem:[#allocation13 + $0x14] sm:$0xf]
    %v157 = vld [vmem:[#allocation13 + $0x18] sm:$0xf]
    %v158 = vld [vmem:[#allocation13 + $0x1c] sm:$0xf]
    %v159 = vld [vmem:[#allocation16] sm:$0xff]
    %v160 = vld [vmem:[#allocation16 + $0x8] sm:$0xff]
    %v161 = vld [vmem:[#allocation16 + $0x10] sm:$0xff]
    %v162 = vld [vmem:[#allocation16 + $0x18] sm:$0xff]
    %v163 = vld [vmem:[#allocation16 + $0x20] sm:$0xff]
    %v164 = vld [vmem:[#allocation16 + $0x28] sm:$0xff]
    %v165 = vld [vmem:[#allocation16 + $0x30] sm:$0xff]
    %v166 = vld [vmem:[#allocation16 + $0x38] sm:$0xff]
    %v167 = vld [vmem:[#allocation16 + $0x40] sm:$0xff]
    %v168 = vld [vmem:[#allocation16 + $0x48] sm:$0xff]
    %v169 = vld [vmem:[#allocation16 + $0x50] sm:$0xff]
    %v170 = vld [vmem:[#allocation16 + $0x58] sm:$0xff]
    %v171 = vld [vmem:[#allocation16 + $0x60] sm:$0xff]
    %v172 = vld [vmem:[#allocation16 + $0x68] sm:$0xff]
    %v173 = vld [vmem:[#allocation16 + $0x70] sm:$0xff]
    %v174 = vld [vmem:[#allocation16 + $0x78] sm:$0xff]
    %v175 = vld [vmem:[#allocation16 + $0x80] sm:$0xff]
    %v176 = vld [vmem:[#allocation16 + $0x88] sm:$0xff]
    %v177 = vld [vmem:[#allocation16 + $0x90] sm:$0xff]
    %v178 = vld [vmem:[#allocation16 + $0x98] sm:$0xff]
    %v179 = vld [vmem:[#allocation16 + $0xa0] sm:$0xff]
    %v180 = vld [vmem:[#allocation16 + $0xa8] sm:$0xff]
    %v181 = vld [vmem:[#allocation16 + $0xb0] sm:$0xff]
    %v182 = vld [vmem:[#allocation16 + $0xb8] sm:$0xff]
    %v183 = vld [vmem:[#allocation16 + $0xc0] sm:$0xff]
    %v184 = vld [vmem:[#allocation16 + $0xc8] sm:$0xff]
    %v185 = vld [vmem:[#allocation16 + $0xd0] sm:$0xff]
    %v186 = vld [vmem:[#allocation16 + $0xd8] sm:$0xff]
    %v187 = vld [vmem:[#allocation16 + $0xe0] sm:$0xff]
    %v188 = vld [vmem:[#allocation16 + $0xe8] sm:$0xff]
    %v189 = vld [vmem:[#allocation16 + $0xf0] sm:$0xff]
    %v190 = vld [vmem:[#allocation16 + $0xf8] sm:$0xff]
    %v191 = vld [vmem:[%s5] sm:$0xf]
    %v193 = vlaneseq
    %v194 = vshrl.u32 %v193, 7
    %v195 = vsub.s32 0, %v194
    %v196 = vrot.slane %v191, %v195
    %v197 = vlaneseq
    %v198 = vshrl.u32 %v197, 7
    %v199 = vsub.s32 1, %v198
    %v200 = vrot.slane %v191, %v199
    %v201 = vlaneseq
    %v202 = vshrl.u32 %v201, 7
    %v203 = vsub.s32 2, %v202
    %v204 = vrot.slane %v191, %v203
    %v205 = vlaneseq
    %v206 = vshrl.u32 %v205, 7
    %v207 = vsub.s32 3, %v206
    %v208 = vrot.slane %v191, %v207
    %v221 = vunpack.c.l.b16 %v143
    %v222 = vunpack.c.l.b16 %v144
    %v223 = vunpack.c.l.b16 %v145
    %v224 = vunpack.c.l.b16 %v146
    %v225 = vunpack.c.l.b16 %v147
    %v226 = vunpack.c.l.b16 %v148
    %v227 = vunpack.c.l.b16 %v149
    %v228 = vunpack.c.l.b16 %v150
    %v229 = vpack.c.b16 %v222, %v221
    %v230 = vpack.c.b16 %v224, %v223
    %v231 = vpack.c.b16 %v226, %v225
    %v232 = vpack.c.b16 %v228, %v227
    %v269 = vunpack.c.l.b16 %v159
    %v270 = vunpack.c.h.b16 %v159
    %v271 = vunpack.c.l.b16 %v160
    %v272 = vunpack.c.h.b16 %v160
    %v273 = vunpack.c.l.b16 %v161
    %v274 = vunpack.c.h.b16 %v161
    %v275 = vunpack.c.l.b16 %v162
    %v276 = vunpack.c.h.b16 %v162
    %v277 = vunpack.c.l.b16 %v163
    %v278 = vunpack.c.h.b16 %v163
    %v279 = vunpack.c.l.b16 %v164
    %v280 = vunpack.c.h.b16 %v164
    %v281 = vunpack.c.l.b16 %v165
    %v282 = vunpack.c.h.b16 %v165
    %v283 = vunpack.c.l.b16 %v166
    %v284 = vunpack.c.h.b16 %v166
    %v285 = vunpack.c.l.b16 %v167
    %v286 = vunpack.c.h.b16 %v167
    %v287 = vunpack.c.l.b16 %v168
    %v288 = vunpack.c.h.b16 %v168
    %v289 = vunpack.c.l.b16 %v169
    %v290 = vunpack.c.h.b16 %v169
    %v291 = vunpack.c.l.b16 %v170
    %v292 = vunpack.c.h.b16 %v170
    %v293 = vunpack.c.l.b16 %v171
    %v294 = vunpack.c.h.b16 %v171
    %v295 = vunpack.c.l.b16 %v172
    %v296 = vunpack.c.h.b16 %v172
    %v297 = vunpack.c.l.b16 %v173
    %v298 = vunpack.c.h.b16 %v173
    %v299 = vunpack.c.l.b16 %v174
    %v300 = vunpack.c.h.b16 %v174
    %v301 = vunpack.c.l.b16 %v175
    %v302 = vunpack.c.h.b16 %v175
    %v303 = vunpack.c.l.b16 %v176
    %v304 = vunpack.c.h.b16 %v176
    %v305 = vunpack.c.l.b16 %v177
    %v306 = vunpack.c.h.b16 %v177
    %v307 = vunpack.c.l.b16 %v178
    %v308 = vunpack.c.h.b16 %v178
    %v309 = vunpack.c.l.b16 %v179
    %v310 = vunpack.c.h.b16 %v179
    %v311 = vunpack.c.l.b16 %v180
    %v312 = vunpack.c.h.b16 %v180
    %v313 = vunpack.c.l.b16 %v181
    %v314 = vunpack.c.h.b16 %v181
    %v315 = vunpack.c.l.b16 %v182
    %v316 = vunpack.c.h.b16 %v182
    %v317 = vunpack.c.l.b16 %v183
    %v318 = vunpack.c.h.b16 %v183
    %v319 = vunpack.c.l.b16 %v184
    %v320 = vunpack.c.h.b16 %v184
    %v321 = vunpack.c.l.b16 %v185
    %v322 = vunpack.c.h.b16 %v185
    %v323 = vunpack.c.l.b16 %v186
    %v324 = vunpack.c.h.b16 %v186
    %v325 = vunpack.c.l.b16 %v187
    %v326 = vunpack.c.h.b16 %v187
    %v327 = vunpack.c.l.b16 %v188
    %v328 = vunpack.c.h.b16 %v188
    %v329 = vunpack.c.l.b16 %v189
    %v330 = vunpack.c.h.b16 %v189
    %v331 = vunpack.c.l.b16 %v190
    %v332 = vunpack.c.h.b16 %v190
    %v333 = vpack.c.b16 %v273, %v269
    %v334 = vpack.c.b16 %v274, %v270
    %v335 = vpack.c.b16 %v275, %v271
    %v336 = vpack.c.b16 %v276, %v272
    %v337 = vpack.c.b16 %v281, %v277
    %v338 = vpack.c.b16 %v282, %v278
    %v339 = vpack.c.b16 %v283, %v279
    %v340 = vpack.c.b16 %v284, %v280
    %v341 = vpack.c.b16 %v289, %v285
    %v342 = vpack.c.b16 %v290, %v286
    %v343 = vpack.c.b16 %v291, %v287
    %v344 = vpack.c.b16 %v292, %v288
    %v345 = vpack.c.b16 %v297, %v293
    %v346 = vpack.c.b16 %v298, %v294
    %v347 = vpack.c.b16 %v299, %v295
    %v348 = vpack.c.b16 %v300, %v296
    %v349 = vpack.c.b16 %v305, %v301
    %v350 = vpack.c.b16 %v306, %v302
    %v351 = vpack.c.b16 %v307, %v303
    %v352 = vpack.c.b16 %v308, %v304
    %v353 = vpack.c.b16 %v313, %v309
    %v354 = vpack.c.b16 %v314, %v310
    %v355 = vpack.c.b16 %v315, %v311
    %v356 = vpack.c.b16 %v316, %v312
    %v357 = vpack.c.b16 %v321, %v317
    %v358 = vpack.c.b16 %v322, %v318
    %v359 = vpack.c.b16 %v323, %v319
    %v360 = vpack.c.b16 %v324, %v320
    %v361 = vpack.c.b16 %v329, %v325
    %v362 = vpack.c.b16 %v330, %v326
    %v363 = vpack.c.b16 %v331, %v327
    %v364 = vpack.c.b16 %v332, %v328
    %397 = vmatprep.subr.bf16.mxu0 %v334
    %398 = vmatpush1.bf16.msra.mxu0 %v333
    %399 = vmatprep.subr.bf16.mxu0 %v338
    %400 = vmatpush1.bf16.msra.mxu0 %v337
    %401 = vmatprep.subr.bf16.mxu0 %v342
    %402 = vmatpush1.bf16.msra.mxu0 %v341
    %403 = vmatprep.subr.bf16.mxu0 %v346
    %404 = vmatpush1.bf16.msra.mxu0 %v345
    %405 = vmatprep.subr.bf16.mxu0 %v350
    %406 = vmatpush1.bf16.msra.mxu0 %v349
    %407 = vmatprep.subr.bf16.mxu0 %v354
    %408 = vmatpush1.bf16.msra.mxu0 %v353
    %409 = vmatprep.subr.bf16.mxu0 %v358
    %410 = vmatpush1.bf16.msra.mxu0 %v357
    %411 = vmatprep.subr.bf16.mxu0 %v362
    %412 = vmatpush1.bf16.msra.mxu0 %v361
    %413 = vmatprep.subr.bf16.mxu0 0
    %414 = vmatpush1.bf16.msra.mxu0 0
    %415 = vmatprep.subr.bf16.mxu0 0
    %416 = vmatpush1.bf16.msra.mxu0 0
    %417 = vmatprep.subr.bf16.mxu0 0
    %418 = vmatpush1.bf16.msra.mxu0 0
    %419 = vmatprep.subr.bf16.mxu0 0
    %420 = vmatpush1.bf16.msra.mxu0 0
    %421 = vmatprep.subr.bf16.mxu0 0
    %422 = vmatpush1.bf16.msra.mxu0 0
    %423 = vmatprep.subr.bf16.mxu0 0
    %424 = vmatpush1.bf16.msra.mxu0 0
    %425 = vmatprep.subr.bf16.mxu0 0
    %426 = vmatpush1.bf16.msra.mxu0 0
    %427 = vmatprep.subr.bf16.mxu0 0
    %428 = vmatpush1.bf16.msra.mxu0 0
    %429 = vmatprep.mubr.bf16.mxu0 0
    %430 = vmatmul.mubr.bf16.gmra.mrb[0].mxu0 %v229
    %v431 = vpop.f32.mrb[0].mxu0
    %v432 = vadd.f32 %v196, %v431
    %v433 = vpop.f32.mrb[0].mxu0
    %v434 = vadd.f32 %v200, %v433
    %v435 = vpop.f32.mrb[0].mxu0
    %v436 = vadd.f32 %v196, %v435
    %v437 = vpop.f32.mrb[0].mxu0
    %v438 = vadd.f32 %v200, %v437
    %439 = vmatprep.mubr.bf16.mxu0 0
    %440 = vmatmul.mubr.bf16.gmra.mrb[0].mxu0 %v230
    %v441 = vpop.f32.mrb[0].mxu0
    %v442 = vadd.f32 %v196, %v441
    %v443 = vpop.f32.mrb[0].mxu0
    %v444 = vadd.f32 %v200, %v443
    %v445 = vpop.f32.mrb[0].mxu0
    %v446 = vadd.f32 %v196, %v445
    %v447 = vpop.f32.mrb[0].mxu0
    %v448 = vadd.f32 %v200, %v447
    %449 = vmatprep.mubr.bf16.mxu0 0
    %450 = vmatmul.mubr.bf16.gmra.mrb[0].mxu0 %v231
    %v451 = vpop.f32.mrb[0].mxu0
    %v452 = vadd.f32 %v196, %v451
    %v453 = vpop.f32.mrb[0].mxu0
    %v454 = vadd.f32 %v200, %v453
    %v455 = vpop.f32.mrb[0].mxu0
    %v456 = vadd.f32 %v196, %v455
    %v457 = vpop.f32.mrb[0].mxu0
    %v458 = vadd.f32 %v200, %v457
    %459 = vmatprep.mubr.bf16.mxu0 0
    %460 = vmatmul.mubr.bf16.gmra.mrb[0].mxu0 %v232
    %v461 = vpop.f32.mrb[0].mxu0
    %v462 = vadd.f32 %v196, %v461
    %v463 = vpop.f32.mrb[0].mxu0
    %v464 = vadd.f32 %v200, %v463
    %v465 = vpop.f32.mrb[0].mxu0
    %v466 = vadd.f32 %v196, %v465
    %v467 = vpop.f32.mrb[0].mxu0
    %v468 = vadd.f32 %v200, %v467
    %469 = vdwg.mxu0
    %470 = vmatprep.subr.bf16.mxu0 %v336
    %471 = vmatpush1.bf16.msra.mxu0 %v335
    %472 = vmatprep.subr.bf16.mxu0 %v340
    %473 = vmatpush1.bf16.msra.mxu0 %v339
    %474 = vmatprep.subr.bf16.mxu0 %v344
    %475 = vmatpush1.bf16.msra.mxu0 %v343
    %476 = vmatprep.subr.bf16.mxu0 %v348
    %477 = vmatpush1.bf16.msra.mxu0 %v347
    %478 = vmatprep.subr.bf16.mxu0 %v352
    %479 = vmatpush1.bf16.msra.mxu0 %v351
    %480 = vmatprep.subr.bf16.mxu0 %v356
    %481 = vmatpush1.bf16.msra.mxu0 %v355
    %482 = vmatprep.subr.bf16.mxu0 %v360
    %483 = vmatpush1.bf16.msra.mxu0 %v359
    %484 = vmatprep.subr.bf16.mxu0 %v364
    %485 = vmatpush1.bf16.msra.mxu0 %v363
    %486 = vmatprep.subr.bf16.mxu0 0
    %487 = vmatpush1.bf16.msra.mxu0 0
    %488 = vmatprep.subr.bf16.mxu0 0
    %489 = vmatpush1.bf16.msra.mxu0 0
    %490 = vmatprep.subr.bf16.mxu0 0
    %491 = vmatpush1.bf16.msra.mxu0 0
    %492 = vmatprep.subr.bf16.mxu0 0
    %493 = vmatpush1.bf16.msra.mxu0 0
    %494 = vmatprep.subr.bf16.mxu0 0
    %495 = vmatpush1.bf16.msra.mxu0 0
    %496 = vmatprep.subr.bf16.mxu0 0
    %497 = vmatpush1.bf16.msra.mxu0 0
    %498 = vmatprep.subr.bf16.mxu0 0
    %499 = vmatpush1.bf16.msra.mxu0 0
    %500 = vmatprep.subr.bf16.mxu0 0
    %501 = vmatpush1.bf16.msra.mxu0 0
    %502 = vmatprep.mubr.bf16.mxu0 0
    %503 = vmatmul.mubr.bf16.gmra.mrb[0].mxu0 %v229
    %v504 = vpop.f32.mrb[0].mxu0
    %v505 = vadd.f32 %v204, %v504
    %v506 = vpop.f32.mrb[0].mxu0
    %v507 = vadd.f32 %v208, %v506
    %v508 = vpop.f32.mrb[0].mxu0
    %v509 = vadd.f32 %v204, %v508
    %v510 = vpop.f32.mrb[0].mxu0
    %v511 = vadd.f32 %v208, %v510
    %512 = vmatprep.mubr.bf16.mxu0 0
    %513 = vmatmul.mubr.bf16.gmra.mrb[0].mxu0 %v230
    %v514 = vpop.f32.mrb[0].mxu0
    %v515 = vadd.f32 %v204, %v514
    %v516 = vpop.f32.mrb[0].mxu0
    %v517 = vadd.f32 %v208, %v516
    %v518 = vpop.f32.mrb[0].mxu0
    %v519 = vadd.f32 %v204, %v518
    %v520 = vpop.f32.mrb[0].mxu0
    %v521 = vadd.f32 %v208, %v520
    %522 = vmatprep.mubr.bf16.mxu0 0
    %523 = vmatmul.mubr.bf16.gmra.mrb[0].mxu0 %v231
    %v524 = vpop.f32.mrb[0].mxu0
    %v525 = vadd.f32 %v204, %v524
    %v526 = vpop.f32.mrb[0].mxu0
    %v527 = vadd.f32 %v208, %v526
    %v528 = vpop.f32.mrb[0].mxu0
    %v529 = vadd.f32 %v204, %v528
    %v530 = vpop.f32.mrb[0].mxu0
    %v531 = vadd.f32 %v208, %v530
    %532 = vmatprep.mubr.bf16.mxu0 0
    %533 = vmatmul.mubr.bf16.gmra.mrb[0].mxu0 %v232
    %v534 = vpop.f32.mrb[0].mxu0
    %v535 = vadd.f32 %v204, %v534
    %v536 = vpop.f32.mrb[0].mxu0
    %v537 = vadd.f32 %v208, %v536
    %v538 = vpop.f32.mrb[0].mxu0
    %v539 = vadd.f32 %v204, %v538
    %v540 = vpop.f32.mrb[0].mxu0
    %v541 = vadd.f32 %v208, %v540
    %542 = vdwg.mxu0
    %v543 = vld [vmem:[#allocation18] sm:$0xff]
    %v544 = vld [vmem:[#allocation18 + $0x8] sm:$0xff]
    %v545 = vld [vmem:[#allocation18 + $0x10] sm:$0xff]
    %v546 = vld [vmem:[#allocation18 + $0x18] sm:$0xff]
    %v547 = vld [vmem:[#allocation18 + $0x20] sm:$0xff]
    %v548 = vld [vmem:[#allocation18 + $0x28] sm:$0xff]
    %v549 = vld [vmem:[#allocation18 + $0x30] sm:$0xff]
    %v550 = vld [vmem:[#allocation18 + $0x38] sm:$0xff]
    %v551 = vld [vmem:[#allocation18 + $0x40] sm:$0xff]
    %v552 = vld [vmem:[#allocation18 + $0x48] sm:$0xff]
    %v553 = vld [vmem:[#allocation18 + $0x50] sm:$0xff]
    %v554 = vld [vmem:[#allocation18 + $0x58] sm:$0xff]
    %v555 = vld [vmem:[#allocation18 + $0x60] sm:$0xff]
    %v556 = vld [vmem:[#allocation18 + $0x68] sm:$0xff]
    %v557 = vld [vmem:[#allocation18 + $0x70] sm:$0xff]
    %v558 = vld [vmem:[#allocation18 + $0x78] sm:$0xff]
    %v559 = vld [vmem:[#allocation18 + $0x80] sm:$0xff]
    %v560 = vld [vmem:[#allocation18 + $0x88] sm:$0xff]
    %v561 = vld [vmem:[#allocation18 + $0x90] sm:$0xff]
    %v562 = vld [vmem:[#allocation18 + $0x98] sm:$0xff]
    %v563 = vld [vmem:[#allocation18 + $0xa0] sm:$0xff]
    %v564 = vld [vmem:[#allocation18 + $0xa8] sm:$0xff]
    %v565 = vld [vmem:[#allocation18 + $0xb0] sm:$0xff]
    %v566 = vld [vmem:[#allocation18 + $0xb8] sm:$0xff]
    %v567 = vld [vmem:[#allocation18 + $0xc0] sm:$0xff]
    %v568 = vld [vmem:[#allocation18 + $0xc8] sm:$0xff]
    %v569 = vld [vmem:[#allocation18 + $0xd0] sm:$0xff]
    %v570 = vld [vmem:[#allocation18 + $0xd8] sm:$0xff]
    %v571 = vld [vmem:[#allocation18 + $0xe0] sm:$0xff]
    %v572 = vld [vmem:[#allocation18 + $0xe8] sm:$0xff]
    %v573 = vld [vmem:[#allocation18 + $0xf0] sm:$0xff]
    %v574 = vld [vmem:[#allocation18 + $0xf8] sm:$0xff]
    %v575 = vld [vmem:[%s6] sm:$0xf]
    %v577 = vlaneseq
    %v578 = vshrl.u32 %v577, 7
    %v579 = vsub.s32 0, %v578
    %v580 = vrot.slane %v575, %v579
    %v581 = vlaneseq
    %v582 = vshrl.u32 %v581, 7
    %v583 = vsub.s32 1, %v582
    %v584 = vrot.slane %v575, %v583
    %v585 = vlaneseq
    %v586 = vshrl.u32 %v585, 7
    %v587 = vsub.s32 2, %v586
    %v588 = vrot.slane %v575, %v587
    %v589 = vlaneseq
    %v590 = vshrl.u32 %v589, 7
    %v591 = vsub.s32 3, %v590
    %v592 = vrot.slane %v575, %v591
    %v605 = vunpack.c.l.b16 %v151
    %v606 = vunpack.c.l.b16 %v152
    %v607 = vunpack.c.l.b16 %v153
    %v608 = vunpack.c.l.b16 %v154
    %v609 = vunpack.c.l.b16 %v155
    %v610 = vunpack.c.l.b16 %v156
    %v611 = vunpack.c.l.b16 %v157
    %v612 = vunpack.c.l.b16 %v158
    %v613 = vpack.c.b16 %v606, %v605
    %v614 = vpack.c.b16 %v608, %v607
    %v615 = vpack.c.b16 %v610, %v609
    %v616 = vpack.c.b16 %v612, %v611
    %v653 = vunpack.c.l.b16 %v543
    %v654 = vunpack.c.h.b16 %v543
    %v655 = vunpack.c.l.b16 %v544
    %v656 = vunpack.c.h.b16 %v544
    %v657 = vunpack.c.l.b16 %v545
    %v658 = vunpack.c.h.b16 %v545
    %v659 = vunpack.c.l.b16 %v546
    %v660 = vunpack.c.h.b16 %v546
    %v661 = vunpack.c.l.b16 %v547
    %v662 = vunpack.c.h.b16 %v547
    %v663 = vunpack.c.l.b16 %v548
    %v664 = vunpack.c.h.b16 %v548
    %v665 = vunpack.c.l.b16 %v549
    %v666 = vunpack.c.h.b16 %v549
    %v667 = vunpack.c.l.b16 %v550
    %v668 = vunpack.c.h.b16 %v550
    %v669 = vunpack.c.l.b16 %v551
    %v670 = vunpack.c.h.b16 %v551
    %v671 = vunpack.c.l.b16 %v552
    %v672 = vunpack.c.h.b16 %v552
    %v673 = vunpack.c.l.b16 %v553
    %v674 = vunpack.c.h.b16 %v553
    %v675 = vunpack.c.l.b16 %v554
    %v676 = vunpack.c.h.b16 %v554
    %v677 = vunpack.c.l.b16 %v555
    %v678 = vunpack.c.h.b16 %v555
    %v679 = vunpack.c.l.b16 %v556
    %v680 = vunpack.c.h.b16 %v556
    %v681 = vunpack.c.l.b16 %v557
    %v682 = vunpack.c.h.b16 %v557
    %v683 = vunpack.c.l.b16 %v558
    %v684 = vunpack.c.h.b16 %v558
    %v685 = vunpack.c.l.b16 %v559
    %v686 = vunpack.c.h.b16 %v559
    %v687 = vunpack.c.l.b16 %v560
    %v688 = vunpack.c.h.b16 %v560
    %v689 = vunpack.c.l.b16 %v561
    %v690 = vunpack.c.h.b16 %v561
    %v691 = vunpack.c.l.b16 %v562
    %v692 = vunpack.c.h.b16 %v562
    %v693 = vunpack.c.l.b16 %v563
    %v694 = vunpack.c.h.b16 %v563
    %v695 = vunpack.c.l.b16 %v564
    %v696 = vunpack.c.h.b16 %v564
    %v697 = vunpack.c.l.b16 %v565
    %v698 = vunpack.c.h.b16 %v565
    %v699 = vunpack.c.l.b16 %v566
    %v700 = vunpack.c.h.b16 %v566
    %v701 = vunpack.c.l.b16 %v567
    %v702 = vunpack.c.h.b16 %v567
    %v703 = vunpack.c.l.b16 %v568
    %v704 = vunpack.c.h.b16 %v568
    %v705 = vunpack.c.l.b16 %v569
    %v706 = vunpack.c.h.b16 %v569
    %v707 = vunpack.c.l.b16 %v570
    %v708 = vunpack.c.h.b16 %v570
    %v709 = vunpack.c.l.b16 %v571
    %v710 = vunpack.c.h.b16 %v571
    %v711 = vunpack.c.l.b16 %v572
    %v712 = vunpack.c.h.b16 %v572
    %v713 = vunpack.c.l.b16 %v573
    %v714 = vunpack.c.h.b16 %v573
    %v715 = vunpack.c.l.b16 %v574
    %v716 = vunpack.c.h.b16 %v574
    %v717 = vpack.c.b16 %v657, %v653
    %v718 = vpack.c.b16 %v658, %v654
    %v719 = vpack.c.b16 %v659, %v655
    %v720 = vpack.c.b16 %v660, %v656
    %v721 = vpack.c.b16 %v665, %v661
    %v722 = vpack.c.b16 %v666, %v662
    %v723 = vpack.c.b16 %v667, %v663
    %v724 = vpack.c.b16 %v668, %v664
    %v725 = vpack.c.b16 %v673, %v669
    %v726 = vpack.c.b16 %v674, %v670
    %v727 = vpack.c.b16 %v675, %v671
    %v728 = vpack.c.b16 %v676, %v672
    %v729 = vpack.c.b16 %v681, %v677
    %v730 = vpack.c.b16 %v682, %v678
    %v731 = vpack.c.b16 %v683, %v679
    %v732 = vpack.c.b16 %v684, %v680
    %v733 = vpack.c.b16 %v689, %v685
    %v734 = vpack.c.b16 %v690, %v686
    %v735 = vpack.c.b16 %v691, %v687
    %v736 = vpack.c.b16 %v692, %v688
    %v737 = vpack.c.b16 %v697, %v693
    %v738 = vpack.c.b16 %v698, %v694
    %v739 = vpack.c.b16 %v699, %v695
    %v740 = vpack.c.b16 %v700, %v696
    %v741 = vpack.c.b16 %v705, %v701
    %v742 = vpack.c.b16 %v706, %v702
    %v743 = vpack.c.b16 %v707, %v703
    %v744 = vpack.c.b16 %v708, %v704
    %v745 = vpack.c.b16 %v713, %v709
    %v746 = vpack.c.b16 %v714, %v710
    %v747 = vpack.c.b16 %v715, %v711
    %v748 = vpack.c.b16 %v716, %v712
    %781 = vmatprep.subr.bf16.mxu0 %v718
    %782 = vmatpush1.bf16.msra.mxu0 %v717
    %783 = vmatprep.subr.bf16.mxu0 %v722
    %784 = vmatpush1.bf16.msra.mxu0 %v721
    %785 = vmatprep.subr.bf16.mxu0 %v726
    %786 = vmatpush1.bf16.msra.mxu0 %v725
    %787 = vmatprep.subr.bf16.mxu0 %v730
    %788 = vmatpush1.bf16.msra.mxu0 %v729
    %789 = vmatprep.subr.bf16.mxu0 %v734
    %790 = vmatpush1.bf16.msra.mxu0 %v733
    %791 = vmatprep.subr.bf16.mxu0 %v738
    %792 = vmatpush1.bf16.msra.mxu0 %v737
    %793 = vmatprep.subr.bf16.mxu0 %v742
    %794 = vmatpush1.bf16.msra.mxu0 %v741
    %795 = vmatprep.subr.bf16.mxu0 %v746
    %796 = vmatpush1.bf16.msra.mxu0 %v745
    %797 = vmatprep.subr.bf16.mxu0 0
    %798 = vmatpush1.bf16.msra.mxu0 0
    %799 = vmatprep.subr.bf16.mxu0 0
    %800 = vmatpush1.bf16.msra.mxu0 0
    %801 = vmatprep.subr.bf16.mxu0 0
    %802 = vmatpush1.bf16.msra.mxu0 0
    %803 = vmatprep.subr.bf16.mxu0 0
    %804 = vmatpush1.bf16.msra.mxu0 0
    %805 = vmatprep.subr.bf16.mxu0 0
    %806 = vmatpush1.bf16.msra.mxu0 0
    %807 = vmatprep.subr.bf16.mxu0 0
    %808 = vmatpush1.bf16.msra.mxu0 0
    %809 = vmatprep.subr.bf16.mxu0 0
    %810 = vmatpush1.bf16.msra.mxu0 0
    %811 = vmatprep.subr.bf16.mxu0 0
    %812 = vmatpush1.bf16.msra.mxu0 0
    %813 = vmatprep.mubr.bf16.mxu0 0
    %814 = vmatmul.mubr.bf16.gmra.mrb[0].mxu0 %v613
    %v815 = vpop.f32.mrb[0].mxu0
    %v816 = vadd.f32 %v580, %v815
    %v817 = vpop.f32.mrb[0].mxu0
    %v818 = vadd.f32 %v584, %v817
    %v819 = vpop.f32.mrb[0].mxu0
    %v820 = vadd.f32 %v580, %v819
    %v821 = vpop.f32.mrb[0].mxu0
    %v822 = vadd.f32 %v584, %v821
    %823 = vmatprep.mubr.bf16.mxu0 0
    %824 = vmatmul.mubr.bf16.gmra.mrb[0].mxu0 %v614
    %v825 = vpop.f32.mrb[0].mxu0
    %v826 = vadd.f32 %v580, %v825
    %v827 = vpop.f32.mrb[0].mxu0
    %v828 = vadd.f32 %v584, %v827
    %v829 = vpop.f32.mrb[0].mxu0
    %v830 = vadd.f32 %v580, %v829
    %v831 = vpop.f32.mrb[0].mxu0
    %v832 = vadd.f32 %v584, %v831
    %833 = vmatprep.mubr.bf16.mxu0 0
    %834 = vmatmul.mubr.bf16.gmra.mrb[0].mxu0 %v615
    %v835 = vpop.f32.mrb[0].mxu0
    %v836 = vadd.f32 %v580, %v835
    %v837 = vpop.f32.mrb[0].mxu0
    %v838 = vadd.f32 %v584, %v837
    %v839 = vpop.f32.mrb[0].mxu0
    %v840 = vadd.f32 %v580, %v839
    %v841 = vpop.f32.mrb[0].mxu0
    %v842 = vadd.f32 %v584, %v841
    %843 = vmatprep.mubr.bf16.mxu0 0
    %844 = vmatmul.mubr.bf16.gmra.mrb[0].mxu0 %v616
    %v845 = vpop.f32.mrb[0].mxu0
    %v846 = vadd.f32 %v580, %v845
    %v847 = vpop.f32.mrb[0].mxu0
    %v848 = vadd.f32 %v584, %v847
    %v849 = vpop.f32.mrb[0].mxu0
    %v850 = vadd.f32 %v580, %v849
    %v851 = vpop.f32.mrb[0].mxu0
    %v852 = vadd.f32 %v584, %v851
    %853 = vdwg.mxu0
    %854 = vmatprep.subr.bf16.mxu0 %v720
    %855 = vmatpush1.bf16.msra.mxu0 %v719
    %856 = vmatprep.subr.bf16.mxu0 %v724
    %857 = vmatpush1.bf16.msra.mxu0 %v723
    %858 = vmatprep.subr.bf16.mxu0 %v728
    %859 = vmatpush1.bf16.msra.mxu0 %v727
    %860 = vmatprep.subr.bf16.mxu0 %v732
    %861 = vmatpush1.bf16.msra.mxu0 %v731
    %862 = vmatprep.subr.bf16.mxu0 %v736
    %863 = vmatpush1.bf16.msra.mxu0 %v735
    %864 = vmatprep.subr.bf16.mxu0 %v740
    %865 = vmatpush1.bf16.msra.mxu0 %v739
    %866 = vmatprep.subr.bf16.mxu0 %v744
    %867 = vmatpush1.bf16.msra.mxu0 %v743
    %868 = vmatprep.subr.bf16.mxu0 %v748
    %869 = vmatpush1.bf16.msra.mxu0 %v747
    %870 = vmatprep.subr.bf16.mxu0 0
    %871 = vmatpush1.bf16.msra.mxu0 0
    %872 = vmatprep.subr.bf16.mxu0 0
    %873 = vmatpush1.bf16.msra.mxu0 0
    %874 = vmatprep.subr.bf16.mxu0 0
    %875 = vmatpush1.bf16.msra.mxu0 0
    %876 = vmatprep.subr.bf16.mxu0 0
    %877 = vmatpush1.bf16.msra.mxu0 0
    %878 = vmatprep.subr.bf16.mxu0 0
    %879 = vmatpush1.bf16.msra.mxu0 0
    %880 = vmatprep.subr.bf16.mxu0 0
    %881 = vmatpush1.bf16.msra.mxu0 0
    %882 = vmatprep.subr.bf16.mxu0 0
    %883 = vmatpush1.bf16.msra.mxu0 0
    %884 = vmatprep.subr.bf16.mxu0 0
    %885 = vmatpush1.bf16.msra.mxu0 0
    %886 = vmatprep.mubr.bf16.mxu0 0
    %887 = vmatmul.mubr.bf16.gmra.mrb[0].mxu0 %v613
    %v888 = vpop.f32.mrb[0].mxu0
    %v889 = vadd.f32 %v588, %v888
    %v890 = vpop.f32.mrb[0].mxu0
    %v891 = vadd.f32 %v592, %v890
    %v892 = vpop.f32.mrb[0].mxu0
    %v893 = vadd.f32 %v588, %v892
    %v894 = vpop.f32.mrb[0].mxu0
    %v895 = vadd.f32 %v592, %v894
    %896 = vmatprep.mubr.bf16.mxu0 0
    %897 = vmatmul.mubr.bf16.gmra.mrb[0].mxu0 %v614
    %v898 = vpop.f32.mrb[0].mxu0
    %v899 = vadd.f32 %v588, %v898
    %v900 = vpop.f32.mrb[0].mxu0
    %v901 = vadd.f32 %v592, %v900
    %v902 = vpop.f32.mrb[0].mxu0
    %v903 = vadd.f32 %v588, %v902
    %v904 = vpop.f32.mrb[0].mxu0
    %v905 = vadd.f32 %v592, %v904
    %906 = vmatprep.mubr.bf16.mxu0 0
    %907 = vmatmul.mubr.bf16.gmra.mrb[0].mxu0 %v615
    %v908 = vpop.f32.mrb[0].mxu0
    %v909 = vadd.f32 %v588, %v908
    %v910 = vpop.f32.mrb[0].mxu0
    %v911 = vadd.f32 %v592, %v910
    %v912 = vpop.f32.mrb[0].mxu0
    %v913 = vadd.f32 %v588, %v912
    %v914 = vpop.f32.mrb[0].mxu0
    %v915 = vadd.f32 %v592, %v914
    %916 = vmatprep.mubr.bf16.mxu0 0
    %917 = vmatmul.mubr.bf16.gmra.mrb[0].mxu0 %v616
    %v918 = vpop.f32.mrb[0].mxu0
    %v919 = vadd.f32 %v588, %v918
    %v920 = vpop.f32.mrb[0].mxu0
    %v921 = vadd.f32 %v592, %v920
    %v922 = vpop.f32.mrb[0].mxu0
    %v923 = vadd.f32 %v588, %v922
    %v924 = vpop.f32.mrb[0].mxu0
    %v925 = vadd.f32 %v592, %v924
    %926 = vdwg.mxu0
    %927 = vst [vmem:[#allocation2] sm:$0xff] %v432
    %928 = vst [vmem:[#allocation2 + $0x8] sm:$0xff] %v434
    %929 = vst [vmem:[#allocation2 + $0x10] sm:$0xff] %v505
    %930 = vst [vmem:[#allocation2 + $0x18] sm:$0xff] %v507
    %931 = vst [vmem:[#allocation2 + $0x20] sm:$0xff] %v436
    %932 = vst [vmem:[#allocation2 + $0x28] sm:$0xff] %v438
    %933 = vst [vmem:[#allocation2 + $0x30] sm:$0xff] %v509
    %934 = vst [vmem:[#allocation2 + $0x38] sm:$0xff] %v511
    %935 = vst [vmem:[#allocation2 + $0x40] sm:$0xff] %v442
    %936 = vst [vmem:[#allocation2 + $0x48] sm:$0xff] %v444
    %937 = vst [vmem:[#allocation2 + $0x50] sm:$0xff] %v515
    %938 = vst [vmem:[#allocation2 + $0x58] sm:$0xff] %v517
    %939 = vst [vmem:[#allocation2 + $0x60] sm:$0xff] %v446
    %940 = vst [vmem:[#allocation2 + $0x68] sm:$0xff] %v448
    %941 = vst [vmem:[#allocation2 + $0x70] sm:$0xff] %v519
    %942 = vst [vmem:[#allocation2 + $0x78] sm:$0xff] %v521
    %943 = vst [vmem:[#allocation2 + $0x80] sm:$0xff] %v452
    %944 = vst [vmem:[#allocation2 + $0x88] sm:$0xff] %v454
    %945 = vst [vmem:[#allocation2 + $0x90] sm:$0xff] %v525
    %946 = vst [vmem:[#allocation2 + $0x98] sm:$0xff] %v527
    %947 = vst [vmem:[#allocation2 + $0xa0] sm:$0xff] %v456
    %948 = vst [vmem:[#allocation2 + $0xa8] sm:$0xff] %v458
    %949 = vst [vmem:[#allocation2 + $0xb0] sm:$0xff] %v529
    %950 = vst [vmem:[#allocation2 + $0xb8] sm:$0xff] %v531
    %951 = vst [vmem:[#allocation2 + $0xc0] sm:$0xff] %v462
    %952 = vst [vmem:[#allocation2 + $0xc8] sm:$0xff] %v464
    %953 = vst [vmem:[#allocation2 + $0xd0] sm:$0xff] %v535
    %954 = vst [vmem:[#allocation2 + $0xd8] sm:$0xff] %v537
    %955 = vst [vmem:[#allocation2 + $0xe0] sm:$0xff] %v466
    %956 = vst [vmem:[#allocation2 + $0xe8] sm:$0xff] %v468
    %957 = vst [vmem:[#allocation2 + $0xf0] sm:$0xff] %v539
    %958 = vst [vmem:[#allocation2 + $0xf8] sm:$0xff] %v541
    %959 = vst [vmem:[#allocation3] sm:$0xff] %v816
    %960 = vst [vmem:[#allocation3 + $0x8] sm:$0xff] %v818
    %961 = vst [vmem:[#allocation3 + $0x10] sm:$0xff] %v889
    %962 = vst [vmem:[#allocation3 + $0x18] sm:$0xff] %v891
    %963 = vst [vmem:[#allocation3 + $0x20] sm:$0xff] %v820
    %964 = vst [vmem:[#allocation3 + $0x28] sm:$0xff] %v822
    %965 = vst [vmem:[#allocation3 + $0x30] sm:$0xff] %v893
    %966 = vst [vmem:[#allocation3 + $0x38] sm:$0xff] %v895
    %967 = vst [vmem:[#allocation3 + $0x40] sm:$0xff] %v826
    %968 = vst [vmem:[#allocation3 + $0x48] sm:$0xff] %v828
    %969 = vst [vmem:[#allocation3 + $0x50] sm:$0xff] %v899
    %970 = vst [vmem:[#allocation3 + $0x58] sm:$0xff] %v901
    %971 = vst [vmem:[#allocation3 + $0x60] sm:$0xff] %v830
    %972 = vst [vmem:[#allocation3 + $0x68] sm:$0xff] %v832
    %973 = vst [vmem:[#allocation3 + $0x70] sm:$0xff] %v903
    %974 = vst [vmem:[#allocation3 + $0x78] sm:$0xff] %v905
    %975 = vst [vmem:[#allocation3 + $0x80] sm:$0xff] %v836
    %976 = vst [vmem:[#allocation3 + $0x88] sm:$0xff] %v838
    %977 = vst [vmem:[#allocation3 + $0x90] sm:$0xff] %v909
    %978 = vst [vmem:[#allocation3 + $0x98] sm:$0xff] %v911
    %979 = vst [vmem:[#allocation3 + $0xa0] sm:$0xff] %v840
    %980 = vst [vmem:[#allocation3 + $0xa8] sm:$0xff] %v842
    %981 = vst [vmem:[#allocation3 + $0xb0] sm:$0xff] %v913
    %982 = vst [vmem:[#allocation3 + $0xb8] sm:$0xff] %v915
    %983 = vst [vmem:[#allocation3 + $0xc0] sm:$0xff] %v846
    %984 = vst [vmem:[#allocation3 + $0xc8] sm:$0xff] %v848
    %985 = vst [vmem:[#allocation3 + $0xd0] sm:$0xff] %v919
    %986 = vst [vmem:[#allocation3 + $0xd8] sm:$0xff] %v921
    %987 = vst [vmem:[#allocation3 + $0xe0] sm:$0xff] %v850
    %988 = vst [vmem:[#allocation3 + $0xe8] sm:$0xff] %v852
    %989 = vst [vmem:[#allocation3 + $0xf0] sm:$0xff] %v923
    %990 = vst [vmem:[#allocation3 + $0xf8] sm:$0xff] %v925
    %v991 = vld [vmem:[#allocation15] sm:$0xff]
    %v992 = vld [vmem:[#allocation19] sm:$0xff]
    %v993 = vld [vmem:[#allocation19 + $0x8] sm:$0xff]
    %v994 = vld [vmem:[#allocation19 + $0x10] sm:$0xff]
    %v995 = vld [vmem:[#allocation19 + $0x18] sm:$0xff]
    %v996 = vld [vmem:[#allocation19 + $0x20] sm:$0xff]
    %v997 = vld [vmem:[#allocation19 + $0x28] sm:$0xff]
    %v998 = vld [vmem:[#allocation19 + $0x30] sm:$0xff]
    %v999 = vld [vmem:[#allocation19 + $0x38] sm:$0xff]
    %v1000 = vld [vmem:[#allocation19 + $0x40] sm:$0xff]
    %v1001 = vld [vmem:[#allocation19 + $0x48] sm:$0xff]
    %v1002 = vld [vmem:[#allocation19 + $0x50] sm:$0xff]
    %v1003 = vld [vmem:[#allocation19 + $0x58] sm:$0xff]
    %v1004 = vld [vmem:[#allocation19 + $0x60] sm:$0xff]
    %v1005 = vld [vmem:[#allocation19 + $0x68] sm:$0xff]
    %v1006 = vld [vmem:[#allocation19 + $0x70] sm:$0xff]
    %v1007 = vld [vmem:[#allocation19 + $0x78] sm:$0xff]
    %v1008 = vld [vmem:[#allocation19 + $0x80] sm:$0xff]
    %v1009 = vld [vmem:[#allocation19 + $0x88] sm:$0xff]
    %v1010 = vld [vmem:[#allocation19 + $0x90] sm:$0xff]
    %v1011 = vld [vmem:[#allocation19 + $0x98] sm:$0xff]
    %v1012 = vld [vmem:[#allocation19 + $0xa0] sm:$0xff]
    %v1013 = vld [vmem:[#allocation19 + $0xa8] sm:$0xff]
    %v1014 = vld [vmem:[#allocation19 + $0xb0] sm:$0xff]
    %v1015 = vld [vmem:[#allocation19 + $0xb8] sm:$0xff]
    %v1016 = vld [vmem:[#allocation19 + $0xc0] sm:$0xff]
    %v1017 = vld [vmem:[#allocation19 + $0xc8] sm:$0xff]
    %v1018 = vld [vmem:[#allocation19 + $0xd0] sm:$0xff]
    %v1019 = vld [vmem:[#allocation19 + $0xd8] sm:$0xff]
    %v1020 = vld [vmem:[#allocation19 + $0xe0] sm:$0xff]
    %v1021 = vld [vmem:[#allocation19 + $0xe8] sm:$0xff]
    %v1022 = vld [vmem:[#allocation19 + $0xf0] sm:$0xff]
    %v1023 = vld [vmem:[#allocation19 + $0xf8] sm:$0xff]
    %v1024 = vld [vmem:[#allocation21] sm:$0xff]
    %v1025 = vld [vmem:[#allocation21 + $0x8] sm:$0xff]
    %v1026 = vld [vmem:[#allocation21 + $0x10] sm:$0xff]
    %v1027 = vld [vmem:[#allocation21 + $0x18] sm:$0xff]
    %v1028 = vld [vmem:[#allocation21 + $0x20] sm:$0xff]
    %v1029 = vld [vmem:[#allocation21 + $0x28] sm:$0xff]
    %v1030 = vld [vmem:[#allocation21 + $0x30] sm:$0xff]
    %v1031 = vld [vmem:[#allocation21 + $0x38] sm:$0xff]
    %v1032 = vld [vmem:[#allocation21 + $0x40] sm:$0xff]
    %v1033 = vld [vmem:[#allocation21 + $0x48] sm:$0xff]
    %v1034 = vld [vmem:[#allocation21 + $0x50] sm:$0xff]
    %v1035 = vld [vmem:[#allocation21 + $0x58] sm:$0xff]
    %v1036 = vld [vmem:[#allocation21 + $0x60] sm:$0xff]
    %v1037 = vld [vmem:[#allocation21 + $0x68] sm:$0xff]
    %v1038 = vld [vmem:[#allocation21 + $0x70] sm:$0xff]
    %v1039 = vld [vmem:[#allocation21 + $0x78] sm:$0xff]
    %v1040 = vld [vmem:[#allocation21 + $0x80] sm:$0xff]
    %v1041 = vld [vmem:[#allocation21 + $0x88] sm:$0xff]
    %v1042 = vld [vmem:[#allocation21 + $0x90] sm:$0xff]
    %v1043 = vld [vmem:[#allocation21 + $0x98] sm:$0xff]
    %v1044 = vld [vmem:[#allocation21 + $0xa0] sm:$0xff]
    %v1045 = vld [vmem:[#allocation21 + $0xa8] sm:$0xff]
    %v1046 = vld [vmem:[#allocation21 + $0xb0] sm:$0xff]
    %v1047 = vld [vmem:[#allocation21 + $0xb8] sm:$0xff]
    %v1048 = vld [vmem:[#allocation21 + $0xc0] sm:$0xff]
    %v1049 = vld [vmem:[#allocation21 + $0xc8] sm:$0xff]
    %v1050 = vld [vmem:[#allocation21 + $0xd0] sm:$0xff]
    %v1051 = vld [vmem:[#allocation21 + $0xd8] sm:$0xff]
    %v1052 = vld [vmem:[#allocation21 + $0xe0] sm:$0xff]
    %v1053 = vld [vmem:[#allocation21 + $0xe8] sm:$0xff]
    %v1054 = vld [vmem:[#allocation21 + $0xf0] sm:$0xff]
    %v1055 = vld [vmem:[#allocation21 + $0xf8] sm:$0xff]
    %s1056 = smul.u32 0, 8
    %s1057 = ssub.s32 0, 0
    %s1058 = smul.u32 %s1057, 8
    %v1059 = vld [vmem:[#allocation4] sm:$0xff]
    %v1060 = vld [vmem:[#allocation5] sm:$0xff]
    %v1061 = vld [vmem:[#allocation6] sm:$0xff]
    %v1062 = vld [vmem:[#allocation7] sm:$0xff]
    %v1063 = vld [vmem:[#allocation8] sm:$0xff]
    %v1064 = vld [vmem:[#allocation9] sm:$0xff]
    %s1065 = sadd.s32 %s1058, 7
    %s1066 = scvt.s32.f32 %s1056
    %v1067 = vstv %s1066
    %vm1068 = vcmp.gt.f32.partialorder %v991, %v1067
    %s1069 = scvt.s32.f32 %s1065
    %v1070 = vstv %s1069
    %vm1071 = vcmp.gt.f32.partialorder %v991, %v1070
    %v1072 = vld [vmem:[#allocation2] sm:$0xff]
    %v1073 = vld [vmem:[#allocation2 + $0x8] sm:$0xff]
    %v1074 = vld [vmem:[#allocation2 + $0x10] sm:$0xff]
    %v1075 = vld [vmem:[#allocation2 + $0x18] sm:$0xff]
    %v1076 = vpack.c.bf16 %v1059, %v1059
    %v1109 = vunpack.c.l.b16 %v992
    %v1110 = vunpack.c.h.b16 %v992
    %v1111 = vunpack.c.l.b16 %v993
    %v1112 = vunpack.c.h.b16 %v993
    %v1113 = vunpack.c.l.b16 %v994
    %v1114 = vunpack.c.h.b16 %v994
    %v1115 = vunpack.c.l.b16 %v995
    %v1116 = vunpack.c.h.b16 %v995
    %v1117 = vunpack.c.l.b16 %v996
    %v1118 = vunpack.c.h.b16 %v996
    %v1119 = vunpack.c.l.b16 %v997
    %v1120 = vunpack.c.h.b16 %v997
    %v1121 = vunpack.c.l.b16 %v998
    %v1122 = vunpack.c.h.b16 %v998
    %v1123 = vunpack.c.l.b16 %v999
    %v1124 = vunpack.c.h.b16 %v999
    %v1125 = vunpack.c.l.b16 %v1000
    %v1126 = vunpack.c.h.b16 %v1000
    %v1127 = vunpack.c.l.b16 %v1001
    %v1128 = vunpack.c.h.b16 %v1001
    %v1129 = vunpack.c.l.b16 %v1002
    %v1130 = vunpack.c.h.b16 %v1002
    %v1131 = vunpack.c.l.b16 %v1003
    %v1132 = vunpack.c.h.b16 %v1003
    %v1133 = vunpack.c.l.b16 %v1004
    %v1134 = vunpack.c.h.b16 %v1004
    %v1135 = vunpack.c.l.b16 %v1005
    %v1136 = vunpack.c.h.b16 %v1005
    %v1137 = vunpack.c.l.b16 %v1006
    %v1138 = vunpack.c.h.b16 %v1006
    %v1139 = vunpack.c.l.b16 %v1007
    %v1140 = vunpack.c.h.b16 %v1007
    %v1141 = vunpack.c.l.b16 %v1008
    %v1142 = vunpack.c.h.b16 %v1008
    %v1143 = vunpack.c.l.b16 %v1009
    %v1144 = vunpack.c.h.b16 %v1009
    %v1145 = vunpack.c.l.b16 %v1010
    %v1146 = vunpack.c.h.b16 %v1010
    %v1147 = vunpack.c.l.b16 %v1011
    %v1148 = vunpack.c.h.b16 %v1011
    %v1149 = vunpack.c.l.b16 %v1012
    %v1150 = vunpack.c.h.b16 %v1012
    %v1151 = vunpack.c.l.b16 %v1013
    %v1152 = vunpack.c.h.b16 %v1013
    %v1153 = vunpack.c.l.b16 %v1014
    %v1154 = vunpack.c.h.b16 %v1014
    %v1155 = vunpack.c.l.b16 %v1015
    %v1156 = vunpack.c.h.b16 %v1015
    %v1157 = vunpack.c.l.b16 %v1016
    %v1158 = vunpack.c.h.b16 %v1016
    %v1159 = vunpack.c.l.b16 %v1017
    %v1160 = vunpack.c.h.b16 %v1017
    %v1161 = vunpack.c.l.b16 %v1018
    %v1162 = vunpack.c.h.b16 %v1018
    %v1163 = vunpack.c.l.b16 %v1019
    %v1164 = vunpack.c.h.b16 %v1019
    %v1165 = vunpack.c.l.b16 %v1020
    %v1166 = vunpack.c.h.b16 %v1020
    %v1167 = vunpack.c.l.b16 %v1021
    %v1168 = vunpack.c.h.b16 %v1021
    %v1169 = vunpack.c.l.b16 %v1022
    %v1170 = vunpack.c.h.b16 %v1022
    %v1171 = vunpack.c.l.b16 %v1023
    %v1172 = vunpack.c.h.b16 %v1023
    %v1173 = vpack.c.b16 %v1113, %v1109
    %v1174 = vpack.c.b16 %v1114, %v1110
    %v1175 = vpack.c.b16 %v1115, %v1111
    %v1176 = vpack.c.b16 %v1116, %v1112
    %v1177 = vpack.c.b16 %v1121, %v1117
    %v1178 = vpack.c.b16 %v1122, %v1118
    %v1179 = vpack.c.b16 %v1123, %v1119
    %v1180 = vpack.c.b16 %v1124, %v1120
    %v1181 = vpack.c.b16 %v1129, %v1125
    %v1182 = vpack.c.b16 %v1130, %v1126
    %v1183 = vpack.c.b16 %v1131, %v1127
    %v1184 = vpack.c.b16 %v1132, %v1128
    %v1185 = vpack.c.b16 %v1137, %v1133
    %v1186 = vpack.c.b16 %v1138, %v1134
    %v1187 = vpack.c.b16 %v1139, %v1135
    %v1188 = vpack.c.b16 %v1140, %v1136
    %v1189 = vpack.c.b16 %v1145, %v1141
    %v1190 = vpack.c.b16 %v1146, %v1142
    %v1191 = vpack.c.b16 %v1147, %v1143
    %v1192 = vpack.c.b16 %v1148, %v1144
    %v1193 = vpack.c.b16 %v1153, %v1149
    %v1194 = vpack.c.b16 %v1154, %v1150
    %v1195 = vpack.c.b16 %v1155, %v1151
    %v1196 = vpack.c.b16 %v1156, %v1152
    %v1197 = vpack.c.b16 %v1161, %v1157
    %v1198 = vpack.c.b16 %v1162, %v1158
    %v1199 = vpack.c.b16 %v1163, %v1159
    %v1200 = vpack.c.b16 %v1164, %v1160
    %v1201 = vpack.c.b16 %v1169, %v1165
    %v1202 = vpack.c.b16 %v1170, %v1166
    %v1203 = vpack.c.b16 %v1171, %v1167
    %v1204 = vpack.c.b16 %v1172, %v1168
    %1237 = vmatprep.subr.bf16.mxu0 %v1174
    %1238 = vmatpush1.bf16.msra.mxu0 %v1173
    %1239 = vmatprep.subr.bf16.mxu0 %v1178
    %1240 = vmatpush1.bf16.msra.mxu0 %v1177
    %1241 = vmatprep.subr.bf16.mxu0 %v1182
    %1242 = vmatpush1.bf16.msra.mxu0 %v1181
    %1243 = vmatprep.subr.bf16.mxu0 %v1186
    %1244 = vmatpush1.bf16.msra.mxu0 %v1185
    %1245 = vmatprep.subr.bf16.mxu0 %v1190
    %1246 = vmatpush1.bf16.msra.mxu0 %v1189
    %1247 = vmatprep.subr.bf16.mxu0 %v1194
    %1248 = vmatpush1.bf16.msra.mxu0 %v1193
    %1249 = vmatprep.subr.bf16.mxu0 %v1198
    %1250 = vmatpush1.bf16.msra.mxu0 %v1197
    %1251 = vmatprep.subr.bf16.mxu0 %v1202
    %1252 = vmatpush1.bf16.msra.mxu0 %v1201
    %1253 = vmatprep.subr.bf16.mxu0 0
    %1254 = vmatpush1.bf16.msra.mxu0 0
    %1255 = vmatprep.subr.bf16.mxu0 0
    %1256 = vmatpush1.bf16.msra.mxu0 0
    %1257 = vmatprep.subr.bf16.mxu0 0
    %1258 = vmatpush1.bf16.msra.mxu0 0
    %1259 = vmatprep.subr.bf16.mxu0 0
    %1260 = vmatpush1.bf16.msra.mxu0 0
    %1261 = vmatprep.subr.bf16.mxu0 0
    %1262 = vmatpush1.bf16.msra.mxu0 0
    %1263 = vmatprep.subr.bf16.mxu0 0
    %1264 = vmatpush1.bf16.msra.mxu0 0
    %1265 = vmatprep.subr.bf16.mxu0 0
    %1266 = vmatpush1.bf16.msra.mxu0 0
    %1267 = vmatprep.subr.bf16.mxu0 0
    %1268 = vmatpush1.bf16.msra.mxu0 0
    %1269 = vmatprep.mubr.bf16.mxu0 0
    %1270 = vmatmul.mubr.bf16.gmra.mrb[0].mxu0 %v1076
    %v1271 = vpop.f32.mrb[0].mxu0
    %v1272 = vadd.f32 0.0, %v1271
    %v1273 = vpop.f32.mrb[0].mxu0
    %v1274 = vadd.f32 0.0, %v1273
    %v1275 = vpop.f32.mrb[0].mxu0
    %v1276 = vpop.f32.mrb[0].mxu0
    %1277 = vdwg.mxu0
    %1278 = vmatprep.subr.bf16.mxu0 %v1176
    %1279 = vmatpush1.bf16.msra.mxu0 %v1175
    %1280 = vmatprep.subr.bf16.mxu0 %v1180
    %1281 = vmatpush1.bf16.msra.mxu0 %v1179
    %1282 = vmatprep.subr.bf16.mxu0 %v1184
    %1283 = vmatpush1.bf16.msra.mxu0 %v1183
    %1284 = vmatprep.subr.bf16.mxu0 %v1188
    %1285 = vmatpush1.bf16.msra.mxu0 %v1187
    %1286 = vmatprep.subr.bf16.mxu0 %v1192
    %1287 = vmatpush1.bf16.msra.mxu0 %v1191
    %1288 = vmatprep.subr.bf16.mxu0 %v1196
    %1289 = vmatpush1.bf16.msra.mxu0 %v1195
    %1290 = vmatprep.subr.bf16.mxu0 %v1200
    %1291 = vmatpush1.bf16.msra.mxu0 %v1199
    %1292 = vmatprep.subr.bf16.mxu0 %v1204
    %1293 = vmatpush1.bf16.msra.mxu0 %v1203
    %1294 = vmatprep.subr.bf16.mxu0 0
    %1295 = vmatpush1.bf16.msra.mxu0 0
    %1296 = vmatprep.subr.bf16.mxu0 0
    %1297 = vmatpush1.bf16.msra.mxu0 0
    %1298 = vmatprep.subr.bf16.mxu0 0
    %1299 = vmatpush1.bf16.msra.mxu0 0
    %1300 = vmatprep.subr.bf16.mxu0 0
    %1301 = vmatpush1.bf16.msra.mxu0 0
    %1302 = vmatprep.subr.bf16.mxu0 0
    %1303 = vmatpush1.bf16.msra.mxu0 0
    %1304 = vmatprep.subr.bf16.mxu0 0
    %1305 = vmatpush1.bf16.msra.mxu0 0
    %1306 = vmatprep.subr.bf16.mxu0 0
    %1307 = vmatpush1.bf16.msra.mxu0 0
    %1308 = vmatprep.subr.bf16.mxu0 0
    %1309 = vmatpush1.bf16.msra.mxu0 0
    %1310 = vmatprep.mubr.bf16.mxu0 0
    %1311 = vmatmul.mubr.bf16.gmra.mrb[0].mxu0 %v1076
    %v1312 = vpop.f32.mrb[0].mxu0
    %v1313 = vadd.f32 0.0, %v1312
    %v1314 = vpop.f32.mrb[0].mxu0
    %v1315 = vadd.f32 0.0, %v1314
    %v1316 = vpop.f32.mrb[0].mxu0
    %v1317 = vpop.f32.mrb[0].mxu0
    %1318 = vdwg.mxu0
    %v1319 = vadd.f32 %v1072, %v1272
    %v1320 = vadd.f32 %v1073, %v1274
    %v1321 = vadd.f32 %v1074, %v1313
    %v1322 = vadd.f32 %v1075, %v1315
    %v1323 = vxor.u32 %v1319, 2147483648
    %v1324 = vxor.u32 %v1320, 2147483648
    %v1325 = vxor.u32 %v1321, 2147483648
    %v1326 = vmul.f32 %v1323, 1.442695
    %v1327 = vpow.pop %v1326
    %v1328 = vmul.f32 %v1324, 1.442695
    %v1329 = vpow.pop %v1328
    %v1330 = vmul.f32 %v1325, 1.442695
    %v1331 = vpow.pop %v1330
    %v1332 = vadd.f32 %v1327, 1.0
    %v1333 = vadd.f32 %v1329, 1.0
    %v1334 = vadd.f32 %v1331, 1.0
    %v1335 = vrcp.pop %v1332
    %v1336 = vmul.f32 1.0, %v1335
    %v1337 = vrcp.pop %v1333
    %v1338 = vmul.f32 1.0, %v1337
    %v1339 = vrcp.pop %v1334
    %v1340 = vmul.f32 1.0, %v1339
    %v1341 = vtanh.pop %v1322
    %v1342 = vmul.f32 %v1338, %v1060
    %v1343 = vmul.f32 %v1336, %v1341
    %v1344 = vadd.f32 %v1342, %v1343
    %v1345 = vtanh.pop %v1344
    %v1346 = vmul.f32 %v1340, %v1345
    %v1347 = vsel %vm1068, %v1346, 0.0
    %v1348 = vsel %vm1068, %v1346, %v1059
    %v1349 = vsel %vm1068, %v1344, %v1060
    %s1350 = scalar_lea.vmem [#allocation3], 224
    %v1351 = vld [vmem:[%s1350] sm:$0xff]
    %v1352 = vld [vmem:[%s1350 + $0x8] sm:$0xff]
    %v1353 = vld [vmem:[%s1350 + $0x10] sm:$0xff]
    %v1354 = vld [vmem:[%s1350 + $0x18] sm:$0xff]
    %v1355 = vpack.c.bf16 %v1062, %v1062
    %v1388 = vunpack.c.l.b16 %v1024
    %v1389 = vunpack.c.h.b16 %v1024
    %v1390 = vunpack.c.l.b16 %v1025
    %v1391 = vunpack.c.h.b16 %v1025
    %v1392 = vunpack.c.l.b16 %v1026
    %v1393 = vunpack.c.h.b16 %v1026
    %v1394 = vunpack.c.l.b16 %v1027
    %v1395 = vunpack.c.h.b16 %v1027
    %v1396 = vunpack.c.l.b16 %v1028
    %v1397 = vunpack.c.h.b16 %v1028
    %v1398 = vunpack.c.l.b16 %v1029
    %v1399 = vunpack.c.h.b16 %v1029
    %v1400 = vunpack.c.l.b16 %v1030
    %v1401 = vunpack.c.h.b16 %v1030
    %v1402 = vunpack.c.l.b16 %v1031
    %v1403 = vunpack.c.h.b16 %v1031
    %v1404 = vunpack.c.l.b16 %v1032
    %v1405 = vunpack.c.h.b16 %v1032
    %v1406 = vunpack.c.l.b16 %v1033
    %v1407 = vunpack.c.h.b16 %v1033
    %v1408 = vunpack.c.l.b16 %v1034
    %v1409 = vunpack.c.h.b16 %v1034
    %v1410 = vunpack.c.l.b16 %v1035
    %v1411 = vunpack.c.h.b16 %v1035
    %v1412 = vunpack.c.l.b16 %v1036
    %v1413 = vunpack.c.h.b16 %v1036
    %v1414 = vunpack.c.l.b16 %v1037
    %v1415 = vunpack.c.h.b16 %v1037
    %v1416 = vunpack.c.l.b16 %v1038
    %v1417 = vunpack.c.h.b16 %v1038
    %v1418 = vunpack.c.l.b16 %v1039
    %v1419 = vunpack.c.h.b16 %v1039
    %v1420 = vunpack.c.l.b16 %v1040
    %v1421 = vunpack.c.h.b16 %v1040
    %v1422 = vunpack.c.l.b16 %v1041
    %v1423 = vunpack.c.h.b16 %v1041
    %v1424 = vunpack.c.l.b16 %v1042
    %v1425 = vunpack.c.h.b16 %v1042
    %v1426 = vunpack.c.l.b16 %v1043
    %v1427 = vunpack.c.h.b16 %v1043
    %v1428 = vunpack.c.l.b16 %v1044
    %v1429 = vunpack.c.h.b16 %v1044
    %v1430 = vunpack.c.l.b16 %v1045
    %v1431 = vunpack.c.h.b16 %v1045
    %v1432 = vunpack.c.l.b16 %v1046
    %v1433 = vunpack.c.h.b16 %v1046
    %v1434 = vunpack.c.l.b16 %v1047
    %v1435 = vunpack.c.h.b16 %v1047
    %v1436 = vunpack.c.l.b16 %v1048
    %v1437 = vunpack.c.h.b16 %v1048
    %v1438 = vunpack.c.l.b16 %v1049
    %v1439 = vunpack.c.h.b16 %v1049
    %v1440 = vunpack.c.l.b16 %v1050
    %v1441 = vunpack.c.h.b16 %v1050
    %v1442 = vunpack.c.l.b16 %v1051
    %v1443 = vunpack.c.h.b16 %v1051
    %v1444 = vunpack.c.l.b16 %v1052
    %v1445 = vunpack.c.h.b16 %v1052
    %v1446 = vunpack.c.l.b16 %v1053
    %v1447 = vunpack.c.h.b16 %v1053
    %v1448 = vunpack.c.l.b16 %v1054
    %v1449 = vunpack.c.h.b16 %v1054
    %v1450 = vunpack.c.l.b16 %v1055
    %v1451 = vunpack.c.h.b16 %v1055
    %v1452 = vpack.c.b16 %v1392, %v1388
    %v1453 = vpack.c.b16 %v1393, %v1389
    %v1454 = vpack.c.b16 %v1394, %v1390
    %v1455 = vpack.c.b16 %v1395, %v1391
    %v1456 = vpack.c.b16 %v1400, %v1396
    %v1457 = vpack.c.b16 %v1401, %v1397
    %v1458 = vpack.c.b16 %v1402, %v1398
    %v1459 = vpack.c.b16 %v1403, %v1399
    %v1460 = vpack.c.b16 %v1408, %v1404
    %v1461 = vpack.c.b16 %v1409, %v1405
    %v1462 = vpack.c.b16 %v1410, %v1406
    %v1463 = vpack.c.b16 %v1411, %v1407
    %v1464 = vpack.c.b16 %v1416, %v1412
    %v1465 = vpack.c.b16 %v1417, %v1413
    %v1466 = vpack.c.b16 %v1418, %v1414
    %v1467 = vpack.c.b16 %v1419, %v1415
    %v1468 = vpack.c.b16 %v1424, %v1420
    %v1469 = vpack.c.b16 %v1425, %v1421
    %v1470 = vpack.c.b16 %v1426, %v1422
    %v1471 = vpack.c.b16 %v1427, %v1423
    %v1472 = vpack.c.b16 %v1432, %v1428
    %v1473 = vpack.c.b16 %v1433, %v1429
    %v1474 = vpack.c.b16 %v1434, %v1430
    %v1475 = vpack.c.b16 %v1435, %v1431
    %v1476 = vpack.c.b16 %v1440, %v1436
    %v1477 = vpack.c.b16 %v1441, %v1437
    %v1478 = vpack.c.b16 %v1442, %v1438
    %v1479 = vpack.c.b16 %v1443, %v1439
    %v1480 = vpack.c.b16 %v1448, %v1444
    %v1481 = vpack.c.b16 %v1449, %v1445
    %v1482 = vpack.c.b16 %v1450, %v1446
    %v1483 = vpack.c.b16 %v1451, %v1447
    %1516 = vmatprep.subr.bf16.mxu0 %v1453
    %1517 = vmatpush1.bf16.msra.mxu0 %v1452
    %1518 = vmatprep.subr.bf16.mxu0 %v1457
    %1519 = vmatpush1.bf16.msra.mxu0 %v1456
    %1520 = vmatprep.subr.bf16.mxu0 %v1461
    %1521 = vmatpush1.bf16.msra.mxu0 %v1460
    %1522 = vmatprep.subr.bf16.mxu0 %v1465
    %1523 = vmatpush1.bf16.msra.mxu0 %v1464
    %1524 = vmatprep.subr.bf16.mxu0 %v1469
    %1525 = vmatpush1.bf16.msra.mxu0 %v1468
    %1526 = vmatprep.subr.bf16.mxu0 %v1473
    %1527 = vmatpush1.bf16.msra.mxu0 %v1472
    %1528 = vmatprep.subr.bf16.mxu0 %v1477
    %1529 = vmatpush1.bf16.msra.mxu0 %v1476
    %1530 = vmatprep.subr.bf16.mxu0 %v1481
    %1531 = vmatpush1.bf16.msra.mxu0 %v1480
    %1532 = vmatprep.subr.bf16.mxu0 0
    %1533 = vmatpush1.bf16.msra.mxu0 0
    %1534 = vmatprep.subr.bf16.mxu0 0
    %1535 = vmatpush1.bf16.msra.mxu0 0
    %1536 = vmatprep.subr.bf16.mxu0 0
    %1537 = vmatpush1.bf16.msra.mxu0 0
    %1538 = vmatprep.subr.bf16.mxu0 0
    %1539 = vmatpush1.bf16.msra.mxu0 0
    %1540 = vmatprep.subr.bf16.mxu0 0
    %1541 = vmatpush1.bf16.msra.mxu0 0
    %1542 = vmatprep.subr.bf16.mxu0 0
    %1543 = vmatpush1.bf16.msra.mxu0 0
    %1544 = vmatprep.subr.bf16.mxu0 0
    %1545 = vmatpush1.bf16.msra.mxu0 0
    %1546 = vmatprep.subr.bf16.mxu0 0
    %1547 = vmatpush1.bf16.msra.mxu0 0
    %1548 = vmatprep.mubr.bf16.mxu0 0
    %1549 = vmatmul.mubr.bf16.gmra.mrb[0].mxu0 %v1355
    %v1550 = vpop.f32.mrb[0].mxu0
    %v1551 = vadd.f32 0.0, %v1550
    %v1552 = vpop.f32.mrb[0].mxu0
    %v1553 = vadd.f32 0.0, %v1552
    %v1554 = vpop.f32.mrb[0].mxu0
    %v1555 = vpop.f32.mrb[0].mxu0
    %1556 = vdwg.mxu0
    %1557 = vmatprep.subr.bf16.mxu0 %v1455
    %1558 = vmatpush1.bf16.msra.mxu0 %v1454
    %1559 = vmatprep.subr.bf16.mxu0 %v1459
    %1560 = vmatpush1.bf16.msra.mxu0 %v1458
    %1561 = vmatprep.subr.bf16.mxu0 %v1463
    %1562 = vmatpush1.bf16.msra.mxu0 %v1462
    %1563 = vmatprep.subr.bf16.mxu0 %v1467
    %1564 = vmatpush1.bf16.msra.mxu0 %v1466
    %1565 = vmatprep.subr.bf16.mxu0 %v1471
    %1566 = vmatpush1.bf16.msra.mxu0 %v1470
    %1567 = vmatprep.subr.bf16.mxu0 %v1475
    %1568 = vmatpush1.bf16.msra.mxu0 %v1474
    %1569 = vmatprep.subr.bf16.mxu0 %v1479
    %1570 = vmatpush1.bf16.msra.mxu0 %v1478
    %1571 = vmatprep.subr.bf16.mxu0 %v1483
    %1572 = vmatpush1.bf16.msra.mxu0 %v1482
    %1573 = vmatprep.subr.bf16.mxu0 0
    %1574 = vmatpush1.bf16.msra.mxu0 0
    %1575 = vmatprep.subr.bf16.mxu0 0
    %1576 = vmatpush1.bf16.msra.mxu0 0
    %1577 = vmatprep.subr.bf16.mxu0 0
    %1578 = vmatpush1.bf16.msra.mxu0 0
    %1579 = vmatprep.subr.bf16.mxu0 0
    %1580 = vmatpush1.bf16.msra.mxu0 0
    %1581 = vmatprep.subr.bf16.mxu0 0
    %1582 = vmatpush1.bf16.msra.mxu0 0
    %1583 = vmatprep.subr.bf16.mxu0 0
    %1584 = vmatpush1.bf16.msra.mxu0 0
    %1585 = vmatprep.subr.bf16.mxu0 0
    %1586 = vmatpush1.bf16.msra.mxu0 0
    %1587 = vmatprep.subr.bf16.mxu0 0
    %1588 = vmatpush1.bf16.msra.mxu0 0
    %1589 = vmatprep.mubr.bf16.mxu0 0
    %1590 = vmatmul.mubr.bf16.gmra.mrb[0].mxu0 %v1355
    %v1591 = vpop.f32.mrb[0].mxu0
    %v1592 = vadd.f32 0.0, %v1591
    %v1593 = vpop.f32.mrb[0].mxu0
    %v1594 = vadd.f32 0.0, %v1593
    %v1595 = vpop.f32.mrb[0].mxu0
    %v1596 = vpop.f32.mrb[0].mxu0
    %1597 = vdwg.mxu0
    %v1598 = vadd.f32 %v1351, %v1551
    %v1599 = vadd.f32 %v1352, %v1553
    %v1600 = vadd.f32 %v1353, %v1592
    %v1601 = vadd.f32 %v1354, %v1594
    %v1602 = vxor.u32 %v1598, 2147483648
    %v1603 = vxor.u32 %v1599, 2147483648
    %v1604 = vxor.u32 %v1600, 2147483648
    %v1605 = vmul.f32 %v1602, 1.442695
    %v1606 = vpow.pop %v1605
    %v1607 = vmul.f32 %v1603, 1.442695
    %v1608 = vpow.pop %v1607
    %v1609 = vmul.f32 %v1604, 1.442695
    %v1610 = vpow.pop %v1609
    %v1611 = vadd.f32 %v1606, 1.0
    %v1612 = vadd.f32 %v1608, 1.0
    %v1613 = vadd.f32 %v1610, 1.0
    %v1614 = vrcp.pop %v1611
    %v1615 = vmul.f32 1.0, %v1614
    %v1616 = vrcp.pop %v1612
    %v1617 = vmul.f32 1.0, %v1616
    %v1618 = vrcp.pop %v1613
    %v1619 = vmul.f32 1.0, %v1618
    %v1620 = vtanh.pop %v1601
    %v1621 = vmul.f32 %v1617, %v1063
    %v1622 = vmul.f32 %v1615, %v1620
    %v1623 = vadd.f32 %v1621, %v1622
    %v1624 = vtanh.pop %v1623
    %v1625 = vmul.f32 %v1619, %v1624
    %v1626 = vsel %vm1071, %v1625, 0.0
    %v1627 = vsel %vm1071, %v1625, %v1062
    %v1628 = vsel %vm1071, %v1623, %v1063
    %v1629 = vmax.f32 %v1061, %v1347
    %v1630 = vmax.f32 %v1064, %v1626
    %s1631 = sadd.s32 %s1056, 1
    %s1632 = sadd.s32 %s1058, 6
    %s1633 = scvt.s32.f32 %s1631
    %v1634 = vstv %s1633
    %vm1635 = vcmp.gt.f32.partialorder %v991, %v1634
    %s1636 = scvt.s32.f32 %s1632
    %v1637 = vstv %s1636
    %vm1638 = vcmp.gt.f32.partialorder %v991, %v1637
    %s1639 = scalar_lea.vmem [#allocation2], 32
    %v1640 = vld [vmem:[%s1639] sm:$0xff]
    %v1641 = vld [vmem:[%s1639 + $0x8] sm:$0xff]
    %v1642 = vld [vmem:[%s1639 + $0x10] sm:$0xff]
    %v1643 = vld [vmem:[%s1639 + $0x18] sm:$0xff]
    %v1644 = vpack.c.bf16 %v1348, %v1348
    %1645 = vmatprep.subr.bf16.mxu0 %v1174
    %1646 = vmatpush1.bf16.msra.mxu0 %v1173
    %1647 = vmatprep.subr.bf16.mxu0 %v1178
    %1648 = vmatpush1.bf16.msra.mxu0 %v1177
    %1649 = vmatprep.subr.bf16.mxu0 %v1182
    %1650 = vmatpush1.bf16.msra.mxu0 %v1181
    %1651 = vmatprep.subr.bf16.mxu0 %v1186
    %1652 = vmatpush1.bf16.msra.mxu0 %v1185
    %1653 = vmatprep.subr.bf16.mxu0 %v1190
    %1654 = vmatpush1.bf16.msra.mxu0 %v1189
    %1655 = vmatprep.subr.bf16.mxu0 %v1194
    %1656 = vmatpush1.bf16.msra.mxu0 %v1193
    %1657 = vmatprep.subr.bf16.mxu0 %v1198
    %1658 = vmatpush1.bf16.msra.mxu0 %v1197
    %1659 = vmatprep.subr.bf16.mxu0 %v1202
    %1660 = vmatpush1.bf16.msra.mxu0 %v1201
    %1661 = vmatprep.subr.bf16.mxu0 0
    %1662 = vmatpush1.bf16.msra.mxu0 0
    %1663 = vmatprep.subr.bf16.mxu0 0
    %1664 = vmatpush1.bf16.msra.mxu0 0
    %1665 = vmatprep.subr.bf16.mxu0 0
    %1666 = vmatpush1.bf16.msra.mxu0 0
    %1667 = vmatprep.subr.bf16.mxu0 0
    %1668 = vmatpush1.bf16.msra.mxu0 0
    %1669 = vmatprep.subr.bf16.mxu0 0
    %1670 = vmatpush1.bf16.msra.mxu0 0
    %1671 = vmatprep.subr.bf16.mxu0 0
    %1672 = vmatpush1.bf16.msra.mxu0 0
    %1673 = vmatprep.subr.bf16.mxu0 0
    %1674 = vmatpush1.bf16.msra.mxu0 0
    %1675 = vmatprep.subr.bf16.mxu0 0
    %1676 = vmatpush1.bf16.msra.mxu0 0
    %1677 = vmatprep.mubr.bf16.mxu0 0
    %1678 = vmatmul.mubr.bf16.gmra.mrb[0].mxu0 %v1644
    %v1679 = vpop.f32.mrb[0].mxu0
    %v1680 = vadd.f32 0.0, %v1679
    %v1681 = vpop.f32.mrb[0].mxu0
    %v1682 = vadd.f32 0.0, %v1681
    %v1683 = vpop.f32.mrb[0].mxu0
    %v1684 = vpop.f32.mrb[0].mxu0
    %1685 = vdwg.mxu0
    %1686 = vmatprep.subr.bf16.mxu0 %v1176
    %1687 = vmatpush1.bf16.msra.mxu0 %v1175
    %1688 = vmatprep.subr.bf16.mxu0 %v1180
    %1689 = vmatpush1.bf16.msra.mxu0 %v1179
    %1690 = vmatprep.subr.bf16.mxu0 %v1184
    %1691 = vmatpush1.bf16.msra.mxu0 %v1183
    %1692 = vmatprep.subr.bf16.mxu0 %v1188
    %1693 = vmatpush1.bf16.msra.mxu0 %v1187
    %1694 = vmatprep.subr.bf16.mxu0 %v1192
    %1695 = vmatpush1.bf16.msra.mxu0 %v1191
    %1696 = vmatprep.subr.bf16.mxu0 %v1196
    %1697 = vmatpush1.bf16.msra.mxu0 %v1195
    %1698 = vmatprep.subr.bf16.mxu0 %v1200
    %1699 = vmatpush1.bf16.msra.mxu0 %v1199
    %1700 = vmatprep.subr.bf16.mxu0 %v1204
    %1701 = vmatpush1.bf16.msra.mxu0 %v1203
    %1702 = vmatprep.subr.bf16.mxu0 0
    %1703 = vmatpush1.bf16.msra.mxu0 0
    %1704 = vmatprep.subr.bf16.mxu0 0
    %1705 = vmatpush1.bf16.msra.mxu0 0
    %1706 = vmatprep.subr.bf16.mxu0 0
    %1707 = vmatpush1.bf16.msra.mxu0 0
    %1708 = vmatprep.subr.bf16.mxu0 0
    %1709 = vmatpush1.bf16.msra.mxu0 0
    %1710 = vmatprep.subr.bf16.mxu0 0
    %1711 = vmatpush1.bf16.msra.mxu0 0
    %1712 = vmatprep.subr.bf16.mxu0 0
    %1713 = vmatpush1.bf16.msra.mxu0 0
    %1714 = vmatprep.subr.bf16.mxu0 0
    %1715 = vmatpush1.bf16.msra.mxu0 0
    %1716 = vmatprep.subr.bf16.mxu0 0
    %1717 = vmatpush1.bf16.msra.mxu0 0
    %1718 = vmatprep.mubr.bf16.mxu0 0
    %1719 = vmatmul.mubr.bf16.gmra.mrb[0].mxu0 %v1644
    %v1720 = vpop.f32.mrb[0].mxu0
    %v1721 = vadd.f32 0.0, %v1720
    %v1722 = vpop.f32.mrb[0].mxu0
    %v1723 = vadd.f32 0.0, %v1722
    %v1724 = vpop.f32.mrb[0].mxu0
    %v1725 = vpop.f32.mrb[0].mxu0
    %1726 = vdwg.mxu0
    %v1727 = vadd.f32 %v1640, %v1680
    %v1728 = vadd.f32 %v1641, %v1682
    %v1729 = vadd.f32 %v1642, %v1721
    %v1730 = vadd.f32 %v1643, %v1723
    %v1731 = vxor.u32 %v1727, 2147483648
    %v1732 = vxor.u32 %v1728, 2147483648
    %v1733 = vxor.u32 %v1729, 2147483648
    %v1734 = vmul.f32 %v1731, 1.442695
    %v1735 = vpow.pop %v1734
    %v1736 = vmul.f32 %v1732, 1.442695
    %v1737 = vpow.pop %v1736
    %v1738 = vmul.f32 %v1733, 1.442695
    %v1739 = vpow.pop %v1738
    %v1740 = vadd.f32 %v1735, 1.0
    %v1741 = vadd.f32 %v1737, 1.0
    %v1742 = vadd.f32 %v1739, 1.0
    %v1743 = vrcp.pop %v1740
    %v1744 = vmul.f32 1.0, %v1743
    %v1745 = vrcp.pop %v1741
    %v1746 = vmul.f32 1.0, %v1745
    %v1747 = vrcp.pop %v1742
    %v1748 = vmul.f32 1.0, %v1747
    %v1749 = vtanh.pop %v1730
    %v1750 = vmul.f32 %v1746, %v1349
    %v1751 = vmul.f32 %v1744, %v1749
    %v1752 = vadd.f32 %v1750, %v1751
    %v1753 = vtanh.pop %v1752
    %v1754 = vmul.f32 %v1748, %v1753
    %v1755 = vsel %vm1635, %v1754, 0.0
    %v1756 = vsel %vm1635, %v1754, %v1348
    %v1757 = vsel %vm1635, %v1752, %v1349
    %s1758 = scalar_lea.vmem [#allocation3], 192
    %v1759 = vld [vmem:[%s1758] sm:$0xff]
    %v1760 = vld [vmem:[%s1758 + $0x8] sm:$0xff]
    %v1761 = vld [vmem:[%s1758 + $0x10] sm:$0xff]
    %v1762 = vld [vmem:[%s1758 + $0x18] sm:$0xff]
    %v1763 = vpack.c.bf16 %v1627, %v1627
    %1764 = vmatprep.subr.bf16.mxu0 %v1453
    %1765 = vmatpush1.bf16.msra.mxu0 %v1452
    %1766 = vmatprep.subr.bf16.mxu0 %v1457
    %1767 = vmatpush1.bf16.msra.mxu0 %v1456
    %1768 = vmatprep.subr.bf16.mxu0 %v1461
    %1769 = vmatpush1.bf16.msra.mxu0 %v1460
    %1770 = vmatprep.subr.bf16.mxu0 %v1465
    %1771 = vmatpush1.bf16.msra.mxu0 %v1464
    %1772 = vmatprep.subr.bf16.mxu0 %v1469
    %1773 = vmatpush1.bf16.msra.mxu0 %v1468
    %1774 = vmatprep.subr.bf16.mxu0 %v1473
    %1775 = vmatpush1.bf16.msra.mxu0 %v1472
    %1776 = vmatprep.subr.bf16.mxu0 %v1477
    %1777 = vmatpush1.bf16.msra.mxu0 %v1476
    %1778 = vmatprep.subr.bf16.mxu0 %v1481
    %1779 = vmatpush1.bf16.msra.mxu0 %v1480
    %1780 = vmatprep.subr.bf16.mxu0 0
    %1781 = vmatpush1.bf16.msra.mxu0 0
    %1782 = vmatprep.subr.bf16.mxu0 0
    %1783 = vmatpush1.bf16.msra.mxu0 0
    %1784 = vmatprep.subr.bf16.mxu0 0
    %1785 = vmatpush1.bf16.msra.mxu0 0
    %1786 = vmatprep.subr.bf16.mxu0 0
    %1787 = vmatpush1.bf16.msra.mxu0 0
    %1788 = vmatprep.subr.bf16.mxu0 0
    %1789 = vmatpush1.bf16.msra.mxu0 0
    %1790 = vmatprep.subr.bf16.mxu0 0
    %1791 = vmatpush1.bf16.msra.mxu0 0
    %1792 = vmatprep.subr.bf16.mxu0 0
    %1793 = vmatpush1.bf16.msra.mxu0 0
    %1794 = vmatprep.subr.bf16.mxu0 0
    %1795 = vmatpush1.bf16.msra.mxu0 0
    %1796 = vmatprep.mubr.bf16.mxu0 0
    %1797 = vmatmul.mubr.bf16.gmra.mrb[0].mxu0 %v1763
    %v1798 = vpop.f32.mrb[0].mxu0
    %v1799 = vadd.f32 0.0, %v1798
    %v1800 = vpop.f32.mrb[0].mxu0
    %v1801 = vadd.f32 0.0, %v1800
    %v1802 = vpop.f32.mrb[0].mxu0
    %v1803 = vpop.f32.mrb[0].mxu0
    %1804 = vdwg.mxu0
    %1805 = vmatprep.subr.bf16.mxu0 %v1455
    %1806 = vmatpush1.bf16.msra.mxu0 %v1454
    %1807 = vmatprep.subr.bf16.mxu0 %v1459
    %1808 = vmatpush1.bf16.msra.mxu0 %v1458
    %1809 = vmatprep.subr.bf16.mxu0 %v1463
    %1810 = vmatpush1.bf16.msra.mxu0 %v1462
    %1811 = vmatprep.subr.bf16.mxu0 %v1467
    %1812 = vmatpush1.bf16.msra.mxu0 %v1466
    %1813 = vmatprep.subr.bf16.mxu0 %v1471
    %1814 = vmatpush1.bf16.msra.mxu0 %v1470
    %1815 = vmatprep.subr.bf16.mxu0 %v1475
    %1816 = vmatpush1.bf16.msra.mxu0 %v1474
    %1817 = vmatprep.subr.bf16.mxu0 %v1479
    %1818 = vmatpush1.bf16.msra.mxu0 %v1478
    %1819 = vmatprep.subr.bf16.mxu0 %v1483
    %1820 = vmatpush1.bf16.msra.mxu0 %v1482
    %1821 = vmatprep.subr.bf16.mxu0 0
    %1822 = vmatpush1.bf16.msra.mxu0 0
    %1823 = vmatprep.subr.bf16.mxu0 0
    %1824 = vmatpush1.bf16.msra.mxu0 0
    %1825 = vmatprep.subr.bf16.mxu0 0
    %1826 = vmatpush1.bf16.msra.mxu0 0
    %1827 = vmatprep.subr.bf16.mxu0 0
    %1828 = vmatpush1.bf16.msra.mxu0 0
    %1829 = vmatprep.subr.bf16.mxu0 0
    %1830 = vmatpush1.bf16.msra.mxu0 0
    %1831 = vmatprep.subr.bf16.mxu0 0
    %1832 = vmatpush1.bf16.msra.mxu0 0
    %1833 = vmatprep.subr.bf16.mxu0 0
    %1834 = vmatpush1.bf16.msra.mxu0 0
    %1835 = vmatprep.subr.bf16.mxu0 0
    %1836 = vmatpush1.bf16.msra.mxu0 0
    %1837 = vmatprep.mubr.bf16.mxu0 0
    %1838 = vmatmul.mubr.bf16.gmra.mrb[0].mxu0 %v1763
    %v1839 = vpop.f32.mrb[0].mxu0
    %v1840 = vadd.f32 0.0, %v1839
    %v1841 = vpop.f32.mrb[0].mxu0
    %v1842 = vadd.f32 0.0, %v1841
    %v1843 = vpop.f32.mrb[0].mxu0
    %v1844 = vpop.f32.mrb[0].mxu0
    %1845 = vdwg.mxu0
    %v1846 = vadd.f32 %v1759, %v1799
    %v1847 = vadd.f32 %v1760, %v1801
    %v1848 = vadd.f32 %v1761, %v1840
    %v1849 = vadd.f32 %v1762, %v1842
    %v1850 = vxor.u32 %v1846, 2147483648
    %v1851 = vxor.u32 %v1847, 2147483648
    %v1852 = vxor.u32 %v1848, 2147483648
    %v1853 = vmul.f32 %v1850, 1.442695
    %v1854 = vpow.pop %v1853
    %v1855 = vmul.f32 %v1851, 1.442695
    %v1856 = vpow.pop %v1855
    %v1857 = vmul.f32 %v1852, 1.442695
    %v1858 = vpow.pop %v1857
    %v1859 = vadd.f32 %v1854, 1.0
    %v1860 = vadd.f32 %v1856, 1.0
    %v1861 = vadd.f32 %v1858, 1.0
    %v1862 = vrcp.pop %v1859
    %v1863 = vmul.f32 1.0, %v1862
    %v1864 = vrcp.pop %v1860
    %v1865 = vmul.f32 1.0, %v1864
    %v1866 = vrcp.pop %v1861
    %v1867 = vmul.f32 1.0, %v1866
    %v1868 = vtanh.pop %v1849
    %v1869 = vmul.f32 %v1865, %v1628
    %v1870 = vmul.f32 %v1863, %v1868
    %v1871 = vadd.f32 %v1869, %v1870
    %v1872 = vtanh.pop %v1871
    %v1873 = vmul.f32 %v1867, %v1872
    %v1874 = vsel %vm1638, %v1873, 0.0
    %v1875 = vsel %vm1638, %v1873, %v1627
    %v1876 = vsel %vm1638, %v1871, %v1628
    %v1877 = vmax.f32 %v1629, %v1755
    %v1878 = vmax.f32 %v1630, %v1874
    %s1879 = sadd.s32 %s1056, 2
    %s1880 = sadd.s32 %s1058, 5
    %s1881 = scvt.s32.f32 %s1879
    %v1882 = vstv %s1881
    %vm1883 = vcmp.gt.f32.partialorder %v991, %v1882
    %s1884 = scvt.s32.f32 %s1880
    %v1885 = vstv %s1884
    %vm1886 = vcmp.gt.f32.partialorder %v991, %v1885
    %s1887 = scalar_lea.vmem [#allocation2], 64
    %v1888 = vld [vmem:[%s1887] sm:$0xff]
    %v1889 = vld [vmem:[%s1887 + $0x8] sm:$0xff]
    %v1890 = vld [vmem:[%s1887 + $0x10] sm:$0xff]
    %v1891 = vld [vmem:[%s1887 + $0x18] sm:$0xff]
    %v1892 = vpack.c.bf16 %v1756, %v1756
    %1893 = vmatprep.subr.bf16.mxu0 %v1174
    %1894 = vmatpush1.bf16.msra.mxu0 %v1173
    %1895 = vmatprep.subr.bf16.mxu0 %v1178
    %1896 = vmatpush1.bf16.msra.mxu0 %v1177
    %1897 = vmatprep.subr.bf16.mxu0 %v1182
    %1898 = vmatpush1.bf16.msra.mxu0 %v1181
    %1899 = vmatprep.subr.bf16.mxu0 %v1186
    %1900 = vmatpush1.bf16.msra.mxu0 %v1185
    %1901 = vmatprep.subr.bf16.mxu0 %v1190
    %1902 = vmatpush1.bf16.msra.mxu0 %v1189
    %1903 = vmatprep.subr.bf16.mxu0 %v1194
    %1904 = vmatpush1.bf16.msra.mxu0 %v1193
    %1905 = vmatprep.subr.bf16.mxu0 %v1198
    %1906 = vmatpush1.bf16.msra.mxu0 %v1197
    %1907 = vmatprep.subr.bf16.mxu0 %v1202
    %1908 = vmatpush1.bf16.msra.mxu0 %v1201
    %1909 = vmatprep.subr.bf16.mxu0 0
    %1910 = vmatpush1.bf16.msra.mxu0 0
    %1911 = vmatprep.subr.bf16.mxu0 0
    %1912 = vmatpush1.bf16.msra.mxu0 0
    %1913 = vmatprep.subr.bf16.mxu0 0
    %1914 = vmatpush1.bf16.msra.mxu0 0
    %1915 = vmatprep.subr.bf16.mxu0 0
    %1916 = vmatpush1.bf16.msra.mxu0 0
    %1917 = vmatprep.subr.bf16.mxu0 0
    %1918 = vmatpush1.bf16.msra.mxu0 0
    %1919 = vmatprep.subr.bf16.mxu0 0
    %1920 = vmatpush1.bf16.msra.mxu0 0
    %1921 = vmatprep.subr.bf16.mxu0 0
    %1922 = vmatpush1.bf16.msra.mxu0 0
    %1923 = vmatprep.subr.bf16.mxu0 0
    %1924 = vmatpush1.bf16.msra.mxu0 0
    %1925 = vmatprep.mubr.bf16.mxu0 0
    %1926 = vmatmul.mubr.bf16.gmra.mrb[0].mxu0 %v1892
    %v1927 = vpop.f32.mrb[0].mxu0
    %v1928 = vadd.f32 0.0, %v1927
    %v1929 = vpop.f32.mrb[0].mxu0
    %v1930 = vadd.f32 0.0, %v1929
    %v1931 = vpop.f32.mrb[0].mxu0
    %v1932 = vpop.f32.mrb[0].mxu0
    %1933 = vdwg.mxu0
    %1934 = vmatprep.subr.bf16.mxu0 %v1176
    %1935 = vmatpush1.bf16.msra.mxu0 %v1175
    %1936 = vmatprep.subr.bf16.mxu0 %v1180
    %1937 = vmatpush1.bf16.msra.mxu0 %v1179
    %1938 = vmatprep.subr.bf16.mxu0 %v1184
    %1939 = vmatpush1.bf16.msra.mxu0 %v1183
    %1940 = vmatprep.subr.bf16.mxu0 %v1188
    %1941 = vmatpush1.bf16.msra.mxu0 %v1187
    %1942 = vmatprep.subr.bf16.mxu0 %v1192
    %1943 = vmatpush1.bf16.msra.mxu0 %v1191
    %1944 = vmatprep.subr.bf16.mxu0 %v1196
    %1945 = vmatpush1.bf16.msra.mxu0 %v1195
    %1946 = vmatprep.subr.bf16.mxu0 %v1200
    %1947 = vmatpush1.bf16.msra.mxu0 %v1199
    %1948 = vmatprep.subr.bf16.mxu0 %v1204
    %1949 = vmatpush1.bf16.msra.mxu0 %v1203
    %1950 = vmatprep.subr.bf16.mxu0 0
    %1951 = vmatpush1.bf16.msra.mxu0 0
    %1952 = vmatprep.subr.bf16.mxu0 0
    %1953 = vmatpush1.bf16.msra.mxu0 0
    %1954 = vmatprep.subr.bf16.mxu0 0
    %1955 = vmatpush1.bf16.msra.mxu0 0
    %1956 = vmatprep.subr.bf16.mxu0 0
    %1957 = vmatpush1.bf16.msra.mxu0 0
    %1958 = vmatprep.subr.bf16.mxu0 0
    %1959 = vmatpush1.bf16.msra.mxu0 0
    %1960 = vmatprep.subr.bf16.mxu0 0
    %1961 = vmatpush1.bf16.msra.mxu0 0
    %1962 = vmatprep.subr.bf16.mxu0 0
    %1963 = vmatpush1.bf16.msra.mxu0 0
    %1964 = vmatprep.subr.bf16.mxu0 0
    %1965 = vmatpush1.bf16.msra.mxu0 0
    %1966 = vmatprep.mubr.bf16.mxu0 0
    %1967 = vmatmul.mubr.bf16.gmra.mrb[0].mxu0 %v1892
    %v1968 = vpop.f32.mrb[0].mxu0
    %v1969 = vadd.f32 0.0, %v1968
    %v1970 = vpop.f32.mrb[0].mxu0
    %v1971 = vadd.f32 0.0, %v1970
    %v1972 = vpop.f32.mrb[0].mxu0
    %v1973 = vpop.f32.mrb[0].mxu0
    %1974 = vdwg.mxu0
    %v1975 = vadd.f32 %v1888, %v1928
    %v1976 = vadd.f32 %v1889, %v1930
    %v1977 = vadd.f32 %v1890, %v1969
    %v1978 = vadd.f32 %v1891, %v1971
    %v1979 = vxor.u32 %v1975, 2147483648
    %v1980 = vxor.u32 %v1976, 2147483648
    %v1981 = vxor.u32 %v1977, 2147483648
    %v1982 = vmul.f32 %v1979, 1.442695
    %v1983 = vpow.pop %v1982
    %v1984 = vmul.f32 %v1980, 1.442695
    %v1985 = vpow.pop %v1984
    %v1986 = vmul.f32 %v1981, 1.442695
    %v1987 = vpow.pop %v1986
    %v1988 = vadd.f32 %v1983, 1.0
    %v1989 = vadd.f32 %v1985, 1.0
    %v1990 = vadd.f32 %v1987, 1.0
    %v1991 = vrcp.pop %v1988
    %v1992 = vmul.f32 1.0, %v1991
    %v1993 = vrcp.pop %v1989
    %v1994 = vmul.f32 1.0, %v1993
    %v1995 = vrcp.pop %v1990
    %v1996 = vmul.f32 1.0, %v1995
    %v1997 = vtanh.pop %v1978
    %v1998 = vmul.f32 %v1994, %v1757
    %v1999 = vmul.f32 %v1992, %v1997
    %v2000 = vadd.f32 %v1998, %v1999
    %v2001 = vtanh.pop %v2000
    %v2002 = vmul.f32 %v1996, %v2001
    %v2003 = vsel %vm1883, %v2002, 0.0
    %v2004 = vsel %vm1883, %v2002, %v1756
    %v2005 = vsel %vm1883, %v2000, %v1757
    %s2006 = scalar_lea.vmem [#allocation3], 160
    %v2007 = vld [vmem:[%s2006] sm:$0xff]
    %v2008 = vld [vmem:[%s2006 + $0x8] sm:$0xff]
    %v2009 = vld [vmem:[%s2006 + $0x10] sm:$0xff]
    %v2010 = vld [vmem:[%s2006 + $0x18] sm:$0xff]
    %v2011 = vpack.c.bf16 %v1875, %v1875
    %2012 = vmatprep.subr.bf16.mxu0 %v1453
    %2013 = vmatpush1.bf16.msra.mxu0 %v1452
    %2014 = vmatprep.subr.bf16.mxu0 %v1457
    %2015 = vmatpush1.bf16.msra.mxu0 %v1456
    %2016 = vmatprep.subr.bf16.mxu0 %v1461
    %2017 = vmatpush1.bf16.msra.mxu0 %v1460
    %2018 = vmatprep.subr.bf16.mxu0 %v1465
    %2019 = vmatpush1.bf16.msra.mxu0 %v1464
    %2020 = vmatprep.subr.bf16.mxu0 %v1469
    %2021 = vmatpush1.bf16.msra.mxu0 %v1468
    %2022 = vmatprep.subr.bf16.mxu0 %v1473
    %2023 = vmatpush1.bf16.msra.mxu0 %v1472
    %2024 = vmatprep.subr.bf16.mxu0 %v1477
    %2025 = vmatpush1.bf16.msra.mxu0 %v1476
    %2026 = vmatprep.subr.bf16.mxu0 %v1481
    %2027 = vmatpush1.bf16.msra.mxu0 %v1480
    %2028 = vmatprep.subr.bf16.mxu0 0
    %2029 = vmatpush1.bf16.msra.mxu0 0
    %2030 = vmatprep.subr.bf16.mxu0 0
    %2031 = vmatpush1.bf16.msra.mxu0 0
    %2032 = vmatprep.subr.bf16.mxu0 0
    %2033 = vmatpush1.bf16.msra.mxu0 0
    %2034 = vmatprep.subr.bf16.mxu0 0
    %2035 = vmatpush1.bf16.msra.mxu0 0
    %2036 = vmatprep.subr.bf16.mxu0 0
    %2037 = vmatpush1.bf16.msra.mxu0 0
    %2038 = vmatprep.subr.bf16.mxu0 0
    %2039 = vmatpush1.bf16.msra.mxu0 0
    %2040 = vmatprep.subr.bf16.mxu0 0
    %2041 = vmatpush1.bf16.msra.mxu0 0
    %2042 = vmatprep.subr.bf16.mxu0 0
    %2043 = vmatpush1.bf16.msra.mxu0 0
    %2044 = vmatprep.mubr.bf16.mxu0 0
    %2045 = vmatmul.mubr.bf16.gmra.mrb[0].mxu0 %v2011
    %v2046 = vpop.f32.mrb[0].mxu0
    %v2047 = vadd.f32 0.0, %v2046
    %v2048 = vpop.f32.mrb[0].mxu0
    %v2049 = vadd.f32 0.0, %v2048
    %v2050 = vpop.f32.mrb[0].mxu0
    %v2051 = vpop.f32.mrb[0].mxu0
    %2052 = vdwg.mxu0
    %2053 = vmatprep.subr.bf16.mxu0 %v1455
    %2054 = vmatpush1.bf16.msra.mxu0 %v1454
    %2055 = vmatprep.subr.bf16.mxu0 %v1459
    %2056 = vmatpush1.bf16.msra.mxu0 %v1458
    %2057 = vmatprep.subr.bf16.mxu0 %v1463
    %2058 = vmatpush1.bf16.msra.mxu0 %v1462
    %2059 = vmatprep.subr.bf16.mxu0 %v1467
    %2060 = vmatpush1.bf16.msra.mxu0 %v1466
    %2061 = vmatprep.subr.bf16.mxu0 %v1471
    %2062 = vmatpush1.bf16.msra.mxu0 %v1470
    %2063 = vmatprep.subr.bf16.mxu0 %v1475
    %2064 = vmatpush1.bf16.msra.mxu0 %v1474
    %2065 = vmatprep.subr.bf16.mxu0 %v1479
    %2066 = vmatpush1.bf16.msra.mxu0 %v1478
    %2067 = vmatprep.subr.bf16.mxu0 %v1483
    %2068 = vmatpush1.bf16.msra.mxu0 %v1482
    %2069 = vmatprep.subr.bf16.mxu0 0
    %2070 = vmatpush1.bf16.msra.mxu0 0
    %2071 = vmatprep.subr.bf16.mxu0 0
    %2072 = vmatpush1.bf16.msra.mxu0 0
    %2073 = vmatprep.subr.bf16.mxu0 0
    %2074 = vmatpush1.bf16.msra.mxu0 0
    %2075 = vmatprep.subr.bf16.mxu0 0
    %2076 = vmatpush1.bf16.msra.mxu0 0
    %2077 = vmatprep.subr.bf16.mxu0 0
    %2078 = vmatpush1.bf16.msra.mxu0 0
    %2079 = vmatprep.subr.bf16.mxu0 0
    %2080 = vmatpush1.bf16.msra.mxu0 0
    %2081 = vmatprep.subr.bf16.mxu0 0
    %2082 = vmatpush1.bf16.msra.mxu0 0
    %2083 = vmatprep.subr.bf16.mxu0 0
    %2084 = vmatpush1.bf16.msra.mxu0 0
    %2085 = vmatprep.mubr.bf16.mxu0 0
    %2086 = vmatmul.mubr.bf16.gmra.mrb[0].mxu0 %v2011
    %v2087 = vpop.f32.mrb[0].mxu0
    %v2088 = vadd.f32 0.0, %v2087
    %v2089 = vpop.f32.mrb[0].mxu0
    %v2090 = vadd.f32 0.0, %v2089
    %v2091 = vpop.f32.mrb[0].mxu0
    %v2092 = vpop.f32.mrb[0].mxu0
    %2093 = vdwg.mxu0
    %v2094 = vadd.f32 %v2007, %v2047
    %v2095 = vadd.f32 %v2008, %v2049
    %v2096 = vadd.f32 %v2009, %v2088
    %v2097 = vadd.f32 %v2010, %v2090
    %v2098 = vxor.u32 %v2094, 2147483648
    %v2099 = vxor.u32 %v2095, 2147483648
    %v2100 = vxor.u32 %v2096, 2147483648
    %v2101 = vmul.f32 %v2098, 1.442695
    %v2102 = vpow.pop %v2101
    %v2103 = vmul.f32 %v2099, 1.442695
    %v2104 = vpow.pop %v2103
    %v2105 = vmul.f32 %v2100, 1.442695
    %v2106 = vpow.pop %v2105
    %v2107 = vadd.f32 %v2102, 1.0
    %v2108 = vadd.f32 %v2104, 1.0
    %v2109 = vadd.f32 %v2106, 1.0
    %v2110 = vrcp.pop %v2107
    %v2111 = vmul.f32 1.0, %v2110
    %v2112 = vrcp.pop %v2108
    %v2113 = vmul.f32 1.0, %v2112
    %v2114 = vrcp.pop %v2109
    %v2115 = vmul.f32 1.0, %v2114
    %v2116 = vtanh.pop %v2097
    %v2117 = vmul.f32 %v2113, %v1876
    %v2118 = vmul.f32 %v2111, %v2116
    %v2119 = vadd.f32 %v2117, %v2118
    %v2120 = vtanh.pop %v2119
    %v2121 = vmul.f32 %v2115, %v2120
    %v2122 = vsel %vm1886, %v2121, 0.0
    %v2123 = vsel %vm1886, %v2121, %v1875
    %v2124 = vsel %vm1886, %v2119, %v1876
    %v2125 = vmax.f32 %v1877, %v2003
    %v2126 = vmax.f32 %v1878, %v2122
    %s2127 = sadd.s32 %s1056, 3
    %s2128 = sadd.s32 %s1058, 4
    %s2129 = scvt.s32.f32 %s2127
    %v2130 = vstv %s2129
    %vm2131 = vcmp.gt.f32.partialorder %v991, %v2130
    %s2132 = scvt.s32.f32 %s2128
    %v2133 = vstv %s2132
    %vm2134 = vcmp.gt.f32.partialorder %v991, %v2133
    %s2135 = scalar_lea.vmem [#allocation2], 96
    %v2136 = vld [vmem:[%s2135] sm:$0xff]
    %v2137 = vld [vmem:[%s2135 + $0x8] sm:$0xff]
    %v2138 = vld [vmem:[%s2135 + $0x10] sm:$0xff]
    %v2139 = vld [vmem:[%s2135 + $0x18] sm:$0xff]
    %v2140 = vpack.c.bf16 %v2004, %v2004
    %2141 = vmatprep.subr.bf16.mxu0 %v1174
    %2142 = vmatpush1.bf16.msra.mxu0 %v1173
    %2143 = vmatprep.subr.bf16.mxu0 %v1178
    %2144 = vmatpush1.bf16.msra.mxu0 %v1177
    %2145 = vmatprep.subr.bf16.mxu0 %v1182
    %2146 = vmatpush1.bf16.msra.mxu0 %v1181
    %2147 = vmatprep.subr.bf16.mxu0 %v1186
    %2148 = vmatpush1.bf16.msra.mxu0 %v1185
    %2149 = vmatprep.subr.bf16.mxu0 %v1190
    %2150 = vmatpush1.bf16.msra.mxu0 %v1189
    %2151 = vmatprep.subr.bf16.mxu0 %v1194
    %2152 = vmatpush1.bf16.msra.mxu0 %v1193
    %2153 = vmatprep.subr.bf16.mxu0 %v1198
    %2154 = vmatpush1.bf16.msra.mxu0 %v1197
    %2155 = vmatprep.subr.bf16.mxu0 %v1202
    %2156 = vmatpush1.bf16.msra.mxu0 %v1201
    %2157 = vmatprep.subr.bf16.mxu0 0
    %2158 = vmatpush1.bf16.msra.mxu0 0
    %2159 = vmatprep.subr.bf16.mxu0 0
    %2160 = vmatpush1.bf16.msra.mxu0 0
    %2161 = vmatprep.subr.bf16.mxu0 0
    %2162 = vmatpush1.bf16.msra.mxu0 0
    %2163 = vmatprep.subr.bf16.mxu0 0
    %2164 = vmatpush1.bf16.msra.mxu0 0
    %2165 = vmatprep.subr.bf16.mxu0 0
    %2166 = vmatpush1.bf16.msra.mxu0 0
    %2167 = vmatprep.subr.bf16.mxu0 0
    %2168 = vmatpush1.bf16.msra.mxu0 0
    %2169 = vmatprep.subr.bf16.mxu0 0
    %2170 = vmatpush1.bf16.msra.mxu0 0
    %2171 = vmatprep.subr.bf16.mxu0 0
    %2172 = vmatpush1.bf16.msra.mxu0 0
    %2173 = vmatprep.mubr.bf16.mxu0 0
    %2174 = vmatmul.mubr.bf16.gmra.mrb[0].mxu0 %v2140
    %v2175 = vpop.f32.mrb[0].mxu0
    %v2176 = vadd.f32 0.0, %v2175
    %v2177 = vpop.f32.mrb[0].mxu0
    %v2178 = vadd.f32 0.0, %v2177
    %v2179 = vpop.f32.mrb[0].mxu0
    %v2180 = vpop.f32.mrb[0].mxu0
    %2181 = vdwg.mxu0
    %2182 = vmatprep.subr.bf16.mxu0 %v1176
    %2183 = vmatpush1.bf16.msra.mxu0 %v1175
    %2184 = vmatprep.subr.bf16.mxu0 %v1180
    %2185 = vmatpush1.bf16.msra.mxu0 %v1179
    %2186 = vmatprep.subr.bf16.mxu0 %v1184
    %2187 = vmatpush1.bf16.msra.mxu0 %v1183
    %2188 = vmatprep.subr.bf16.mxu0 %v1188
    %2189 = vmatpush1.bf16.msra.mxu0 %v1187
    %2190 = vmatprep.subr.bf16.mxu0 %v1192
    %2191 = vmatpush1.bf16.msra.mxu0 %v1191
    %2192 = vmatprep.subr.bf16.mxu0 %v1196
    %2193 = vmatpush1.bf16.msra.mxu0 %v1195
    %2194 = vmatprep.subr.bf16.mxu0 %v1200
    %2195 = vmatpush1.bf16.msra.mxu0 %v1199
    %2196 = vmatprep.subr.bf16.mxu0 %v1204
    %2197 = vmatpush1.bf16.msra.mxu0 %v1203
    %2198 = vmatprep.subr.bf16.mxu0 0
    %2199 = vmatpush1.bf16.msra.mxu0 0
    %2200 = vmatprep.subr.bf16.mxu0 0
    %2201 = vmatpush1.bf16.msra.mxu0 0
    %2202 = vmatprep.subr.bf16.mxu0 0
    %2203 = vmatpush1.bf16.msra.mxu0 0
    %2204 = vmatprep.subr.bf16.mxu0 0
    %2205 = vmatpush1.bf16.msra.mxu0 0
    %2206 = vmatprep.subr.bf16.mxu0 0
    %2207 = vmatpush1.bf16.msra.mxu0 0
    %2208 = vmatprep.subr.bf16.mxu0 0
    %2209 = vmatpush1.bf16.msra.mxu0 0
    %2210 = vmatprep.subr.bf16.mxu0 0
    %2211 = vmatpush1.bf16.msra.mxu0 0
    %2212 = vmatprep.subr.bf16.mxu0 0
    %2213 = vmatpush1.bf16.msra.mxu0 0
    %2214 = vmatprep.mubr.bf16.mxu0 0
    %2215 = vmatmul.mubr.bf16.gmra.mrb[0].mxu0 %v2140
    %v2216 = vpop.f32.mrb[0].mxu0
    %v2217 = vadd.f32 0.0, %v2216
    %v2218 = vpop.f32.mrb[0].mxu0
    %v2219 = vadd.f32 0.0, %v2218
    %v2220 = vpop.f32.mrb[0].mxu0
    %v2221 = vpop.f32.mrb[0].mxu0
    %2222 = vdwg.mxu0
    %v2223 = vadd.f32 %v2136, %v2176
    %v2224 = vadd.f32 %v2137, %v2178
    %v2225 = vadd.f32 %v2138, %v2217
    %v2226 = vadd.f32 %v2139, %v2219
    %v2227 = vxor.u32 %v2223, 2147483648
    %v2228 = vxor.u32 %v2224, 2147483648
    %v2229 = vxor.u32 %v2225, 2147483648
    %v2230 = vmul.f32 %v2227, 1.442695
    %v2231 = vpow.pop %v2230
    %v2232 = vmul.f32 %v2228, 1.442695
    %v2233 = vpow.pop %v2232
    %v2234 = vmul.f32 %v2229, 1.442695
    %v2235 = vpow.pop %v2234
    %v2236 = vadd.f32 %v2231, 1.0
    %v2237 = vadd.f32 %v2233, 1.0
    %v2238 = vadd.f32 %v2235, 1.0
    %v2239 = vrcp.pop %v2236
    %v2240 = vmul.f32 1.0, %v2239
    %v2241 = vrcp.pop %v2237
    %v2242 = vmul.f32 1.0, %v2241
    %v2243 = vrcp.pop %v2238
    %v2244 = vmul.f32 1.0, %v2243
    %v2245 = vtanh.pop %v2226
    %v2246 = vmul.f32 %v2242, %v2005
    %v2247 = vmul.f32 %v2240, %v2245
    %v2248 = vadd.f32 %v2246, %v2247
    %v2249 = vtanh.pop %v2248
    %v2250 = vmul.f32 %v2244, %v2249
    %v2251 = vsel %vm2131, %v2250, 0.0
    %v2252 = vsel %vm2131, %v2250, %v2004
    %v2253 = vsel %vm2131, %v2248, %v2005
    %s2254 = scalar_lea.vmem [#allocation3], 128
    %v2255 = vld [vmem:[%s2254] sm:$0xff]
    %v2256 = vld [vmem:[%s2254 + $0x8] sm:$0xff]
    %v2257 = vld [vmem:[%s2254 + $0x10] sm:$0xff]
    %v2258 = vld [vmem:[%s2254 + $0x18] sm:$0xff]
    %v2259 = vpack.c.bf16 %v2123, %v2123
    %2260 = vmatprep.subr.bf16.mxu0 %v1453
    %2261 = vmatpush1.bf16.msra.mxu0 %v1452
    %2262 = vmatprep.subr.bf16.mxu0 %v1457
    %2263 = vmatpush1.bf16.msra.mxu0 %v1456
    %2264 = vmatprep.subr.bf16.mxu0 %v1461
    %2265 = vmatpush1.bf16.msra.mxu0 %v1460
    %2266 = vmatprep.subr.bf16.mxu0 %v1465
    %2267 = vmatpush1.bf16.msra.mxu0 %v1464
    %2268 = vmatprep.subr.bf16.mxu0 %v1469
    %2269 = vmatpush1.bf16.msra.mxu0 %v1468
    %2270 = vmatprep.subr.bf16.mxu0 %v1473
    %2271 = vmatpush1.bf16.msra.mxu0 %v1472
    %2272 = vmatprep.subr.bf16.mxu0 %v1477
    %2273 = vmatpush1.bf16.msra.mxu0 %v1476
    %2274 = vmatprep.subr.bf16.mxu0 %v1481
    %2275 = vmatpush1.bf16.msra.mxu0 %v1480
    %2276 = vmatprep.subr.bf16.mxu0 0
    %2277 = vmatpush1.bf16.msra.mxu0 0
    %2278 = vmatprep.subr.bf16.mxu0 0
    %2279 = vmatpush1.bf16.msra.mxu0 0
    %2280 = vmatprep.subr.bf16.mxu0 0
    %2281 = vmatpush1.bf16.msra.mxu0 0
    %2282 = vmatprep.subr.bf16.mxu0 0
    %2283 = vmatpush1.bf16.msra.mxu0 0
    %2284 = vmatprep.subr.bf16.mxu0 0
    %2285 = vmatpush1.bf16.msra.mxu0 0
    %2286 = vmatprep.subr.bf16.mxu0 0
    %2287 = vmatpush1.bf16.msra.mxu0 0
    %2288 = vmatprep.subr.bf16.mxu0 0
    %2289 = vmatpush1.bf16.msra.mxu0 0
    %2290 = vmatprep.subr.bf16.mxu0 0
    %2291 = vmatpush1.bf16.msra.mxu0 0
    %2292 = vmatprep.mubr.bf16.mxu0 0
    %2293 = vmatmul.mubr.bf16.gmra.mrb[0].mxu0 %v2259
    %v2294 = vpop.f32.mrb[0].mxu0
    %v2295 = vadd.f32 0.0, %v2294
    %v2296 = vpop.f32.mrb[0].mxu0
    %v2297 = vadd.f32 0.0, %v2296
    %v2298 = vpop.f32.mrb[0].mxu0
    %v2299 = vpop.f32.mrb[0].mxu0
    %2300 = vdwg.mxu0
    %2301 = vmatprep.subr.bf16.mxu0 %v1455
    %2302 = vmatpush1.bf16.msra.mxu0 %v1454
    %2303 = vmatprep.subr.bf16.mxu0 %v1459
    %2304 = vmatpush1.bf16.msra.mxu0 %v1458
    %2305 = vmatprep.subr.bf16.mxu0 %v1463
    %2306 = vmatpush1.bf16.msra.mxu0 %v1462
    %2307 = vmatprep.subr.bf16.mxu0 %v1467
    %2308 = vmatpush1.bf16.msra.mxu0 %v1466
    %2309 = vmatprep.subr.bf16.mxu0 %v1471
    %2310 = vmatpush1.bf16.msra.mxu0 %v1470
    %2311 = vmatprep.subr.bf16.mxu0 %v1475
    %2312 = vmatpush1.bf16.msra.mxu0 %v1474
    %2313 = vmatprep.subr.bf16.mxu0 %v1479
    %2314 = vmatpush1.bf16.msra.mxu0 %v1478
    %2315 = vmatprep.subr.bf16.mxu0 %v1483
    %2316 = vmatpush1.bf16.msra.mxu0 %v1482
    %2317 = vmatprep.subr.bf16.mxu0 0
    %2318 = vmatpush1.bf16.msra.mxu0 0
    %2319 = vmatprep.subr.bf16.mxu0 0
    %2320 = vmatpush1.bf16.msra.mxu0 0
    %2321 = vmatprep.subr.bf16.mxu0 0
    %2322 = vmatpush1.bf16.msra.mxu0 0
    %2323 = vmatprep.subr.bf16.mxu0 0
    %2324 = vmatpush1.bf16.msra.mxu0 0
    %2325 = vmatprep.subr.bf16.mxu0 0
    %2326 = vmatpush1.bf16.msra.mxu0 0
    %2327 = vmatprep.subr.bf16.mxu0 0
    %2328 = vmatpush1.bf16.msra.mxu0 0
    %2329 = vmatprep.subr.bf16.mxu0 0
    %2330 = vmatpush1.bf16.msra.mxu0 0
    %2331 = vmatprep.subr.bf16.mxu0 0
    %2332 = vmatpush1.bf16.msra.mxu0 0
    %2333 = vmatprep.mubr.bf16.mxu0 0
    %2334 = vmatmul.mubr.bf16.gmra.mrb[0].mxu0 %v2259
    %v2335 = vpop.f32.mrb[0].mxu0
    %v2336 = vadd.f32 0.0, %v2335
    %v2337 = vpop.f32.mrb[0].mxu0
    %v2338 = vadd.f32 0.0, %v2337
    %v2339 = vpop.f32.mrb[0].mxu0
    %v2340 = vpop.f32.mrb[0].mxu0
    %2341 = vdwg.mxu0
    %v2342 = vadd.f32 %v2255, %v2295
    %v2343 = vadd.f32 %v2256, %v2297
    %v2344 = vadd.f32 %v2257, %v2336
    %v2345 = vadd.f32 %v2258, %v2338
    %v2346 = vxor.u32 %v2342, 2147483648
    %v2347 = vxor.u32 %v2343, 2147483648
    %v2348 = vxor.u32 %v2344, 2147483648
    %v2349 = vmul.f32 %v2346, 1.442695
    %v2350 = vpow.pop %v2349
    %v2351 = vmul.f32 %v2347, 1.442695
    %v2352 = vpow.pop %v2351
    %v2353 = vmul.f32 %v2348, 1.442695
    %v2354 = vpow.pop %v2353
    %v2355 = vadd.f32 %v2350, 1.0
    %v2356 = vadd.f32 %v2352, 1.0
    %v2357 = vadd.f32 %v2354, 1.0
    %v2358 = vrcp.pop %v2355
    %v2359 = vmul.f32 1.0, %v2358
    %v2360 = vrcp.pop %v2356
    %v2361 = vmul.f32 1.0, %v2360
    %v2362 = vrcp.pop %v2357
    %v2363 = vmul.f32 1.0, %v2362
    %v2364 = vtanh.pop %v2345
    %v2365 = vmul.f32 %v2361, %v2124
    %v2366 = vmul.f32 %v2359, %v2364
    %v2367 = vadd.f32 %v2365, %v2366
    %v2368 = vtanh.pop %v2367
    %v2369 = vmul.f32 %v2363, %v2368
    %v2370 = vsel %vm2134, %v2369, 0.0
    %v2371 = vsel %vm2134, %v2369, %v2123
    %v2372 = vsel %vm2134, %v2367, %v2124
    %v2373 = vmax.f32 %v2125, %v2251
    %v2374 = vmax.f32 %v2126, %v2370
    %s2375 = sadd.s32 %s1056, 4
    %s2376 = sadd.s32 %s1058, 3
    %s2377 = scvt.s32.f32 %s2375
    %v2378 = vstv %s2377
    %vm2379 = vcmp.gt.f32.partialorder %v991, %v2378
    %s2380 = scvt.s32.f32 %s2376
    %v2381 = vstv %s2380
    %vm2382 = vcmp.gt.f32.partialorder %v991, %v2381
    %s2383 = scalar_lea.vmem [#allocation2], 128
    %v2384 = vld [vmem:[%s2383] sm:$0xff]
    %v2385 = vld [vmem:[%s2383 + $0x8] sm:$0xff]
    %v2386 = vld [vmem:[%s2383 + $0x10] sm:$0xff]
    %v2387 = vld [vmem:[%s2383 + $0x18] sm:$0xff]
    %v2388 = vpack.c.bf16 %v2252, %v2252
    %2389 = vmatprep.subr.bf16.mxu0 %v1174
    %2390 = vmatpush1.bf16.msra.mxu0 %v1173
    %2391 = vmatprep.subr.bf16.mxu0 %v1178
    %2392 = vmatpush1.bf16.msra.mxu0 %v1177
    %2393 = vmatprep.subr.bf16.mxu0 %v1182
    %2394 = vmatpush1.bf16.msra.mxu0 %v1181
    %2395 = vmatprep.subr.bf16.mxu0 %v1186
    %2396 = vmatpush1.bf16.msra.mxu0 %v1185
    %2397 = vmatprep.subr.bf16.mxu0 %v1190
    %2398 = vmatpush1.bf16.msra.mxu0 %v1189
    %2399 = vmatprep.subr.bf16.mxu0 %v1194
    %2400 = vmatpush1.bf16.msra.mxu0 %v1193
    %2401 = vmatprep.subr.bf16.mxu0 %v1198
    %2402 = vmatpush1.bf16.msra.mxu0 %v1197
    %2403 = vmatprep.subr.bf16.mxu0 %v1202
    %2404 = vmatpush1.bf16.msra.mxu0 %v1201
    %2405 = vmatprep.subr.bf16.mxu0 0
    %2406 = vmatpush1.bf16.msra.mxu0 0
    %2407 = vmatprep.subr.bf16.mxu0 0
    %2408 = vmatpush1.bf16.msra.mxu0 0
    %2409 = vmatprep.subr.bf16.mxu0 0
    %2410 = vmatpush1.bf16.msra.mxu0 0
    %2411 = vmatprep.subr.bf16.mxu0 0
    %2412 = vmatpush1.bf16.msra.mxu0 0
    %2413 = vmatprep.subr.bf16.mxu0 0
    %2414 = vmatpush1.bf16.msra.mxu0 0
    %2415 = vmatprep.subr.bf16.mxu0 0
    %2416 = vmatpush1.bf16.msra.mxu0 0
    %2417 = vmatprep.subr.bf16.mxu0 0
    %2418 = vmatpush1.bf16.msra.mxu0 0
    %2419 = vmatprep.subr.bf16.mxu0 0
    %2420 = vmatpush1.bf16.msra.mxu0 0
    %2421 = vmatprep.mubr.bf16.mxu0 0
    %2422 = vmatmul.mubr.bf16.gmra.mrb[0].mxu0 %v2388
    %v2423 = vpop.f32.mrb[0].mxu0
    %v2424 = vadd.f32 0.0, %v2423
    %v2425 = vpop.f32.mrb[0].mxu0
    %v2426 = vadd.f32 0.0, %v2425
    %v2427 = vpop.f32.mrb[0].mxu0
    %v2428 = vpop.f32.mrb[0].mxu0
    %2429 = vdwg.mxu0
    %2430 = vmatprep.subr.bf16.mxu0 %v1176
    %2431 = vmatpush1.bf16.msra.mxu0 %v1175
    %2432 = vmatprep.subr.bf16.mxu0 %v1180
    %2433 = vmatpush1.bf16.msra.mxu0 %v1179
    %2434 = vmatprep.subr.bf16.mxu0 %v1184
    %2435 = vmatpush1.bf16.msra.mxu0 %v1183
    %2436 = vmatprep.subr.bf16.mxu0 %v1188
    %2437 = vmatpush1.bf16.msra.mxu0 %v1187
    %2438 = vmatprep.subr.bf16.mxu0 %v1192
    %2439 = vmatpush1.bf16.msra.mxu0 %v1191
    %2440 = vmatprep.subr.bf16.mxu0 %v1196
    %2441 = vmatpush1.bf16.msra.mxu0 %v1195
    %2442 = vmatprep.subr.bf16.mxu0 %v1200
    %2443 = vmatpush1.bf16.msra.mxu0 %v1199
    %2444 = vmatprep.subr.bf16.mxu0 %v1204
    %2445 = vmatpush1.bf16.msra.mxu0 %v1203
    %2446 = vmatprep.subr.bf16.mxu0 0
    %2447 = vmatpush1.bf16.msra.mxu0 0
    %2448 = vmatprep.subr.bf16.mxu0 0
    %2449 = vmatpush1.bf16.msra.mxu0 0
    %2450 = vmatprep.subr.bf16.mxu0 0
    %2451 = vmatpush1.bf16.msra.mxu0 0
    %2452 = vmatprep.subr.bf16.mxu0 0
    %2453 = vmatpush1.bf16.msra.mxu0 0
    %2454 = vmatprep.subr.bf16.mxu0 0
    %2455 = vmatpush1.bf16.msra.mxu0 0
    %2456 = vmatprep.subr.bf16.mxu0 0
    %2457 = vmatpush1.bf16.msra.mxu0 0
    %2458 = vmatprep.subr.bf16.mxu0 0
    %2459 = vmatpush1.bf16.msra.mxu0 0
    %2460 = vmatprep.subr.bf16.mxu0 0
    %2461 = vmatpush1.bf16.msra.mxu0 0
    %2462 = vmatprep.mubr.bf16.mxu0 0
    %2463 = vmatmul.mubr.bf16.gmra.mrb[0].mxu0 %v2388
    %v2464 = vpop.f32.mrb[0].mxu0
    %v2465 = vadd.f32 0.0, %v2464
    %v2466 = vpop.f32.mrb[0].mxu0
    %v2467 = vadd.f32 0.0, %v2466
    %v2468 = vpop.f32.mrb[0].mxu0
    %v2469 = vpop.f32.mrb[0].mxu0
    %2470 = vdwg.mxu0
    %v2471 = vadd.f32 %v2384, %v2424
    %v2472 = vadd.f32 %v2385, %v2426
    %v2473 = vadd.f32 %v2386, %v2465
    %v2474 = vadd.f32 %v2387, %v2467
    %v2475 = vxor.u32 %v2471, 2147483648
    %v2476 = vxor.u32 %v2472, 2147483648
    %v2477 = vxor.u32 %v2473, 2147483648
    %v2478 = vmul.f32 %v2475, 1.442695
    %v2479 = vpow.pop %v2478
    %v2480 = vmul.f32 %v2476, 1.442695
    %v2481 = vpow.pop %v2480
    %v2482 = vmul.f32 %v2477, 1.442695
    %v2483 = vpow.pop %v2482
    %v2484 = vadd.f32 %v2479, 1.0
    %v2485 = vadd.f32 %v2481, 1.0
    %v2486 = vadd.f32 %v2483, 1.0
    %v2487 = vrcp.pop %v2484
    %v2488 = vmul.f32 1.0, %v2487
    %v2489 = vrcp.pop %v2485
    %v2490 = vmul.f32 1.0, %v2489
    %v2491 = vrcp.pop %v2486
    %v2492 = vmul.f32 1.0, %v2491
    %v2493 = vtanh.pop %v2474
    %v2494 = vmul.f32 %v2490, %v2253
    %v2495 = vmul.f32 %v2488, %v2493
    %v2496 = vadd.f32 %v2494, %v2495
    %v2497 = vtanh.pop %v2496
    %v2498 = vmul.f32 %v2492, %v2497
    %v2499 = vsel %vm2379, %v2498, 0.0
    %v2500 = vsel %vm2379, %v2498, %v2252
    %v2501 = vsel %vm2379, %v2496, %v2253
    %s2502 = scalar_lea.vmem [#allocation3], 96
    %v2503 = vld [vmem:[%s2502] sm:$0xff]
    %v2504 = vld [vmem:[%s2502 + $0x8] sm:$0xff]
    %v2505 = vld [vmem:[%s2502 + $0x10] sm:$0xff]
    %v2506 = vld [vmem:[%s2502 + $0x18] sm:$0xff]
    %v2507 = vpack.c.bf16 %v2371, %v2371
    %2508 = vmatprep.subr.bf16.mxu0 %v1453
    %2509 = vmatpush1.bf16.msra.mxu0 %v1452
    %2510 = vmatprep.subr.bf16.mxu0 %v1457
    %2511 = vmatpush1.bf16.msra.mxu0 %v1456
    %2512 = vmatprep.subr.bf16.mxu0 %v1461
    %2513 = vmatpush1.bf16.msra.mxu0 %v1460
    %2514 = vmatprep.subr.bf16.mxu0 %v1465
    %2515 = vmatpush1.bf16.msra.mxu0 %v1464
    %2516 = vmatprep.subr.bf16.mxu0 %v1469
    %2517 = vmatpush1.bf16.msra.mxu0 %v1468
    %2518 = vmatprep.subr.bf16.mxu0 %v1473
    %2519 = vmatpush1.bf16.msra.mxu0 %v1472
    %2520 = vmatprep.subr.bf16.mxu0 %v1477
    %2521 = vmatpush1.bf16.msra.mxu0 %v1476
    %2522 = vmatprep.subr.bf16.mxu0 %v1481
    %2523 = vmatpush1.bf16.msra.mxu0 %v1480
    %2524 = vmatprep.subr.bf16.mxu0 0
    %2525 = vmatpush1.bf16.msra.mxu0 0
    %2526 = vmatprep.subr.bf16.mxu0 0
    %2527 = vmatpush1.bf16.msra.mxu0 0
    %2528 = vmatprep.subr.bf16.mxu0 0
    %2529 = vmatpush1.bf16.msra.mxu0 0
    %2530 = vmatprep.subr.bf16.mxu0 0
    %2531 = vmatpush1.bf16.msra.mxu0 0
    %2532 = vmatprep.subr.bf16.mxu0 0
    %2533 = vmatpush1.bf16.msra.mxu0 0
    %2534 = vmatprep.subr.bf16.mxu0 0
    %2535 = vmatpush1.bf16.msra.mxu0 0
    %2536 = vmatprep.subr.bf16.mxu0 0
    %2537 = vmatpush1.bf16.msra.mxu0 0
    %2538 = vmatprep.subr.bf16.mxu0 0
    %2539 = vmatpush1.bf16.msra.mxu0 0
    %2540 = vmatprep.mubr.bf16.mxu0 0
    %2541 = vmatmul.mubr.bf16.gmra.mrb[0].mxu0 %v2507
    %v2542 = vpop.f32.mrb[0].mxu0
    %v2543 = vadd.f32 0.0, %v2542
    %v2544 = vpop.f32.mrb[0].mxu0
    %v2545 = vadd.f32 0.0, %v2544
    %v2546 = vpop.f32.mrb[0].mxu0
    %v2547 = vpop.f32.mrb[0].mxu0
    %2548 = vdwg.mxu0
    %2549 = vmatprep.subr.bf16.mxu0 %v1455
    %2550 = vmatpush1.bf16.msra.mxu0 %v1454
    %2551 = vmatprep.subr.bf16.mxu0 %v1459
    %2552 = vmatpush1.bf16.msra.mxu0 %v1458
    %2553 = vmatprep.subr.bf16.mxu0 %v1463
    %2554 = vmatpush1.bf16.msra.mxu0 %v1462
    %2555 = vmatprep.subr.bf16.mxu0 %v1467
    %2556 = vmatpush1.bf16.msra.mxu0 %v1466
    %2557 = vmatprep.subr.bf16.mxu0 %v1471
    %2558 = vmatpush1.bf16.msra.mxu0 %v1470
    %2559 = vmatprep.subr.bf16.mxu0 %v1475
    %2560 = vmatpush1.bf16.msra.mxu0 %v1474
    %2561 = vmatprep.subr.bf16.mxu0 %v1479
    %2562 = vmatpush1.bf16.msra.mxu0 %v1478
    %2563 = vmatprep.subr.bf16.mxu0 %v1483
    %2564 = vmatpush1.bf16.msra.mxu0 %v1482
    %2565 = vmatprep.subr.bf16.mxu0 0
    %2566 = vmatpush1.bf16.msra.mxu0 0
    %2567 = vmatprep.subr.bf16.mxu0 0
    %2568 = vmatpush1.bf16.msra.mxu0 0
    %2569 = vmatprep.subr.bf16.mxu0 0
    %2570 = vmatpush1.bf16.msra.mxu0 0
    %2571 = vmatprep.subr.bf16.mxu0 0
    %2572 = vmatpush1.bf16.msra.mxu0 0
    %2573 = vmatprep.subr.bf16.mxu0 0
    %2574 = vmatpush1.bf16.msra.mxu0 0
    %2575 = vmatprep.subr.bf16.mxu0 0
    %2576 = vmatpush1.bf16.msra.mxu0 0
    %2577 = vmatprep.subr.bf16.mxu0 0
    %2578 = vmatpush1.bf16.msra.mxu0 0
    %2579 = vmatprep.subr.bf16.mxu0 0
    %2580 = vmatpush1.bf16.msra.mxu0 0
    %2581 = vmatprep.mubr.bf16.mxu0 0
    %2582 = vmatmul.mubr.bf16.gmra.mrb[0].mxu0 %v2507
    %v2583 = vpop.f32.mrb[0].mxu0
    %v2584 = vadd.f32 0.0, %v2583
    %v2585 = vpop.f32.mrb[0].mxu0
    %v2586 = vadd.f32 0.0, %v2585
    %v2587 = vpop.f32.mrb[0].mxu0
    %v2588 = vpop.f32.mrb[0].mxu0
    %2589 = vdwg.mxu0
    %v2590 = vadd.f32 %v2503, %v2543
    %v2591 = vadd.f32 %v2504, %v2545
    %v2592 = vadd.f32 %v2505, %v2584
    %v2593 = vadd.f32 %v2506, %v2586
    %v2594 = vxor.u32 %v2590, 2147483648
    %v2595 = vxor.u32 %v2591, 2147483648
    %v2596 = vxor.u32 %v2592, 2147483648
    %v2597 = vmul.f32 %v2594, 1.442695
    %v2598 = vpow.pop %v2597
    %v2599 = vmul.f32 %v2595, 1.442695
    %v2600 = vpow.pop %v2599
    %v2601 = vmul.f32 %v2596, 1.442695
    %v2602 = vpow.pop %v2601
    %v2603 = vadd.f32 %v2598, 1.0
    %v2604 = vadd.f32 %v2600, 1.0
    %v2605 = vadd.f32 %v2602, 1.0
    %v2606 = vrcp.pop %v2603
    %v2607 = vmul.f32 1.0, %v2606
    %v2608 = vrcp.pop %v2604
    %v2609 = vmul.f32 1.0, %v2608
    %v2610 = vrcp.pop %v2605
    %v2611 = vmul.f32 1.0, %v2610
    %v2612 = vtanh.pop %v2593
    %v2613 = vmul.f32 %v2609, %v2372
    %v2614 = vmul.f32 %v2607, %v2612
    %v2615 = vadd.f32 %v2613, %v2614
    %v2616 = vtanh.pop %v2615
    %v2617 = vmul.f32 %v2611, %v2616
    %v2618 = vsel %vm2382, %v2617, 0.0
    %v2619 = vsel %vm2382, %v2617, %v2371
    %v2620 = vsel %vm2382, %v2615, %v2372
    %v2621 = vmax.f32 %v2373, %v2499
    %v2622 = vmax.f32 %v2374, %v2618
    %s2623 = sadd.s32 %s1056, 5
    %s2624 = sadd.s32 %s1058, 2
    %s2625 = scvt.s32.f32 %s2623
    %v2626 = vstv %s2625
    %vm2627 = vcmp.gt.f32.partialorder %v991, %v2626
    %s2628 = scvt.s32.f32 %s2624
    %v2629 = vstv %s2628
    %vm2630 = vcmp.gt.f32.partialorder %v991, %v2629
    %s2631 = scalar_lea.vmem [#allocation2], 160
    %v2632 = vld [vmem:[%s2631] sm:$0xff]
    %v2633 = vld [vmem:[%s2631 + $0x8] sm:$0xff]
    %v2634 = vld [vmem:[%s2631 + $0x10] sm:$0xff]
    %v2635 = vld [vmem:[%s2631 + $0x18] sm:$0xff]
    %v2636 = vpack.c.bf16 %v2500, %v2500
    %2637 = vmatprep.subr.bf16.mxu0 %v1174
    %2638 = vmatpush1.bf16.msra.mxu0 %v1173
    %2639 = vmatprep.subr.bf16.mxu0 %v1178
    %2640 = vmatpush1.bf16.msra.mxu0 %v1177
    %2641 = vmatprep.subr.bf16.mxu0 %v1182
    %2642 = vmatpush1.bf16.msra.mxu0 %v1181
    %2643 = vmatprep.subr.bf16.mxu0 %v1186
    %2644 = vmatpush1.bf16.msra.mxu0 %v1185
    %2645 = vmatprep.subr.bf16.mxu0 %v1190
    %2646 = vmatpush1.bf16.msra.mxu0 %v1189
    %2647 = vmatprep.subr.bf16.mxu0 %v1194
    %2648 = vmatpush1.bf16.msra.mxu0 %v1193
    %2649 = vmatprep.subr.bf16.mxu0 %v1198
    %2650 = vmatpush1.bf16.msra.mxu0 %v1197
    %2651 = vmatprep.subr.bf16.mxu0 %v1202
    %2652 = vmatpush1.bf16.msra.mxu0 %v1201
    %2653 = vmatprep.subr.bf16.mxu0 0
    %2654 = vmatpush1.bf16.msra.mxu0 0
    %2655 = vmatprep.subr.bf16.mxu0 0
    %2656 = vmatpush1.bf16.msra.mxu0 0
    %2657 = vmatprep.subr.bf16.mxu0 0
    %2658 = vmatpush1.bf16.msra.mxu0 0
    %2659 = vmatprep.subr.bf16.mxu0 0
    %2660 = vmatpush1.bf16.msra.mxu0 0
    %2661 = vmatprep.subr.bf16.mxu0 0
    %2662 = vmatpush1.bf16.msra.mxu0 0
    %2663 = vmatprep.subr.bf16.mxu0 0
    %2664 = vmatpush1.bf16.msra.mxu0 0
    %2665 = vmatprep.subr.bf16.mxu0 0
    %2666 = vmatpush1.bf16.msra.mxu0 0
    %2667 = vmatprep.subr.bf16.mxu0 0
    %2668 = vmatpush1.bf16.msra.mxu0 0
    %2669 = vmatprep.mubr.bf16.mxu0 0
    %2670 = vmatmul.mubr.bf16.gmra.mrb[0].mxu0 %v2636
    %v2671 = vpop.f32.mrb[0].mxu0
    %v2672 = vadd.f32 0.0, %v2671
    %v2673 = vpop.f32.mrb[0].mxu0
    %v2674 = vadd.f32 0.0, %v2673
    %v2675 = vpop.f32.mrb[0].mxu0
    %v2676 = vpop.f32.mrb[0].mxu0
    %2677 = vdwg.mxu0
    %2678 = vmatprep.subr.bf16.mxu0 %v1176
    %2679 = vmatpush1.bf16.msra.mxu0 %v1175
    %2680 = vmatprep.subr.bf16.mxu0 %v1180
    %2681 = vmatpush1.bf16.msra.mxu0 %v1179
    %2682 = vmatprep.subr.bf16.mxu0 %v1184
    %2683 = vmatpush1.bf16.msra.mxu0 %v1183
    %2684 = vmatprep.subr.bf16.mxu0 %v1188
    %2685 = vmatpush1.bf16.msra.mxu0 %v1187
    %2686 = vmatprep.subr.bf16.mxu0 %v1192
    %2687 = vmatpush1.bf16.msra.mxu0 %v1191
    %2688 = vmatprep.subr.bf16.mxu0 %v1196
    %2689 = vmatpush1.bf16.msra.mxu0 %v1195
    %2690 = vmatprep.subr.bf16.mxu0 %v1200
    %2691 = vmatpush1.bf16.msra.mxu0 %v1199
    %2692 = vmatprep.subr.bf16.mxu0 %v1204
    %2693 = vmatpush1.bf16.msra.mxu0 %v1203
    %2694 = vmatprep.subr.bf16.mxu0 0
    %2695 = vmatpush1.bf16.msra.mxu0 0
    %2696 = vmatprep.subr.bf16.mxu0 0
    %2697 = vmatpush1.bf16.msra.mxu0 0
    %2698 = vmatprep.subr.bf16.mxu0 0
    %2699 = vmatpush1.bf16.msra.mxu0 0
    %2700 = vmatprep.subr.bf16.mxu0 0
    %2701 = vmatpush1.bf16.msra.mxu0 0
    %2702 = vmatprep.subr.bf16.mxu0 0
    %2703 = vmatpush1.bf16.msra.mxu0 0
    %2704 = vmatprep.subr.bf16.mxu0 0
    %2705 = vmatpush1.bf16.msra.mxu0 0
    %2706 = vmatprep.subr.bf16.mxu0 0
    %2707 = vmatpush1.bf16.msra.mxu0 0
    %2708 = vmatprep.subr.bf16.mxu0 0
    %2709 = vmatpush1.bf16.msra.mxu0 0
    %2710 = vmatprep.mubr.bf16.mxu0 0
    %2711 = vmatmul.mubr.bf16.gmra.mrb[0].mxu0 %v2636
    %v2712 = vpop.f32.mrb[0].mxu0
    %v2713 = vadd.f32 0.0, %v2712
    %v2714 = vpop.f32.mrb[0].mxu0
    %v2715 = vadd.f32 0.0, %v2714
    %v2716 = vpop.f32.mrb[0].mxu0
    %v2717 = vpop.f32.mrb[0].mxu0
    %2718 = vdwg.mxu0
    %v2719 = vadd.f32 %v2632, %v2672
    %v2720 = vadd.f32 %v2633, %v2674
    %v2721 = vadd.f32 %v2634, %v2713
    %v2722 = vadd.f32 %v2635, %v2715
    %v2723 = vxor.u32 %v2719, 2147483648
    %v2724 = vxor.u32 %v2720, 2147483648
    %v2725 = vxor.u32 %v2721, 2147483648
    %v2726 = vmul.f32 %v2723, 1.442695
    %v2727 = vpow.pop %v2726
    %v2728 = vmul.f32 %v2724, 1.442695
    %v2729 = vpow.pop %v2728
    %v2730 = vmul.f32 %v2725, 1.442695
    %v2731 = vpow.pop %v2730
    %v2732 = vadd.f32 %v2727, 1.0
    %v2733 = vadd.f32 %v2729, 1.0
    %v2734 = vadd.f32 %v2731, 1.0
    %v2735 = vrcp.pop %v2732
    %v2736 = vmul.f32 1.0, %v2735
    %v2737 = vrcp.pop %v2733
    %v2738 = vmul.f32 1.0, %v2737
    %v2739 = vrcp.pop %v2734
    %v2740 = vmul.f32 1.0, %v2739
    %v2741 = vtanh.pop %v2722
    %v2742 = vmul.f32 %v2738, %v2501
    %v2743 = vmul.f32 %v2736, %v2741
    %v2744 = vadd.f32 %v2742, %v2743
    %v2745 = vtanh.pop %v2744
    %v2746 = vmul.f32 %v2740, %v2745
    %v2747 = vsel %vm2627, %v2746, 0.0
    %v2748 = vsel %vm2627, %v2746, %v2500
    %v2749 = vsel %vm2627, %v2744, %v2501
    %s2750 = scalar_lea.vmem [#allocation3], 64
    %v2751 = vld [vmem:[%s2750] sm:$0xff]
    %v2752 = vld [vmem:[%s2750 + $0x8] sm:$0xff]
    %v2753 = vld [vmem:[%s2750 + $0x10] sm:$0xff]
    %v2754 = vld [vmem:[%s2750 + $0x18] sm:$0xff]
    %v2755 = vpack.c.bf16 %v2619, %v2619
    %2756 = vmatprep.subr.bf16.mxu0 %v1453
    %2757 = vmatpush1.bf16.msra.mxu0 %v1452
    %2758 = vmatprep.subr.bf16.mxu0 %v1457
    %2759 = vmatpush1.bf16.msra.mxu0 %v1456
    %2760 = vmatprep.subr.bf16.mxu0 %v1461
    %2761 = vmatpush1.bf16.msra.mxu0 %v1460
    %2762 = vmatprep.subr.bf16.mxu0 %v1465
    %2763 = vmatpush1.bf16.msra.mxu0 %v1464
    %2764 = vmatprep.subr.bf16.mxu0 %v1469
    %2765 = vmatpush1.bf16.msra.mxu0 %v1468
    %2766 = vmatprep.subr.bf16.mxu0 %v1473
    %2767 = vmatpush1.bf16.msra.mxu0 %v1472
    %2768 = vmatprep.subr.bf16.mxu0 %v1477
    %2769 = vmatpush1.bf16.msra.mxu0 %v1476
    %2770 = vmatprep.subr.bf16.mxu0 %v1481
    %2771 = vmatpush1.bf16.msra.mxu0 %v1480
    %2772 = vmatprep.subr.bf16.mxu0 0
    %2773 = vmatpush1.bf16.msra.mxu0 0
    %2774 = vmatprep.subr.bf16.mxu0 0
    %2775 = vmatpush1.bf16.msra.mxu0 0
    %2776 = vmatprep.subr.bf16.mxu0 0
    %2777 = vmatpush1.bf16.msra.mxu0 0
    %2778 = vmatprep.subr.bf16.mxu0 0
    %2779 = vmatpush1.bf16.msra.mxu0 0
    %2780 = vmatprep.subr.bf16.mxu0 0
    %2781 = vmatpush1.bf16.msra.mxu0 0
    %2782 = vmatprep.subr.bf16.mxu0 0
    %2783 = vmatpush1.bf16.msra.mxu0 0
    %2784 = vmatprep.subr.bf16.mxu0 0
    %2785 = vmatpush1.bf16.msra.mxu0 0
    %2786 = vmatprep.subr.bf16.mxu0 0
    %2787 = vmatpush1.bf16.msra.mxu0 0
    %2788 = vmatprep.mubr.bf16.mxu0 0
    %2789 = vmatmul.mubr.bf16.gmra.mrb[0].mxu0 %v2755
    %v2790 = vpop.f32.mrb[0].mxu0
    %v2791 = vadd.f32 0.0, %v2790
    %v2792 = vpop.f32.mrb[0].mxu0
    %v2793 = vadd.f32 0.0, %v2792
    %v2794 = vpop.f32.mrb[0].mxu0
    %v2795 = vpop.f32.mrb[0].mxu0
    %2796 = vdwg.mxu0
    %2797 = vmatprep.subr.bf16.mxu0 %v1455
    %2798 = vmatpush1.bf16.msra.mxu0 %v1454
    %2799 = vmatprep.subr.bf16.mxu0 %v1459
    %2800 = vmatpush1.bf16.msra.mxu0 %v1458
    %2801 = vmatprep.subr.bf16.mxu0 %v1463
    %2802 = vmatpush1.bf16.msra.mxu0 %v1462
    %2803 = vmatprep.subr.bf16.mxu0 %v1467
    %2804 = vmatpush1.bf16.msra.mxu0 %v1466
    %2805 = vmatprep.subr.bf16.mxu0 %v1471
    %2806 = vmatpush1.bf16.msra.mxu0 %v1470
    %2807 = vmatprep.subr.bf16.mxu0 %v1475
    %2808 = vmatpush1.bf16.msra.mxu0 %v1474
    %2809 = vmatprep.subr.bf16.mxu0 %v1479
    %2810 = vmatpush1.bf16.msra.mxu0 %v1478
    %2811 = vmatprep.subr.bf16.mxu0 %v1483
    %2812 = vmatpush1.bf16.msra.mxu0 %v1482
    %2813 = vmatprep.subr.bf16.mxu0 0
    %2814 = vmatpush1.bf16.msra.mxu0 0
    %2815 = vmatprep.subr.bf16.mxu0 0
    %2816 = vmatpush1.bf16.msra.mxu0 0
    %2817 = vmatprep.subr.bf16.mxu0 0
    %2818 = vmatpush1.bf16.msra.mxu0 0
    %2819 = vmatprep.subr.bf16.mxu0 0
    %2820 = vmatpush1.bf16.msra.mxu0 0
    %2821 = vmatprep.subr.bf16.mxu0 0
    %2822 = vmatpush1.bf16.msra.mxu0 0
    %2823 = vmatprep.subr.bf16.mxu0 0
    %2824 = vmatpush1.bf16.msra.mxu0 0
    %2825 = vmatprep.subr.bf16.mxu0 0
    %2826 = vmatpush1.bf16.msra.mxu0 0
    %2827 = vmatprep.subr.bf16.mxu0 0
    %2828 = vmatpush1.bf16.msra.mxu0 0
    %2829 = vmatprep.mubr.bf16.mxu0 0
    %2830 = vmatmul.mubr.bf16.gmra.mrb[0].mxu0 %v2755
    %v2831 = vpop.f32.mrb[0].mxu0
    %v2832 = vadd.f32 0.0, %v2831
    %v2833 = vpop.f32.mrb[0].mxu0
    %v2834 = vadd.f32 0.0, %v2833
    %v2835 = vpop.f32.mrb[0].mxu0
    %v2836 = vpop.f32.mrb[0].mxu0
    %2837 = vdwg.mxu0
    %v2838 = vadd.f32 %v2751, %v2791
    %v2839 = vadd.f32 %v2752, %v2793
    %v2840 = vadd.f32 %v2753, %v2832
    %v2841 = vadd.f32 %v2754, %v2834
    %v2842 = vxor.u32 %v2838, 2147483648
    %v2843 = vxor.u32 %v2839, 2147483648
    %v2844 = vxor.u32 %v2840, 2147483648
    %v2845 = vmul.f32 %v2842, 1.442695
    %v2846 = vpow.pop %v2845
    %v2847 = vmul.f32 %v2843, 1.442695
    %v2848 = vpow.pop %v2847
    %v2849 = vmul.f32 %v2844, 1.442695
    %v2850 = vpow.pop %v2849
    %v2851 = vadd.f32 %v2846, 1.0
    %v2852 = vadd.f32 %v2848, 1.0
    %v2853 = vadd.f32 %v2850, 1.0
    %v2854 = vrcp.pop %v2851
    %v2855 = vmul.f32 1.0, %v2854
    %v2856 = vrcp.pop %v2852
    %v2857 = vmul.f32 1.0, %v2856
    %v2858 = vrcp.pop %v2853
    %v2859 = vmul.f32 1.0, %v2858
    %v2860 = vtanh.pop %v2841
    %v2861 = vmul.f32 %v2857, %v2620
    %v2862 = vmul.f32 %v2855, %v2860
    %v2863 = vadd.f32 %v2861, %v2862
    %v2864 = vtanh.pop %v2863
    %v2865 = vmul.f32 %v2859, %v2864
    %v2866 = vsel %vm2630, %v2865, 0.0
    %v2867 = vsel %vm2630, %v2865, %v2619
    %v2868 = vsel %vm2630, %v2863, %v2620
    %v2869 = vmax.f32 %v2621, %v2747
    %v2870 = vmax.f32 %v2622, %v2866
    %s2871 = sadd.s32 %s1056, 6
    %s2872 = sadd.s32 %s1058, 1
    %s2873 = scvt.s32.f32 %s2871
    %v2874 = vstv %s2873
    %vm2875 = vcmp.gt.f32.partialorder %v991, %v2874
    %s2876 = scvt.s32.f32 %s2872
    %v2877 = vstv %s2876
    %vm2878 = vcmp.gt.f32.partialorder %v991, %v2877
    %s2879 = scalar_lea.vmem [#allocation2], 192
    %v2880 = vld [vmem:[%s2879] sm:$0xff]
    %v2881 = vld [vmem:[%s2879 + $0x8] sm:$0xff]
    %v2882 = vld [vmem:[%s2879 + $0x10] sm:$0xff]
    %v2883 = vld [vmem:[%s2879 + $0x18] sm:$0xff]
    %v2884 = vpack.c.bf16 %v2748, %v2748
    %2885 = vmatprep.subr.bf16.mxu0 %v1174
    %2886 = vmatpush1.bf16.msra.mxu0 %v1173
    %2887 = vmatprep.subr.bf16.mxu0 %v1178
    %2888 = vmatpush1.bf16.msra.mxu0 %v1177
    %2889 = vmatprep.subr.bf16.mxu0 %v1182
    %2890 = vmatpush1.bf16.msra.mxu0 %v1181
    %2891 = vmatprep.subr.bf16.mxu0 %v1186
    %2892 = vmatpush1.bf16.msra.mxu0 %v1185
    %2893 = vmatprep.subr.bf16.mxu0 %v1190
    %2894 = vmatpush1.bf16.msra.mxu0 %v1189
    %2895 = vmatprep.subr.bf16.mxu0 %v1194
    %2896 = vmatpush1.bf16.msra.mxu0 %v1193
    %2897 = vmatprep.subr.bf16.mxu0 %v1198
    %2898 = vmatpush1.bf16.msra.mxu0 %v1197
    %2899 = vmatprep.subr.bf16.mxu0 %v1202
    %2900 = vmatpush1.bf16.msra.mxu0 %v1201
    %2901 = vmatprep.subr.bf16.mxu0 0
    %2902 = vmatpush1.bf16.msra.mxu0 0
    %2903 = vmatprep.subr.bf16.mxu0 0
    %2904 = vmatpush1.bf16.msra.mxu0 0
    %2905 = vmatprep.subr.bf16.mxu0 0
    %2906 = vmatpush1.bf16.msra.mxu0 0
    %2907 = vmatprep.subr.bf16.mxu0 0
    %2908 = vmatpush1.bf16.msra.mxu0 0
    %2909 = vmatprep.subr.bf16.mxu0 0
    %2910 = vmatpush1.bf16.msra.mxu0 0
    %2911 = vmatprep.subr.bf16.mxu0 0
    %2912 = vmatpush1.bf16.msra.mxu0 0
    %2913 = vmatprep.subr.bf16.mxu0 0
    %2914 = vmatpush1.bf16.msra.mxu0 0
    %2915 = vmatprep.subr.bf16.mxu0 0
    %2916 = vmatpush1.bf16.msra.mxu0 0
    %2917 = vmatprep.mubr.bf16.mxu0 0
    %2918 = vmatmul.mubr.bf16.gmra.mrb[0].mxu0 %v2884
    %v2919 = vpop.f32.mrb[0].mxu0
    %v2920 = vadd.f32 0.0, %v2919
    %v2921 = vpop.f32.mrb[0].mxu0
    %v2922 = vadd.f32 0.0, %v2921
    %v2923 = vpop.f32.mrb[0].mxu0
    %v2924 = vpop.f32.mrb[0].mxu0
    %2925 = vdwg.mxu0
    %2926 = vmatprep.subr.bf16.mxu0 %v1176
    %2927 = vmatpush1.bf16.msra.mxu0 %v1175
    %2928 = vmatprep.subr.bf16.mxu0 %v1180
    %2929 = vmatpush1.bf16.msra.mxu0 %v1179
    %2930 = vmatprep.subr.bf16.mxu0 %v1184
    %2931 = vmatpush1.bf16.msra.mxu0 %v1183
    %2932 = vmatprep.subr.bf16.mxu0 %v1188
    %2933 = vmatpush1.bf16.msra.mxu0 %v1187
    %2934 = vmatprep.subr.bf16.mxu0 %v1192
    %2935 = vmatpush1.bf16.msra.mxu0 %v1191
    %2936 = vmatprep.subr.bf16.mxu0 %v1196
    %2937 = vmatpush1.bf16.msra.mxu0 %v1195
    %2938 = vmatprep.subr.bf16.mxu0 %v1200
    %2939 = vmatpush1.bf16.msra.mxu0 %v1199
    %2940 = vmatprep.subr.bf16.mxu0 %v1204
    %2941 = vmatpush1.bf16.msra.mxu0 %v1203
    %2942 = vmatprep.subr.bf16.mxu0 0
    %2943 = vmatpush1.bf16.msra.mxu0 0
    %2944 = vmatprep.subr.bf16.mxu0 0
    %2945 = vmatpush1.bf16.msra.mxu0 0
    %2946 = vmatprep.subr.bf16.mxu0 0
    %2947 = vmatpush1.bf16.msra.mxu0 0
    %2948 = vmatprep.subr.bf16.mxu0 0
    %2949 = vmatpush1.bf16.msra.mxu0 0
    %2950 = vmatprep.subr.bf16.mxu0 0
    %2951 = vmatpush1.bf16.msra.mxu0 0
    %2952 = vmatprep.subr.bf16.mxu0 0
    %2953 = vmatpush1.bf16.msra.mxu0 0
    %2954 = vmatprep.subr.bf16.mxu0 0
    %2955 = vmatpush1.bf16.msra.mxu0 0
    %2956 = vmatprep.subr.bf16.mxu0 0
    %2957 = vmatpush1.bf16.msra.mxu0 0
    %2958 = vmatprep.mubr.bf16.mxu0 0
    %2959 = vmatmul.mubr.bf16.gmra.mrb[0].mxu0 %v2884
    %v2960 = vpop.f32.mrb[0].mxu0
    %v2961 = vadd.f32 0.0, %v2960
    %v2962 = vpop.f32.mrb[0].mxu0
    %v2963 = vadd.f32 0.0, %v2962
    %v2964 = vpop.f32.mrb[0].mxu0
    %v2965 = vpop.f32.mrb[0].mxu0
    %2966 = vdwg.mxu0
    %v2967 = vadd.f32 %v2880, %v2920
    %v2968 = vadd.f32 %v2881, %v2922
    %v2969 = vadd.f32 %v2882, %v2961
    %v2970 = vadd.f32 %v2883, %v2963
    %v2971 = vxor.u32 %v2967, 2147483648
    %v2972 = vxor.u32 %v2968, 2147483648
    %v2973 = vxor.u32 %v2969, 2147483648
    %v2974 = vmul.f32 %v2971, 1.442695
    %v2975 = vpow.pop %v2974
    %v2976 = vmul.f32 %v2972, 1.442695
    %v2977 = vpow.pop %v2976
    %v2978 = vmul.f32 %v2973, 1.442695
    %v2979 = vpow.pop %v2978
    %v2980 = vadd.f32 %v2975, 1.0
    %v2981 = vadd.f32 %v2977, 1.0
    %v2982 = vadd.f32 %v2979, 1.0
    %v2983 = vrcp.pop %v2980
    %v2984 = vmul.f32 1.0, %v2983
    %v2985 = vrcp.pop %v2981
    %v2986 = vmul.f32 1.0, %v2985
    %v2987 = vrcp.pop %v2982
    %v2988 = vmul.f32 1.0, %v2987
    %v2989 = vtanh.pop %v2970
    %v2990 = vmul.f32 %v2986, %v2749
    %v2991 = vmul.f32 %v2984, %v2989
    %v2992 = vadd.f32 %v2990, %v2991
    %v2993 = vtanh.pop %v2992
    %v2994 = vmul.f32 %v2988, %v2993
    %v2995 = vsel %vm2875, %v2994, 0.0
    %v2996 = vsel %vm2875, %v2994, %v2748
    %v2997 = vsel %vm2875, %v2992, %v2749
    %s2998 = scalar_lea.vmem [#allocation3], 32
    %v2999 = vld [vmem:[%s2998] sm:$0xff]
    %v3000 = vld [vmem:[%s2998 + $0x8] sm:$0xff]
    %v3001 = vld [vmem:[%s2998 + $0x10] sm:$0xff]
    %v3002 = vld [vmem:[%s2998 + $0x18] sm:$0xff]
    %v3003 = vpack.c.bf16 %v2867, %v2867
    %3004 = vmatprep.subr.bf16.mxu0 %v1453
    %3005 = vmatpush1.bf16.msra.mxu0 %v1452
    %3006 = vmatprep.subr.bf16.mxu0 %v1457
    %3007 = vmatpush1.bf16.msra.mxu0 %v1456
    %3008 = vmatprep.subr.bf16.mxu0 %v1461
    %3009 = vmatpush1.bf16.msra.mxu0 %v1460
    %3010 = vmatprep.subr.bf16.mxu0 %v1465
    %3011 = vmatpush1.bf16.msra.mxu0 %v1464
    %3012 = vmatprep.subr.bf16.mxu0 %v1469
    %3013 = vmatpush1.bf16.msra.mxu0 %v1468
    %3014 = vmatprep.subr.bf16.mxu0 %v1473
    %3015 = vmatpush1.bf16.msra.mxu0 %v1472
    %3016 = vmatprep.subr.bf16.mxu0 %v1477
    %3017 = vmatpush1.bf16.msra.mxu0 %v1476
    %3018 = vmatprep.subr.bf16.mxu0 %v1481
    %3019 = vmatpush1.bf16.msra.mxu0 %v1480
    %3020 = vmatprep.subr.bf16.mxu0 0
    %3021 = vmatpush1.bf16.msra.mxu0 0
    %3022 = vmatprep.subr.bf16.mxu0 0
    %3023 = vmatpush1.bf16.msra.mxu0 0
    %3024 = vmatprep.subr.bf16.mxu0 0
    %3025 = vmatpush1.bf16.msra.mxu0 0
    %3026 = vmatprep.subr.bf16.mxu0 0
    %3027 = vmatpush1.bf16.msra.mxu0 0
    %3028 = vmatprep.subr.bf16.mxu0 0
    %3029 = vmatpush1.bf16.msra.mxu0 0
    %3030 = vmatprep.subr.bf16.mxu0 0
    %3031 = vmatpush1.bf16.msra.mxu0 0
    %3032 = vmatprep.subr.bf16.mxu0 0
    %3033 = vmatpush1.bf16.msra.mxu0 0
    %3034 = vmatprep.subr.bf16.mxu0 0
    %3035 = vmatpush1.bf16.msra.mxu0 0
    %3036 = vmatprep.mubr.bf16.mxu0 0
    %3037 = vmatmul.mubr.bf16.gmra.mrb[0].mxu0 %v3003
    %v3038 = vpop.f32.mrb[0].mxu0
    %v3039 = vadd.f32 0.0, %v3038
    %v3040 = vpop.f32.mrb[0].mxu0
    %v3041 = vadd.f32 0.0, %v3040
    %v3042 = vpop.f32.mrb[0].mxu0
    %v3043 = vpop.f32.mrb[0].mxu0
    %3044 = vdwg.mxu0
    %3045 = vmatprep.subr.bf16.mxu0 %v1455
    %3046 = vmatpush1.bf16.msra.mxu0 %v1454
    %3047 = vmatprep.subr.bf16.mxu0 %v1459
    %3048 = vmatpush1.bf16.msra.mxu0 %v1458
    %3049 = vmatprep.subr.bf16.mxu0 %v1463
    %3050 = vmatpush1.bf16.msra.mxu0 %v1462
    %3051 = vmatprep.subr.bf16.mxu0 %v1467
    %3052 = vmatpush1.bf16.msra.mxu0 %v1466
    %3053 = vmatprep.subr.bf16.mxu0 %v1471
    %3054 = vmatpush1.bf16.msra.mxu0 %v1470
    %3055 = vmatprep.subr.bf16.mxu0 %v1475
    %3056 = vmatpush1.bf16.msra.mxu0 %v1474
    %3057 = vmatprep.subr.bf16.mxu0 %v1479
    %3058 = vmatpush1.bf16.msra.mxu0 %v1478
    %3059 = vmatprep.subr.bf16.mxu0 %v1483
    %3060 = vmatpush1.bf16.msra.mxu0 %v1482
    %3061 = vmatprep.subr.bf16.mxu0 0
    %3062 = vmatpush1.bf16.msra.mxu0 0
    %3063 = vmatprep.subr.bf16.mxu0 0
    %3064 = vmatpush1.bf16.msra.mxu0 0
    %3065 = vmatprep.subr.bf16.mxu0 0
    %3066 = vmatpush1.bf16.msra.mxu0 0
    %3067 = vmatprep.subr.bf16.mxu0 0
    %3068 = vmatpush1.bf16.msra.mxu0 0
    %3069 = vmatprep.subr.bf16.mxu0 0
    %3070 = vmatpush1.bf16.msra.mxu0 0
    %3071 = vmatprep.subr.bf16.mxu0 0
    %3072 = vmatpush1.bf16.msra.mxu0 0
    %3073 = vmatprep.subr.bf16.mxu0 0
    %3074 = vmatpush1.bf16.msra.mxu0 0
    %3075 = vmatprep.subr.bf16.mxu0 0
    %3076 = vmatpush1.bf16.msra.mxu0 0
    %3077 = vmatprep.mubr.bf16.mxu0 0
    %3078 = vmatmul.mubr.bf16.gmra.mrb[0].mxu0 %v3003
    %v3079 = vpop.f32.mrb[0].mxu0
    %v3080 = vadd.f32 0.0, %v3079
    %v3081 = vpop.f32.mrb[0].mxu0
    %v3082 = vadd.f32 0.0, %v3081
    %v3083 = vpop.f32.mrb[0].mxu0
    %v3084 = vpop.f32.mrb[0].mxu0
    %3085 = vdwg.mxu0
    %v3086 = vadd.f32 %v2999, %v3039
    %v3087 = vadd.f32 %v3000, %v3041
    %v3088 = vadd.f32 %v3001, %v3080
    %v3089 = vadd.f32 %v3002, %v3082
    %v3090 = vxor.u32 %v3086, 2147483648
    %v3091 = vxor.u32 %v3087, 2147483648
    %v3092 = vxor.u32 %v3088, 2147483648
    %v3093 = vmul.f32 %v3090, 1.442695
    %v3094 = vpow.pop %v3093
    %v3095 = vmul.f32 %v3091, 1.442695
    %v3096 = vpow.pop %v3095
    %v3097 = vmul.f32 %v3092, 1.442695
    %v3098 = vpow.pop %v3097
    %v3099 = vadd.f32 %v3094, 1.0
    %v3100 = vadd.f32 %v3096, 1.0
    %v3101 = vadd.f32 %v3098, 1.0
    %v3102 = vrcp.pop %v3099
    %v3103 = vmul.f32 1.0, %v3102
    %v3104 = vrcp.pop %v3100
    %v3105 = vmul.f32 1.0, %v3104
    %v3106 = vrcp.pop %v3101
    %v3107 = vmul.f32 1.0, %v3106
    %v3108 = vtanh.pop %v3089
    %v3109 = vmul.f32 %v3105, %v2868
    %v3110 = vmul.f32 %v3103, %v3108
    %v3111 = vadd.f32 %v3109, %v3110
    %v3112 = vtanh.pop %v3111
    %v3113 = vmul.f32 %v3107, %v3112
    %v3114 = vsel %vm2878, %v3113, 0.0
    %v3115 = vsel %vm2878, %v3113, %v2867
    %v3116 = vsel %vm2878, %v3111, %v2868
    %v3117 = vmax.f32 %v2869, %v2995
    %v3118 = vmax.f32 %v2870, %v3114
    %s3119 = sadd.s32 %s1056, 7
    %s3120 = scvt.s32.f32 %s3119
    %v3121 = vstv %s3120
    %vm3122 = vcmp.gt.f32.partialorder %v991, %v3121
    %s3123 = scvt.s32.f32 %s1058
    %v3124 = vstv %s3123
    %vm3125 = vcmp.gt.f32.partialorder %v991, %v3124
    %s3126 = scalar_lea.vmem [#allocation2], 224
    %v3127 = vld [vmem:[%s3126] sm:$0xff]
    %v3128 = vld [vmem:[%s3126 + $0x8] sm:$0xff]
    %v3129 = vld [vmem:[%s3126 + $0x10] sm:$0xff]
    %v3130 = vld [vmem:[%s3126 + $0x18] sm:$0xff]
    %v3131 = vpack.c.bf16 %v2996, %v2996
    %3132 = vmatprep.subr.bf16.mxu0 %v1174
    %3133 = vmatpush1.bf16.msra.mxu0 %v1173
    %3134 = vmatprep.subr.bf16.mxu0 %v1178
    %3135 = vmatpush1.bf16.msra.mxu0 %v1177
    %3136 = vmatprep.subr.bf16.mxu0 %v1182
    %3137 = vmatpush1.bf16.msra.mxu0 %v1181
    %3138 = vmatprep.subr.bf16.mxu0 %v1186
    %3139 = vmatpush1.bf16.msra.mxu0 %v1185
    %3140 = vmatprep.subr.bf16.mxu0 %v1190
    %3141 = vmatpush1.bf16.msra.mxu0 %v1189
    %3142 = vmatprep.subr.bf16.mxu0 %v1194
    %3143 = vmatpush1.bf16.msra.mxu0 %v1193
    %3144 = vmatprep.subr.bf16.mxu0 %v1198
    %3145 = vmatpush1.bf16.msra.mxu0 %v1197
    %3146 = vmatprep.subr.bf16.mxu0 %v1202
    %3147 = vmatpush1.bf16.msra.mxu0 %v1201
    %3148 = vmatprep.subr.bf16.mxu0 0
    %3149 = vmatpush1.bf16.msra.mxu0 0
    %3150 = vmatprep.subr.bf16.mxu0 0
    %3151 = vmatpush1.bf16.msra.mxu0 0
    %3152 = vmatprep.subr.bf16.mxu0 0
    %3153 = vmatpush1.bf16.msra.mxu0 0
    %3154 = vmatprep.subr.bf16.mxu0 0
    %3155 = vmatpush1.bf16.msra.mxu0 0
    %3156 = vmatprep.subr.bf16.mxu0 0
    %3157 = vmatpush1.bf16.msra.mxu0 0
    %3158 = vmatprep.subr.bf16.mxu0 0
    %3159 = vmatpush1.bf16.msra.mxu0 0
    %3160 = vmatprep.subr.bf16.mxu0 0
    %3161 = vmatpush1.bf16.msra.mxu0 0
    %3162 = vmatprep.subr.bf16.mxu0 0
    %3163 = vmatpush1.bf16.msra.mxu0 0
    %3164 = vmatprep.mubr.bf16.mxu0 0
    %3165 = vmatmul.mubr.bf16.gmra.mrb[0].mxu0 %v3131
    %v3166 = vpop.f32.mrb[0].mxu0
    %v3167 = vadd.f32 0.0, %v3166
    %v3168 = vpop.f32.mrb[0].mxu0
    %v3169 = vadd.f32 0.0, %v3168
    %v3170 = vpop.f32.mrb[0].mxu0
    %v3171 = vpop.f32.mrb[0].mxu0
    %3172 = vdwg.mxu0
    %3173 = vmatprep.subr.bf16.mxu0 %v1176
    %3174 = vmatpush1.bf16.msra.mxu0 %v1175
    %3175 = vmatprep.subr.bf16.mxu0 %v1180
    %3176 = vmatpush1.bf16.msra.mxu0 %v1179
    %3177 = vmatprep.subr.bf16.mxu0 %v1184
    %3178 = vmatpush1.bf16.msra.mxu0 %v1183
    %3179 = vmatprep.subr.bf16.mxu0 %v1188
    %3180 = vmatpush1.bf16.msra.mxu0 %v1187
    %3181 = vmatprep.subr.bf16.mxu0 %v1192
    %3182 = vmatpush1.bf16.msra.mxu0 %v1191
    %3183 = vmatprep.subr.bf16.mxu0 %v1196
    %3184 = vmatpush1.bf16.msra.mxu0 %v1195
    %3185 = vmatprep.subr.bf16.mxu0 %v1200
    %3186 = vmatpush1.bf16.msra.mxu0 %v1199
    %3187 = vmatprep.subr.bf16.mxu0 %v1204
    %3188 = vmatpush1.bf16.msra.mxu0 %v1203
    %3189 = vmatprep.subr.bf16.mxu0 0
    %3190 = vmatpush1.bf16.msra.mxu0 0
    %3191 = vmatprep.subr.bf16.mxu0 0
    %3192 = vmatpush1.bf16.msra.mxu0 0
    %3193 = vmatprep.subr.bf16.mxu0 0
    %3194 = vmatpush1.bf16.msra.mxu0 0
    %3195 = vmatprep.subr.bf16.mxu0 0
    %3196 = vmatpush1.bf16.msra.mxu0 0
    %3197 = vmatprep.subr.bf16.mxu0 0
    %3198 = vmatpush1.bf16.msra.mxu0 0
    %3199 = vmatprep.subr.bf16.mxu0 0
    %3200 = vmatpush1.bf16.msra.mxu0 0
    %3201 = vmatprep.subr.bf16.mxu0 0
    %3202 = vmatpush1.bf16.msra.mxu0 0
    %3203 = vmatprep.subr.bf16.mxu0 0
    %3204 = vmatpush1.bf16.msra.mxu0 0
    %3205 = vmatprep.mubr.bf16.mxu0 0
    %3206 = vmatmul.mubr.bf16.gmra.mrb[0].mxu0 %v3131
    %v3207 = vpop.f32.mrb[0].mxu0
    %v3208 = vadd.f32 0.0, %v3207
    %v3209 = vpop.f32.mrb[0].mxu0
    %v3210 = vadd.f32 0.0, %v3209
    %v3211 = vpop.f32.mrb[0].mxu0
    %v3212 = vpop.f32.mrb[0].mxu0
    %3213 = vdwg.mxu0
    %v3214 = vadd.f32 %v3127, %v3167
    %v3215 = vadd.f32 %v3128, %v3169
    %v3216 = vadd.f32 %v3129, %v3208
    %v3217 = vadd.f32 %v3130, %v3210
    %v3218 = vxor.u32 %v3214, 2147483648
    %v3219 = vxor.u32 %v3215, 2147483648
    %v3220 = vxor.u32 %v3216, 2147483648
    %v3221 = vmul.f32 %v3218, 1.442695
    %v3222 = vpow.pop %v3221
    %v3223 = vmul.f32 %v3219, 1.442695
    %v3224 = vpow.pop %v3223
    %v3225 = vmul.f32 %v3220, 1.442695
    %v3226 = vpow.pop %v3225
    %v3227 = vadd.f32 %v3222, 1.0
    %v3228 = vadd.f32 %v3224, 1.0
    %v3229 = vadd.f32 %v3226, 1.0
    %v3230 = vrcp.pop %v3227
    %v3231 = vmul.f32 1.0, %v3230
    %v3232 = vrcp.pop %v3228
    %v3233 = vmul.f32 1.0, %v3232
    %v3234 = vrcp.pop %v3229
    %v3235 = vmul.f32 1.0, %v3234
    %v3236 = vtanh.pop %v3217
    %v3237 = vmul.f32 %v3233, %v2997
    %v3238 = vmul.f32 %v3231, %v3236
    %v3239 = vadd.f32 %v3237, %v3238
    %v3240 = vtanh.pop %v3239
    %v3241 = vmul.f32 %v3235, %v3240
    %v3242 = vsel %vm3122, %v3241, 0.0
    %v3243 = vsel %vm3122, %v3241, %v2996
    %v3244 = vsel %vm3122, %v3239, %v2997
    %v3245 = vld [vmem:[#allocation3] sm:$0xff]
    %v3246 = vld [vmem:[#allocation3 + $0x8] sm:$0xff]
    %v3247 = vld [vmem:[#allocation3 + $0x10] sm:$0xff]
    %v3248 = vld [vmem:[#allocation3 + $0x18] sm:$0xff]
    %v3249 = vpack.c.bf16 %v3115, %v3115
    %3250 = vmatprep.subr.bf16.mxu0 %v1453
    %3251 = vmatpush1.bf16.msra.mxu0 %v1452
    %3252 = vmatprep.subr.bf16.mxu0 %v1457
    %3253 = vmatpush1.bf16.msra.mxu0 %v1456
    %3254 = vmatprep.subr.bf16.mxu0 %v1461
    %3255 = vmatpush1.bf16.msra.mxu0 %v1460
    %3256 = vmatprep.subr.bf16.mxu0 %v1465
    %3257 = vmatpush1.bf16.msra.mxu0 %v1464
    %3258 = vmatprep.subr.bf16.mxu0 %v1469
    %3259 = vmatpush1.bf16.msra.mxu0 %v1468
    %3260 = vmatprep.subr.bf16.mxu0 %v1473
    %3261 = vmatpush1.bf16.msra.mxu0 %v1472
    %3262 = vmatprep.subr.bf16.mxu0 %v1477
    %3263 = vmatpush1.bf16.msra.mxu0 %v1476
    %3264 = vmatprep.subr.bf16.mxu0 %v1481
    %3265 = vmatpush1.bf16.msra.mxu0 %v1480
    %3266 = vmatprep.subr.bf16.mxu0 0
    %3267 = vmatpush1.bf16.msra.mxu0 0
    %3268 = vmatprep.subr.bf16.mxu0 0
    %3269 = vmatpush1.bf16.msra.mxu0 0
    %3270 = vmatprep.subr.bf16.mxu0 0
    %3271 = vmatpush1.bf16.msra.mxu0 0
    %3272 = vmatprep.subr.bf16.mxu0 0
    %3273 = vmatpush1.bf16.msra.mxu0 0
    %3274 = vmatprep.subr.bf16.mxu0 0
    %3275 = vmatpush1.bf16.msra.mxu0 0
    %3276 = vmatprep.subr.bf16.mxu0 0
    %3277 = vmatpush1.bf16.msra.mxu0 0
    %3278 = vmatprep.subr.bf16.mxu0 0
    %3279 = vmatpush1.bf16.msra.mxu0 0
    %3280 = vmatprep.subr.bf16.mxu0 0
    %3281 = vmatpush1.bf16.msra.mxu0 0
    %3282 = vmatprep.mubr.bf16.mxu0 0
    %3283 = vmatmul.mubr.bf16.gmra.mrb[0].mxu0 %v3249
    %v3284 = vpop.f32.mrb[0].mxu0
    %v3285 = vadd.f32 0.0, %v3284
    %v3286 = vpop.f32.mrb[0].mxu0
    %v3287 = vadd.f32 0.0, %v3286
    %v3288 = vpop.f32.mrb[0].mxu0
    %v3289 = vpop.f32.mrb[0].mxu0
    %3290 = vdwg.mxu0
    %3291 = vmatprep.subr.bf16.mxu0 %v1455
    %3292 = vmatpush1.bf16.msra.mxu0 %v1454
    %3293 = vmatprep.subr.bf16.mxu0 %v1459
    %3294 = vmatpush1.bf16.msra.mxu0 %v1458
    %3295 = vmatprep.subr.bf16.mxu0 %v1463
    %3296 = vmatpush1.bf16.msra.mxu0 %v1462
    %3297 = vmatprep.subr.bf16.mxu0 %v1467
    %3298 = vmatpush1.bf16.msra.mxu0 %v1466
    %3299 = vmatprep.subr.bf16.mxu0 %v1471
    %3300 = vmatpush1.bf16.msra.mxu0 %v1470
    %3301 = vmatprep.subr.bf16.mxu0 %v1475
    %3302 = vmatpush1.bf16.msra.mxu0 %v1474
    %3303 = vmatprep.subr.bf16.mxu0 %v1479
    %3304 = vmatpush1.bf16.msra.mxu0 %v1478
    %3305 = vmatprep.subr.bf16.mxu0 %v1483
    %3306 = vmatpush1.bf16.msra.mxu0 %v1482
    %3307 = vmatprep.subr.bf16.mxu0 0
    %3308 = vmatpush1.bf16.msra.mxu0 0
    %3309 = vmatprep.subr.bf16.mxu0 0
    %3310 = vmatpush1.bf16.msra.mxu0 0
    %3311 = vmatprep.subr.bf16.mxu0 0
    %3312 = vmatpush1.bf16.msra.mxu0 0
    %3313 = vmatprep.subr.bf16.mxu0 0
    %3314 = vmatpush1.bf16.msra.mxu0 0
    %3315 = vmatprep.subr.bf16.mxu0 0
    %3316 = vmatpush1.bf16.msra.mxu0 0
    %3317 = vmatprep.subr.bf16.mxu0 0
    %3318 = vmatpush1.bf16.msra.mxu0 0
    %3319 = vmatprep.subr.bf16.mxu0 0
    %3320 = vmatpush1.bf16.msra.mxu0 0
    %3321 = vmatprep.subr.bf16.mxu0 0
    %3322 = vmatpush1.bf16.msra.mxu0 0
    %3323 = vmatprep.mubr.bf16.mxu0 0
    %3324 = vmatmul.mubr.bf16.gmra.mrb[0].mxu0 %v3249
    %v3325 = vpop.f32.mrb[0].mxu0
    %v3326 = vadd.f32 0.0, %v3325
    %v3327 = vpop.f32.mrb[0].mxu0
    %v3328 = vadd.f32 0.0, %v3327
    %v3329 = vpop.f32.mrb[0].mxu0
    %v3330 = vpop.f32.mrb[0].mxu0
    %3331 = vdwg.mxu0
    %v3332 = vadd.f32 %v3245, %v3285
    %v3333 = vadd.f32 %v3246, %v3287
    %v3334 = vadd.f32 %v3247, %v3326
    %v3335 = vadd.f32 %v3248, %v3328
    %v3336 = vxor.u32 %v3332, 2147483648
    %v3337 = vxor.u32 %v3333, 2147483648
    %v3338 = vxor.u32 %v3334, 2147483648
    %v3339 = vmul.f32 %v3336, 1.442695
    %v3340 = vpow.pop %v3339
    %v3341 = vmul.f32 %v3337, 1.442695
    %v3342 = vpow.pop %v3341
    %v3343 = vmul.f32 %v3338, 1.442695
    %v3344 = vpow.pop %v3343
    %v3345 = vadd.f32 %v3340, 1.0
    %v3346 = vadd.f32 %v3342, 1.0
    %v3347 = vadd.f32 %v3344, 1.0
    %v3348 = vrcp.pop %v3345
    %v3349 = vmul.f32 1.0, %v3348
    %v3350 = vrcp.pop %v3346
    %v3351 = vmul.f32 1.0, %v3350
    %v3352 = vrcp.pop %v3347
    %v3353 = vmul.f32 1.0, %v3352
    %v3354 = vtanh.pop %v3335
    %v3355 = vmul.f32 %v3351, %v3116
    %v3356 = vmul.f32 %v3349, %v3354
    %v3357 = vadd.f32 %v3355, %v3356
    %v3358 = vtanh.pop %v3357
    %v3359 = vmul.f32 %v3353, %v3358
    %v3360 = vsel %vm3125, %v3359, 0.0
    %v3361 = vsel %vm3125, %v3359, %v3115
    %v3362 = vsel %vm3125, %v3357, %v3116
    %v3363 = vmax.f32 %v3117, %v3242
    %v3364 = vmax.f32 %v3118, %v3360
    %3365 = vst [vmem:[#allocation4] sm:$0xff] %v3243
    %3366 = vst [vmem:[#allocation5] sm:$0xff] %v3244
    %3367 = vst [vmem:[#allocation6] sm:$0xff] %v3363
    %3368 = vst [vmem:[#allocation7] sm:$0xff] %v3361
    %3369 = vst [vmem:[#allocation8] sm:$0xff] %v3362
    %3370 = vst [vmem:[#allocation9] sm:$0xff] %v3364
    // Predicated region
    $region70: #{tpu_custom_call.1} parent=1 // pred_check
      %p3371 = pneg %p133
    $region71: #{tpu_custom_call.1} parent=1 // pred_check_branch
      %3373 = sbr.rel (%p3371) target = $region73
    $region72: #{tpu_custom_call.1} parent=1 // pred_region
      %3374 = vst [vmem:[#allocation22] sm:$0xff] %v3363
      %3375 = vst [vmem:[#allocation22 + $0x8] sm:$0xff] %v3364
    $region73: #{tpu_custom_call.1} parent=1 // pred_fallthru
      _
    // Predicated region
    $region74: #{tpu_custom_call.1} parent=1 // pred_check
      _
    $region75: #{tpu_custom_call.1} parent=1 // pred_check_branch
      %3377 = sbr.rel (0) target = $region77
    $region76: #{tpu_custom_call.1} parent=1 // pred_region
      %s3379 = ssub.s32 256, 256
      %3380 = vsyncadd [#allocation12], %s3379
      %s3382 = sshll.u32 [#allocation22], 4
      %s3383 = int_to_ptr.vmem [resolvable:$true] %s3382
      %3385 = dma.vmem_to_hbm [thread:$0]  %s3383, 256, %s9, [#allocation12]
    $region77: #{tpu_custom_call.1} parent=1 // pred_fallthru
      _
    // Predicated region
    $region78: #{tpu_custom_call.1} parent=1 // pred_check
      _
    $region79: #{tpu_custom_call.1} parent=1 // pred_check_branch
      %3387 = sbr.rel (0) target = $region81
    $region80: #{tpu_custom_call.1} parent=1 // pred_region
      %3388 = dma.done [#allocation12], 256
    $region81: #{tpu_custom_call.1} parent=1 // pred_fallthru
      _
    %3389 = vsyncpa [#allocation11], 1
    %3390 = vsyncpa [#allocation14], 1
    %3391 = vsyncpa [#allocation17], 1
    %3392 = vsyncpa [#allocation20], 1
    %3393 = vsyncpa [#allocation12], 1

</llo_original>
